<compile_context>
chip_gen: v5e
topology: v5e:2x2
jax: 0.10.0
libtpu: 0.0.40
codegen_flags: <defaults>
</compile_context>

<pallas_src>
import numpy as np

import jax
import jax.numpy as jnp
from jax import lax
from jax.experimental import pallas as pl
from jax.experimental.pallas import tpu as pltpu


# Constants hard-coded in the reference forward() / ssim().
MS_WEIGHTS = (0.0448, 0.2856, 0.3001, 0.2363, 0.1333)
LEVELS = len(MS_WEIGHTS)
C1 = 0.01 ** 2
C2 = 0.03 ** 2


# ----------------------------------------------------------------------------
# Host-side precompute: 1-D window and per-level [s, s] band / pool matrices.
# ----------------------------------------------------------------------------
def _gaussian_window_1d(window_size: int, sigma: float = 1.5) -> np.ndarray:
    # Faithful to the reference code: the exponent has NO minus sign.
    xs = np.arange(window_size, dtype=np.float64)
    k = np.exp(((xs - window_size // 2) ** 2) / (2.0 * sigma ** 2))
    return (k / k.sum()).astype(np.float32)


def _conv_band_matrix(size: int, w1d: np.ndarray) -> np.ndarray:
    """[size, size] band matrix A with (A @ col)[i] = sum_j w1d[j-i+half]*col[j],
    i.e. 1-D zero-padded 'same' cross-correlation along one axis."""
    ws = w1d.shape[0]
    half = ws // 2
    idx = np.arange(size)
    k = idx[None, :] - idx[:, None] + half          # j - i + half
    valid = (k >= 0) & (k < ws)
    return np.where(valid, w1d[np.clip(k, 0, ws - 1)], 0.0).astype(np.float32)


def _pool_pair(size: int):
    """Pw [size, size//2] with (row @ Pw)[j] = 0.5*(row[2j]+row[2j+1]); Ph = Pw^T."""
    pw = np.zeros((size, size // 2), dtype=np.float32)
    cols = np.arange(size // 2)
    pw[2 * cols, cols] = 0.5
    pw[2 * cols + 1, cols] = 0.5
    return np.ascontiguousarray(pw.T), pw


def _build_level_operators(spatial: int, window_size: int):
    assert window_size % 2 == 1, "odd window expected (band matrix symmetry)"
    w1d = _gaussian_window_1d(window_size)
    sizes = [spatial >> l for l in range(LEVELS)]
    a_mats, ph_mats, pw_mats = [], [], []
    for l, s in enumerate(sizes):
        band = _conv_band_matrix(s, w1d)
        # Symmetric window -> symmetric band, so the same matrix is used on both
        # sides of the separable blur (A @ X @ A).
        assert np.allclose(band, band.T)
        a_mats.append(jnp.asarray(band, dtype=jnp.bfloat16))   # bf16 MXU operand
        if l + 1 < LEVELS:
            ph, pw = _pool_pair(s)
            ph_mats.append(jnp.asarray(ph))                    # [s//2, s] f32
            pw_mats.append(jnp.asarray(pw))                    # [s, s//2] f32
    return a_mats, ph_mats, pw_mats, sizes


# ----------------------------------------------------------------------------
# Pallas kernel: one (n, c) slab per grid step; all 5 pyramid levels in VMEM.
# ----------------------------------------------------------------------------
def _make_mssim_kernel(sizes):
    levels = len(sizes)

    def kernel(*refs):
        x1_ref, x2_ref = refs[0], refs[1]
        idx = 2
        a_refs = refs[idx:idx + levels]; idx += levels
        ph_refs = refs[idx:idx + levels - 1]; idx += levels - 1
        pw_refs = refs[idx:idx + levels - 1]; idx += levels - 1
        out_ref = refs[idx]

        def sum_all(z):  # [s, s] -> [1, 1]; stays 2-D (vector path) throughout
            return jnp.sum(jnp.sum(z, axis=1, keepdims=True), axis=0, keepdims=True)

        x1 = x1_ref[0]            # [h, w] f32, this slab
        x2 = x2_ref[0]

        lane = lax.broadcasted_iota(jnp.int32, (8, 128), 1)
        acc = jnp.zeros((8, 128), jnp.float32)   # lane 2l -> cs_sum, 2l+1 -> sim_sum

        for l, s in enumerate(sizes):
            a = a_refs[l][...]                    # [s, s] bf16, symmetric band

            # Fuse the 5 blur operands along lanes -> ONE wide H-axis conv matmul.
            ops = jnp.concatenate([x1, x2, x1 * x1, x2 * x2, x1 * x2], axis=1)
            t = jnp.dot(a, ops.astype(jnp.bfloat16),
                        preferred_element_type=jnp.float32)          # [s, 5s]

            # W-axis conv: per-operand [s,s] @ [s,s] dots on static lane slices
            # (transpose-free; for real images s >= 128 at the top levels so
            # these are lane-dense too).
            blur = [
                jnp.dot(t[:, i * s:(i + 1) * s].astype(jnp.bfloat16), a,
                        preferred_element_type=jnp.float32)
                for i in range(5)
            ]
            mu1, mu2, e11, e22, e12 = blur

            mu1_sq = mu1 * mu1
            mu2_sq = mu2 * mu2
            mu1_mu2 = mu1 * mu2
            sigma1_sq = e11 - mu1_sq
            sigma2_sq = e22 - mu2_sq
            sigma12 = e12 - mu1_mu2

            v1 = 2.0 * sigma12 + C2
            v2 = sigma1_sq + sigma2_sq + C2
            cs_sum = sum_all(v1 / v2)
            ssim_map = (2.0 * mu1_mu2 + C1) * v1 / ((mu1_sq + mu2_sq + C1) * v2)
            sim_sum = sum_all(ssim_map)

            acc = acc + jnp.where(lane == 2 * l, cs_sum, 0.0)
            acc = acc + jnp.where(lane == 2 * l + 1, sim_sum, 0.0)

            if l + 1 < levels:
                # 2x2 average pool via tiny per-level pool matrices (kept f32 so
                # the carried images stay precise across levels; cost negligible).
                ph = ph_refs[l][...]              # [s//2, s]
                pw = pw_refs[l][...]              # [s, s//2]
                x1 = jnp.dot(jnp.dot(ph, x1, preferred_element_type=jnp.float32),
                             pw, preferred_element_type=jnp.float32)
                x2 = jnp.dot(jnp.dot(ph, x2, preferred_element_type=jnp.float32),
                             pw, preferred_element_type=jnp.float32)

        out_ref[0] = acc

    return kernel


def mssim_forward(img1, img2, window_size: int = 11, size_average: bool = True):
    """1 - MS-SSIM(img1, img2); per-slab partial sums in Pallas, epilogue in JAX."""
    # TODO(synk): size_average=False (per-sample means) is not implemented; only
    # the module-default size_average=True path is supported.
    assert size_average
    n, c, h, w = img1.shape
    assert img2.shape == img1.shape
    assert h == w, "square inputs expected"
    # 5-level pyramid with exact 2x2 pooling at every level.
    assert h % (1 << (LEVELS - 1)) == 0 and (h >> (LEVELS - 1)) >= 2

    a_mats, ph_mats, pw_mats, sizes = _build_level_operators(h, window_size)

    nc = n * c
    x1 = img1.reshape(nc, h, w).astype(jnp.float32)
    x2 = img2.reshape(nc, h, w).astype(jnp.float32)

    kernel = _make_mssim_kernel(sizes)
    in_specs = (
        [pl.BlockSpec((1, h, w), lambda g: (g, 0, 0)),          # img1 slab g
         pl.BlockSpec((1, h, w), lambda g: (g, 0, 0))]          # img2 slab g
        + [pl.BlockSpec(m.shape, lambda g: (0, 0)) for m in a_mats]   # blur bands
        + [pl.BlockSpec(m.shape, lambda g: (0, 0)) for m in ph_mats]  # pool (H)
        + [pl.BlockSpec(m.shape, lambda g: (0, 0)) for m in pw_mats]  # pool (W)
    )

    partials = pl.pallas_call(
        kernel,
        out_shape=jax.ShapeDtypeStruct((nc, 8, 128), jnp.float32),
        grid=(nc,),
        in_specs=in_specs,
        out_specs=pl.BlockSpec((1, 8, 128), lambda g: (g, 0, 0)),
        compiler_params=pltpu.CompilerParams(
            dimension_semantics=("parallel",),          # both TCs on v7x
            vmem_limit_bytes=32 * 1024 * 1024),
    )(x1, x2, *a_mats, *ph_mats, *pw_mats)

    # Plain-JAX epilogue: cross-slab reduction, means, and the weighted product
    # (with the reference's pow2[-1] broadcast quirk).
    sums = jnp.sum(partials[:, 0, :2 * LEVELS], axis=0).reshape(LEVELS, 2)
    counts = jnp.asarray([nc * s * s for s in sizes], dtype=jnp.float32)
    mcs = sums[:, 0] / counts
    msim = sums[:, 1] / counts
    weights = jnp.asarray(MS_WEIGHTS, dtype=jnp.float32)
    pow1 = mcs ** weights
    pow2 = msim ** weights
    return 1.0 - jnp.prod(pow1[:-1] * pow2[-1])


# ----------------------------------------------------------------------------
# Pure-JAX/XLA reference (depthwise conv + avg-pool) for correctness checking.
# ----------------------------------------------------------------------------
def _mssim_reference(img1, img2, window_size: int = 11):
    n, c, h, w = img1.shape
    w1d = jnp.asarray(_gaussian_window_1d(window_size))
    w2d = jnp.outer(w1d, w1d)
    kern = jnp.tile(w2d[None, None, :, :], (c, 1, 1, 1))
    pad = window_size // 2

    def blur(x):
        return lax.conv_general_dilated(
            x, kern, window_strides=(1, 1), padding=[(pad, pad), (pad, pad)],
            dimension_numbers=("NCHW", "OIHW", "NCHW"),
            feature_group_count=c, precision=lax.Precision.HIGHEST)

    def pool(x):
        nn, cc, hh, ww = x.shape
        return x.reshape(nn, cc, hh // 2, 2, ww // 2, 2).mean(axis=(3, 5))

    mssim, mcs = [], []
    x1, x2 = img1.astype(jnp.float32), img2.astype(jnp.float32)
    for l in range(LEVELS):
        mu1, mu2 = blur(x1), blur(x2)
        mu1_sq, mu2_sq, mu1_mu2 = mu1 * mu1, mu2 * mu2, mu1 * mu2
        s1 = blur(x1 * x1) - mu1_sq
        s2 = blur(x2 * x2) - mu2_sq
        s12 = blur(x1 * x2) - mu1_mu2
        v1 = 2.0 * s12 + C2
        v2 = s1 + s2 + C2
        mcs.append(jnp.mean(v1 / v2))
        mssim.append(jnp.mean((2.0 * mu1_mu2 + C1) * v1 /
                              ((mu1_sq + mu2_sq + C1) * v2)))
        if l + 1 < LEVELS:
            x1, x2 = pool(x1), pool(x2)
    mssim = jnp.stack(mssim)
    mcs = jnp.stack(mcs)
    weights = jnp.asarray(MS_WEIGHTS, dtype=jnp.float32)
    pow1 = mcs ** weights
    pow2 = mssim ** weights
    return 1.0 - jnp.prod(pow1[:-1] * pow2[-1])


if __name__ == "__main__":
    # in_channels=3 is the module default; spatial=32 is the smallest size the
    # 5-level forward supports cleanly (it pools 4 times between levels).
    batch, channels, spatial = 2, 3, 32

    key = jax.random.PRNGKey(0)
    k1, k2 = jax.random.split(key)
    img1 = jax.random.uniform(k1, (batch, channels, spatial, spatial), jnp.float32)
    noise = jax.random.uniform(k2, (batch, channels, spatial, spatial), jnp.float32)
    # Correlated "reconstruction" (the realistic use of this loss).
    img2 = jnp.clip(img1 + 0.1 * (noise - 0.5), 0.0, 1.0)

    loss = mssim_forward(img1, img2)
    loss = jax.block_until_ready(loss)

    assert loss.shape == (), loss.shape
    assert bool(jnp.isfinite(loss)), loss

    # Independent XLA reference; tolerance absorbs the bf16 blur-matmul operands
    # while still catching structural bugs.
    ref = jax.block_until_ready(_mssim_reference(img1, img2))
    assert abs(float(ref) - float(loss)) < 3e-2, (float(ref), float(loss))

    print("KERNEL_OK")
</pallas_src>

<mosaic_0001>
module attributes {stable_mosaic.version = 11 : i64} {
  func.func @kernel(%arg0: i32, %arg1: memref<1x32x32xf32, #tpu.memory_space<vmem>>, %arg2: memref<1x32x32xf32, #tpu.memory_space<vmem>>, %arg3: memref<32x32xbf16, #tpu.memory_space<vmem>>, %arg4: memref<16x16xbf16, #tpu.memory_space<vmem>>, %arg5: memref<8x8xbf16, #tpu.memory_space<vmem>>, %arg6: memref<4x4xbf16, #tpu.memory_space<vmem>>, %arg7: memref<2x2xbf16, #tpu.memory_space<vmem>>, %arg8: memref<16x32xf32, #tpu.memory_space<vmem>>, %arg9: memref<8x16xf32, #tpu.memory_space<vmem>>, %arg10: memref<4x8xf32, #tpu.memory_space<vmem>>, %arg11: memref<2x4xf32, #tpu.memory_space<vmem>>, %arg12: memref<32x16xf32, #tpu.memory_space<vmem>>, %arg13: memref<16x8xf32, #tpu.memory_space<vmem>>, %arg14: memref<8x4xf32, #tpu.memory_space<vmem>>, %arg15: memref<4x2xf32, #tpu.memory_space<vmem>>, %arg16: memref<1x8x128xf32, #tpu.memory_space<vmem>>) attributes {dimension_semantics = [#tpu.dimension_semantics<parallel>], iteration_bounds = array<i64: 6>, scalar_prefetch = 0 : i64, scratch_operands = 0 : i64, tpu.core_type = #tpu.core_type<tc>, window_params = [{transform_indices = @transform_0, window_bounds = array<i64: 1, 32, 32>}, {transform_indices = @transform_1, window_bounds = array<i64: 1, 32, 32>}, {pipeline_mode = #tpu.pipeline_mode<synchronous>, transform_indices = @transform_2, window_bounds = array<i64: 32, 32>}, {pipeline_mode = #tpu.pipeline_mode<synchronous>, transform_indices = @transform_3, window_bounds = array<i64: 16, 16>}, {pipeline_mode = #tpu.pipeline_mode<synchronous>, transform_indices = @transform_4, window_bounds = array<i64: 8, 8>}, {pipeline_mode = #tpu.pipeline_mode<synchronous>, transform_indices = @transform_5, window_bounds = array<i64: 4, 4>}, {pipeline_mode = #tpu.pipeline_mode<synchronous>, transform_indices = @transform_6, window_bounds = array<i64: 2, 2>}, {pipeline_mode = #tpu.pipeline_mode<synchronous>, transform_indices = @transform_7, window_bounds = array<i64: 16, 32>}, {pipeline_mode = #tpu.pipeline_mode<synchronous>, transform_indices = @transform_8, window_bounds = array<i64: 8, 16>}, {pipeline_mode = #tpu.pipeline_mode<synchronous>, transform_indices = @transform_9, window_bounds = array<i64: 4, 8>}, {pipeline_mode = #tpu.pipeline_mode<synchronous>, transform_indices = @transform_10, window_bounds = array<i64: 2, 4>}, {pipeline_mode = #tpu.pipeline_mode<synchronous>, transform_indices = @transform_11, window_bounds = array<i64: 32, 16>}, {pipeline_mode = #tpu.pipeline_mode<synchronous>, transform_indices = @transform_12, window_bounds = array<i64: 16, 8>}, {pipeline_mode = #tpu.pipeline_mode<synchronous>, transform_indices = @transform_13, window_bounds = array<i64: 8, 4>}, {pipeline_mode = #tpu.pipeline_mode<synchronous>, transform_indices = @transform_14, window_bounds = array<i64: 4, 2>}, {transform_indices = @transform_15, window_bounds = array<i64: 1, 8, 128>}]} {
    %c0 = arith.constant 0 : index
    %c0_0 = arith.constant 0 : index
    %c0_1 = arith.constant 0 : index
    %0 = vector.load %arg1[%c0, %c0_0, %c0_1] : memref<1x32x32xf32, #tpu.memory_space<vmem>>, vector<1x32x32xf32>
    %1 = vector.shape_cast %0 : vector<1x32x32xf32> to vector<32x32xf32>
    %c0_2 = arith.constant 0 : index
    %c0_3 = arith.constant 0 : index
    %c0_4 = arith.constant 0 : index
    %2 = vector.load %arg2[%c0_2, %c0_3, %c0_4] : memref<1x32x32xf32, #tpu.memory_space<vmem>>, vector<1x32x32xf32>
    %3 = vector.shape_cast %2 : vector<1x32x32xf32> to vector<32x32xf32>
    %4 = tpu.iota {dimensions = array<i32: 1>} : vector<8x128xi32>
    %cst = arith.constant 0.000000e+00 : f32
    %5 = vector.broadcast %cst : f32 to vector<8x128xf32>
    %c0_5 = arith.constant 0 : index
    %c0_6 = arith.constant 0 : index
    %6 = vector.load %arg3[%c0_5, %c0_6] : memref<32x32xbf16, #tpu.memory_space<vmem>>, vector<32x32xbf16>
    %7 = arith.mulf %1, %1 : vector<32x32xf32>
    %8 = arith.mulf %3, %3 : vector<32x32xf32>
    %9 = arith.mulf %1, %3 : vector<32x32xf32>
    %10 = tpu.concatenate %1, %3, %7, %8, %9 in 1 : vector<32x32xf32>, vector<32x32xf32>, vector<32x32xf32>, vector<32x32xf32>, vector<32x32xf32> -> vector<32x160xf32>
    %11 = arith.truncf %10 : vector<32x160xf32> to vector<32x160xbf16>
    %cst_7 = arith.constant dense<0.000000e+00> : vector<32x160xf32>
    %12 = tpu.matmul %6, %11, %cst_7 {dimension_numbers = #tpu.dot_dimension_numbers<[1], [0], [0], [1], [0, 0, 1, 1], [], []>} : vector<32x32xbf16>, vector<32x160xbf16>, vector<32x160xf32> -> vector<32x160xf32>
    %13 = vector.extract_strided_slice %12 {offsets = [0, 0], sizes = [32, 32], strides = [1, 1]} : vector<32x160xf32> to vector<32x32xf32>
    %14 = arith.truncf %13 : vector<32x32xf32> to vector<32x32xbf16>
    %cst_8 = arith.constant dense<0.000000e+00> : vector<32x32xf32>
    %15 = tpu.matmul %14, %6, %cst_8 {dimension_numbers = #tpu.dot_dimension_numbers<[1], [0], [0], [1], [0, 0, 1, 1], [], []>} : vector<32x32xbf16>, vector<32x32xbf16>, vector<32x32xf32> -> vector<32x32xf32>
    %16 = vector.extract_strided_slice %12 {offsets = [0, 32], sizes = [32, 32], strides = [1, 1]} : vector<32x160xf32> to vector<32x32xf32>
    %17 = arith.truncf %16 : vector<32x32xf32> to vector<32x32xbf16>
    %cst_9 = arith.constant dense<0.000000e+00> : vector<32x32xf32>
    %18 = tpu.matmul %17, %6, %cst_9 {dimension_numbers = #tpu.dot_dimension_numbers<[1], [0], [0], [1], [0, 0, 1, 1], [], []>} : vector<32x32xbf16>, vector<32x32xbf16>, vector<32x32xf32> -> vector<32x32xf32>
    %19 = vector.extract_strided_slice %12 {offsets = [0, 64], sizes = [32, 32], strides = [1, 1]} : vector<32x160xf32> to vector<32x32xf32>
    %20 = arith.truncf %19 : vector<32x32xf32> to vector<32x32xbf16>
    %cst_10 = arith.constant dense<0.000000e+00> : vector<32x32xf32>
    %21 = tpu.matmul %20, %6, %cst_10 {dimension_numbers = #tpu.dot_dimension_numbers<[1], [0], [0], [1], [0, 0, 1, 1], [], []>} : vector<32x32xbf16>, vector<32x32xbf16>, vector<32x32xf32> -> vector<32x32xf32>
    %22 = vector.extract_strided_slice %12 {offsets = [0, 96], sizes = [32, 32], strides = [1, 1]} : vector<32x160xf32> to vector<32x32xf32>
    %23 = arith.truncf %22 : vector<32x32xf32> to vector<32x32xbf16>
    %cst_11 = arith.constant dense<0.000000e+00> : vector<32x32xf32>
    %24 = tpu.matmul %23, %6, %cst_11 {dimension_numbers = #tpu.dot_dimension_numbers<[1], [0], [0], [1], [0, 0, 1, 1], [], []>} : vector<32x32xbf16>, vector<32x32xbf16>, vector<32x32xf32> -> vector<32x32xf32>
    %25 = vector.extract_strided_slice %12 {offsets = [0, 128], sizes = [32, 32], strides = [1, 1]} : vector<32x160xf32> to vector<32x32xf32>
    %26 = arith.truncf %25 : vector<32x32xf32> to vector<32x32xbf16>
    %cst_12 = arith.constant dense<0.000000e+00> : vector<32x32xf32>
    %27 = tpu.matmul %26, %6, %cst_12 {dimension_numbers = #tpu.dot_dimension_numbers<[1], [0], [0], [1], [0, 0, 1, 1], [], []>} : vector<32x32xbf16>, vector<32x32xbf16>, vector<32x32xf32> -> vector<32x32xf32>
    %28 = arith.mulf %15, %15 : vector<32x32xf32>
    %29 = arith.mulf %18, %18 : vector<32x32xf32>
    %30 = arith.mulf %15, %18 : vector<32x32xf32>
    %31 = arith.subf %21, %28 : vector<32x32xf32>
    %32 = arith.subf %24, %29 : vector<32x32xf32>
    %33 = arith.subf %27, %30 : vector<32x32xf32>
    %cst_13 = arith.constant 2.000000e+00 : f32
    %34 = vector.broadcast %cst_13 : f32 to vector<32x32xf32>
    %35 = arith.mulf %34, %33 : vector<32x32xf32>
    %cst_14 = arith.constant 8.99999984E-4 : f32
    %36 = vector.broadcast %cst_14 : f32 to vector<32x32xf32>
    %37 = arith.addf %35, %36 : vector<32x32xf32>
    %38 = arith.addf %31, %32 : vector<32x32xf32>
    %cst_15 = arith.constant 8.99999984E-4 : f32
    %39 = vector.broadcast %cst_15 : f32 to vector<32x32xf32>
    %40 = arith.addf %38, %39 : vector<32x32xf32>
    %41 = arith.divf %37, %40 : vector<32x32xf32>
    %cst_16 = arith.constant dense<0.000000e+00> : vector<32xf32>
    %42 = vector.multi_reduction <add>, %41, %cst_16 [1] : vector<32x32xf32> to vector<32xf32>
    %43 = vector.shape_cast %42 : vector<32xf32> to vector<32x1xf32>
    %cst_17 = arith.constant dense<0.000000e+00> : vector<1xf32>
    %44 = vector.multi_reduction <add>, %43, %cst_17 [0] : vector<32x1xf32> to vector<1xf32>
    %45 = vector.shape_cast %44 : vector<1xf32> to vector<1x1xf32>
    %cst_18 = arith.constant 2.000000e+00 : f32
    %46 = vector.broadcast %cst_18 : f32 to vector<32x32xf32>
    %47 = arith.mulf %46, %30 : vector<32x32xf32>
    %cst_19 = arith.constant 9.99999974E-5 : f32
    %48 = vector.broadcast %cst_19 : f32 to vector<32x32xf32>
    %49 = arith.addf %47, %48 : vector<32x32xf32>
    %50 = arith.mulf %49, %37 : vector<32x32xf32>
    %51 = arith.addf %28, %29 : vector<32x32xf32>
    %cst_20 = arith.constant 9.99999974E-5 : f32
    %52 = vector.broadcast %cst_20 : f32 to vector<32x32xf32>
    %53 = arith.addf %51, %52 : vector<32x32xf32>
    %54 = arith.mulf %53, %40 : vector<32x32xf32>
    %55 = arith.divf %50, %54 : vector<32x32xf32>
    %cst_21 = arith.constant dense<0.000000e+00> : vector<32xf32>
    %56 = vector.multi_reduction <add>, %55, %cst_21 [1] : vector<32x32xf32> to vector<32xf32>
    %57 = vector.shape_cast %56 : vector<32xf32> to vector<32x1xf32>
    %cst_22 = arith.constant dense<0.000000e+00> : vector<1xf32>
    %58 = vector.multi_reduction <add>, %57, %cst_22 [0] : vector<32x1xf32> to vector<1xf32>
    %59 = vector.shape_cast %58 : vector<1xf32> to vector<1x1xf32>
    %c0_i32 = arith.constant 0 : i32
    %60 = vector.broadcast %c0_i32 : i32 to vector<8x128xi32>
    %61 = arith.cmpi eq, %4, %60 : vector<8x128xi32>
    %cst_23 = arith.constant 0.000000e+00 : f32
    %62 = vector.shape_cast %45 : vector<1x1xf32> to vector<1x1xf32>
    %63 = vector.broadcast %62 : vector<1x1xf32> to vector<8x128xf32>
    %64 = vector.broadcast %cst_23 : f32 to vector<8x128xf32>
    %65 = arith.select %61, %63, %64 : vector<8x128xi1>, vector<8x128xf32>
    %66 = arith.addf %5, %65 : vector<8x128xf32>
    %c1_i32 = arith.constant 1 : i32
    %67 = vector.broadcast %c1_i32 : i32 to vector<8x128xi32>
    %68 = arith.cmpi eq, %4, %67 : vector<8x128xi32>
    %cst_24 = arith.constant 0.000000e+00 : f32
    %69 = vector.shape_cast %59 : vector<1x1xf32> to vector<1x1xf32>
    %70 = vector.broadcast %69 : vector<1x1xf32> to vector<8x128xf32>
    %71 = vector.broadcast %cst_24 : f32 to vector<8x128xf32>
    %72 = arith.select %68, %70, %71 : vector<8x128xi1>, vector<8x128xf32>
    %73 = arith.addf %66, %72 : vector<8x128xf32>
    %c0_25 = arith.constant 0 : index
    %c0_26 = arith.constant 0 : index
    %74 = vector.load %arg8[%c0_25, %c0_26] : memref<16x32xf32, #tpu.memory_space<vmem>>, vector<16x32xf32>
    %c0_27 = arith.constant 0 : index
    %c0_28 = arith.constant 0 : index
    %75 = vector.load %arg12[%c0_27, %c0_28] : memref<32x16xf32, #tpu.memory_space<vmem>>, vector<32x16xf32>
    %cst_29 = arith.constant dense<0.000000e+00> : vector<16x32xf32>
    %76 = tpu.matmul %74, %1, %cst_29 {dimension_numbers = #tpu.dot_dimension_numbers<[1], [0], [0], [1], [0, 0, 1, 1], [], []>} : vector<16x32xf32>, vector<32x32xf32>, vector<16x32xf32> -> vector<16x32xf32>
    %cst_30 = arith.constant dense<0.000000e+00> : vector<16x16xf32>
    %77 = tpu.matmul %76, %75, %cst_30 {dimension_numbers = #tpu.dot_dimension_numbers<[1], [0], [0], [1], [0, 0, 1, 1], [], []>} : vector<16x32xf32>, vector<32x16xf32>, vector<16x16xf32> -> vector<16x16xf32>
    %cst_31 = arith.constant dense<0.000000e+00> : vector<16x32xf32>
    %78 = tpu.matmul %74, %3, %cst_31 {dimension_numbers = #tpu.dot_dimension_numbers<[1], [0], [0], [1], [0, 0, 1, 1], [], []>} : vector<16x32xf32>, vector<32x32xf32>, vector<16x32xf32> -> vector<16x32xf32>
    %cst_32 = arith.constant dense<0.000000e+00> : vector<16x16xf32>
    %79 = tpu.matmul %78, %75, %cst_32 {dimension_numbers = #tpu.dot_dimension_numbers<[1], [0], [0], [1], [0, 0, 1, 1], [], []>} : vector<16x32xf32>, vector<32x16xf32>, vector<16x16xf32> -> vector<16x16xf32>
    %c0_33 = arith.constant 0 : index
    %c0_34 = arith.constant 0 : index
    %80 = vector.load %arg4[%c0_33, %c0_34] : memref<16x16xbf16, #tpu.memory_space<vmem>>, vector<16x16xbf16>
    %81 = arith.mulf %77, %77 : vector<16x16xf32>
    %82 = arith.mulf %79, %79 : vector<16x16xf32>
    %83 = arith.mulf %77, %79 : vector<16x16xf32>
    %84 = tpu.concatenate %77, %79, %81, %82, %83 in 1 : vector<16x16xf32>, vector<16x16xf32>, vector<16x16xf32>, vector<16x16xf32>, vector<16x16xf32> -> vector<16x80xf32>
    %85 = arith.truncf %84 : vector<16x80xf32> to vector<16x80xbf16>
    %cst_35 = arith.constant dense<0.000000e+00> : vector<16x80xf32>
    %86 = tpu.matmul %80, %85, %cst_35 {dimension_numbers = #tpu.dot_dimension_numbers<[1], [0], [0], [1], [0, 0, 1, 1], [], []>} : vector<16x16xbf16>, vector<16x80xbf16>, vector<16x80xf32> -> vector<16x80xf32>
    %87 = vector.extract_strided_slice %86 {offsets = [0, 0], sizes = [16, 16], strides = [1, 1]} : vector<16x80xf32> to vector<16x16xf32>
    %88 = arith.truncf %87 : vector<16x16xf32> to vector<16x16xbf16>
    %cst_36 = arith.constant dense<0.000000e+00> : vector<16x16xf32>
    %89 = tpu.matmul %88, %80, %cst_36 {dimension_numbers = #tpu.dot_dimension_numbers<[1], [0], [0], [1], [0, 0, 1, 1], [], []>} : vector<16x16xbf16>, vector<16x16xbf16>, vector<16x16xf32> -> vector<16x16xf32>
    %90 = vector.extract_strided_slice %86 {offsets = [0, 16], sizes = [16, 16], strides = [1, 1]} : vector<16x80xf32> to vector<16x16xf32>
    %91 = arith.truncf %90 : vector<16x16xf32> to vector<16x16xbf16>
    %cst_37 = arith.constant dense<0.000000e+00> : vector<16x16xf32>
    %92 = tpu.matmul %91, %80, %cst_37 {dimension_numbers = #tpu.dot_dimension_numbers<[1], [0], [0], [1], [0, 0, 1, 1], [], []>} : vector<16x16xbf16>, vector<16x16xbf16>, vector<16x16xf32> -> vector<16x16xf32>
    %93 = vector.extract_strided_slice %86 {offsets = [0, 32], sizes = [16, 16], strides = [1, 1]} : vector<16x80xf32> to vector<16x16xf32>
    %94 = arith.truncf %93 : vector<16x16xf32> to vector<16x16xbf16>
    %cst_38 = arith.constant dense<0.000000e+00> : vector<16x16xf32>
    %95 = tpu.matmul %94, %80, %cst_38 {dimension_numbers = #tpu.dot_dimension_numbers<[1], [0], [0], [1], [0, 0, 1, 1], [], []>} : vector<16x16xbf16>, vector<16x16xbf16>, vector<16x16xf32> -> vector<16x16xf32>
    %96 = vector.extract_strided_slice %86 {offsets = [0, 48], sizes = [16, 16], strides = [1, 1]} : vector<16x80xf32> to vector<16x16xf32>
    %97 = arith.truncf %96 : vector<16x16xf32> to vector<16x16xbf16>
    %cst_39 = arith.constant dense<0.000000e+00> : vector<16x16xf32>
    %98 = tpu.matmul %97, %80, %cst_39 {dimension_numbers = #tpu.dot_dimension_numbers<[1], [0], [0], [1], [0, 0, 1, 1], [], []>} : vector<16x16xbf16>, vector<16x16xbf16>, vector<16x16xf32> -> vector<16x16xf32>
    %99 = vector.extract_strided_slice %86 {offsets = [0, 64], sizes = [16, 16], strides = [1, 1]} : vector<16x80xf32> to vector<16x16xf32>
    %100 = arith.truncf %99 : vector<16x16xf32> to vector<16x16xbf16>
    %cst_40 = arith.constant dense<0.000000e+00> : vector<16x16xf32>
    %101 = tpu.matmul %100, %80, %cst_40 {dimension_numbers = #tpu.dot_dimension_numbers<[1], [0], [0], [1], [0, 0, 1, 1], [], []>} : vector<16x16xbf16>, vector<16x16xbf16>, vector<16x16xf32> -> vector<16x16xf32>
    %102 = arith.mulf %89, %89 : vector<16x16xf32>
    %103 = arith.mulf %92, %92 : vector<16x16xf32>
    %104 = arith.mulf %89, %92 : vector<16x16xf32>
    %105 = arith.subf %95, %102 : vector<16x16xf32>
    %106 = arith.subf %98, %103 : vector<16x16xf32>
    %107 = arith.subf %101, %104 : vector<16x16xf32>
    %cst_41 = arith.constant 2.000000e+00 : f32
    %108 = vector.broadcast %cst_41 : f32 to vector<16x16xf32>
    %109 = arith.mulf %108, %107 : vector<16x16xf32>
    %cst_42 = arith.constant 8.99999984E-4 : f32
    %110 = vector.broadcast %cst_42 : f32 to vector<16x16xf32>
    %111 = arith.addf %109, %110 : vector<16x16xf32>
    %112 = arith.addf %105, %106 : vector<16x16xf32>
    %cst_43 = arith.constant 8.99999984E-4 : f32
    %113 = vector.broadcast %cst_43 : f32 to vector<16x16xf32>
    %114 = arith.addf %112, %113 : vector<16x16xf32>
    %115 = arith.divf %111, %114 : vector<16x16xf32>
    %cst_44 = arith.constant dense<0.000000e+00> : vector<16xf32>
    %116 = vector.multi_reduction <add>, %115, %cst_44 [1] : vector<16x16xf32> to vector<16xf32>
    %117 = vector.shape_cast %116 : vector<16xf32> to vector<16x1xf32>
    %cst_45 = arith.constant dense<0.000000e+00> : vector<1xf32>
    %118 = vector.multi_reduction <add>, %117, %cst_45 [0] : vector<16x1xf32> to vector<1xf32>
    %119 = vector.shape_cast %118 : vector<1xf32> to vector<1x1xf32>
    %cst_46 = arith.constant 2.000000e+00 : f32
    %120 = vector.broadcast %cst_46 : f32 to vector<16x16xf32>
    %121 = arith.mulf %120, %104 : vector<16x16xf32>
    %cst_47 = arith.constant 9.99999974E-5 : f32
    %122 = vector.broadcast %cst_47 : f32 to vector<16x16xf32>
    %123 = arith.addf %121, %122 : vector<16x16xf32>
    %124 = arith.mulf %123, %111 : vector<16x16xf32>
    %125 = arith.addf %102, %103 : vector<16x16xf32>
    %cst_48 = arith.constant 9.99999974E-5 : f32
    %126 = vector.broadcast %cst_48 : f32 to vector<16x16xf32>
    %127 = arith.addf %125, %126 : vector<16x16xf32>
    %128 = arith.mulf %127, %114 : vector<16x16xf32>
    %129 = arith.divf %124, %128 : vector<16x16xf32>
    %cst_49 = arith.constant dense<0.000000e+00> : vector<16xf32>
    %130 = vector.multi_reduction <add>, %129, %cst_49 [1] : vector<16x16xf32> to vector<16xf32>
    %131 = vector.shape_cast %130 : vector<16xf32> to vector<16x1xf32>
    %cst_50 = arith.constant dense<0.000000e+00> : vector<1xf32>
    %132 = vector.multi_reduction <add>, %131, %cst_50 [0] : vector<16x1xf32> to vector<1xf32>
    %133 = vector.shape_cast %132 : vector<1xf32> to vector<1x1xf32>
    %c2_i32 = arith.constant 2 : i32
    %134 = vector.broadcast %c2_i32 : i32 to vector<8x128xi32>
    %135 = arith.cmpi eq, %4, %134 : vector<8x128xi32>
    %cst_51 = arith.constant 0.000000e+00 : f32
    %136 = vector.shape_cast %119 : vector<1x1xf32> to vector<1x1xf32>
    %137 = vector.broadcast %136 : vector<1x1xf32> to vector<8x128xf32>
    %138 = vector.broadcast %cst_51 : f32 to vector<8x128xf32>
    %139 = arith.select %135, %137, %138 : vector<8x128xi1>, vector<8x128xf32>
    %140 = arith.addf %73, %139 : vector<8x128xf32>
    %c3_i32 = arith.constant 3 : i32
    %141 = vector.broadcast %c3_i32 : i32 to vector<8x128xi32>
    %142 = arith.cmpi eq, %4, %141 : vector<8x128xi32>
    %cst_52 = arith.constant 0.000000e+00 : f32
    %143 = vector.shape_cast %133 : vector<1x1xf32> to vector<1x1xf32>
    %144 = vector.broadcast %143 : vector<1x1xf32> to vector<8x128xf32>
    %145 = vector.broadcast %cst_52 : f32 to vector<8x128xf32>
    %146 = arith.select %142, %144, %145 : vector<8x128xi1>, vector<8x128xf32>
    %147 = arith.addf %140, %146 : vector<8x128xf32>
    %c0_53 = arith.constant 0 : index
    %c0_54 = arith.constant 0 : index
    %148 = vector.load %arg9[%c0_53, %c0_54] : memref<8x16xf32, #tpu.memory_space<vmem>>, vector<8x16xf32>
    %c0_55 = arith.constant 0 : index
    %c0_56 = arith.constant 0 : index
    %149 = vector.load %arg13[%c0_55, %c0_56] : memref<16x8xf32, #tpu.memory_space<vmem>>, vector<16x8xf32>
    %cst_57 = arith.constant dense<0.000000e+00> : vector<8x16xf32>
    %150 = tpu.matmul %148, %77, %cst_57 {dimension_numbers = #tpu.dot_dimension_numbers<[1], [0], [0], [1], [0, 0, 1, 1], [], []>} : vector<8x16xf32>, vector<16x16xf32>, vector<8x16xf32> -> vector<8x16xf32>
    %cst_58 = arith.constant dense<0.000000e+00> : vector<8x8xf32>
    %151 = tpu.matmul %150, %149, %cst_58 {dimension_numbers = #tpu.dot_dimension_numbers<[1], [0], [0], [1], [0, 0, 1, 1], [], []>} : vector<8x16xf32>, vector<16x8xf32>, vector<8x8xf32> -> vector<8x8xf32>
    %cst_59 = arith.constant dense<0.000000e+00> : vector<8x16xf32>
    %152 = tpu.matmul %148, %79, %cst_59 {dimension_numbers = #tpu.dot_dimension_numbers<[1], [0], [0], [1], [0, 0, 1, 1], [], []>} : vector<8x16xf32>, vector<16x16xf32>, vector<8x16xf32> -> vector<8x16xf32>
    %cst_60 = arith.constant dense<0.000000e+00> : vector<8x8xf32>
    %153 = tpu.matmul %152, %149, %cst_60 {dimension_numbers = #tpu.dot_dimension_numbers<[1], [0], [0], [1], [0, 0, 1, 1], [], []>} : vector<8x16xf32>, vector<16x8xf32>, vector<8x8xf32> -> vector<8x8xf32>
    %c0_61 = arith.constant 0 : index
    %c0_62 = arith.constant 0 : index
    %154 = vector.load %arg5[%c0_61, %c0_62] : memref<8x8xbf16, #tpu.memory_space<vmem>>, vector<8x8xbf16>
    %155 = arith.mulf %151, %151 : vector<8x8xf32>
    %156 = arith.mulf %153, %153 : vector<8x8xf32>
    %157 = arith.mulf %151, %153 : vector<8x8xf32>
    %158 = tpu.concatenate %151, %153, %155, %156, %157 in 1 : vector<8x8xf32>, vector<8x8xf32>, vector<8x8xf32>, vector<8x8xf32>, vector<8x8xf32> -> vector<8x40xf32>
    %159 = arith.truncf %158 : vector<8x40xf32> to vector<8x40xbf16>
    %cst_63 = arith.constant dense<0.000000e+00> : vector<8x40xf32>
    %160 = tpu.matmul %154, %159, %cst_63 {dimension_numbers = #tpu.dot_dimension_numbers<[1], [0], [0], [1], [0, 0, 1, 1], [], []>} : vector<8x8xbf16>, vector<8x40xbf16>, vector<8x40xf32> -> vector<8x40xf32>
    %161 = vector.extract_strided_slice %160 {offsets = [0, 0], sizes = [8, 8], strides = [1, 1]} : vector<8x40xf32> to vector<8x8xf32>
    %162 = arith.truncf %161 : vector<8x8xf32> to vector<8x8xbf16>
    %cst_64 = arith.constant dense<0.000000e+00> : vector<8x8xf32>
    %163 = tpu.matmul %162, %154, %cst_64 {dimension_numbers = #tpu.dot_dimension_numbers<[1], [0], [0], [1], [0, 0, 1, 1], [], []>} : vector<8x8xbf16>, vector<8x8xbf16>, vector<8x8xf32> -> vector<8x8xf32>
    %164 = vector.extract_strided_slice %160 {offsets = [0, 8], sizes = [8, 8], strides = [1, 1]} : vector<8x40xf32> to vector<8x8xf32>
    %165 = arith.truncf %164 : vector<8x8xf32> to vector<8x8xbf16>
    %cst_65 = arith.constant dense<0.000000e+00> : vector<8x8xf32>
    %166 = tpu.matmul %165, %154, %cst_65 {dimension_numbers = #tpu.dot_dimension_numbers<[1], [0], [0], [1], [0, 0, 1, 1], [], []>} : vector<8x8xbf16>, vector<8x8xbf16>, vector<8x8xf32> -> vector<8x8xf32>
    %167 = vector.extract_strided_slice %160 {offsets = [0, 16], sizes = [8, 8], strides = [1, 1]} : vector<8x40xf32> to vector<8x8xf32>
    %168 = arith.truncf %167 : vector<8x8xf32> to vector<8x8xbf16>
    %cst_66 = arith.constant dense<0.000000e+00> : vector<8x8xf32>
    %169 = tpu.matmul %168, %154, %cst_66 {dimension_numbers = #tpu.dot_dimension_numbers<[1], [0], [0], [1], [0, 0, 1, 1], [], []>} : vector<8x8xbf16>, vector<8x8xbf16>, vector<8x8xf32> -> vector<8x8xf32>
    %170 = vector.extract_strided_slice %160 {offsets = [0, 24], sizes = [8, 8], strides = [1, 1]} : vector<8x40xf32> to vector<8x8xf32>
    %171 = arith.truncf %170 : vector<8x8xf32> to vector<8x8xbf16>
    %cst_67 = arith.constant dense<0.000000e+00> : vector<8x8xf32>
    %172 = tpu.matmul %171, %154, %cst_67 {dimension_numbers = #tpu.dot_dimension_numbers<[1], [0], [0], [1], [0, 0, 1, 1], [], []>} : vector<8x8xbf16>, vector<8x8xbf16>, vector<8x8xf32> -> vector<8x8xf32>
    %173 = vector.extract_strided_slice %160 {offsets = [0, 32], sizes = [8, 8], strides = [1, 1]} : vector<8x40xf32> to vector<8x8xf32>
    %174 = arith.truncf %173 : vector<8x8xf32> to vector<8x8xbf16>
    %cst_68 = arith.constant dense<0.000000e+00> : vector<8x8xf32>
    %175 = tpu.matmul %174, %154, %cst_68 {dimension_numbers = #tpu.dot_dimension_numbers<[1], [0], [0], [1], [0, 0, 1, 1], [], []>} : vector<8x8xbf16>, vector<8x8xbf16>, vector<8x8xf32> -> vector<8x8xf32>
    %176 = arith.mulf %163, %163 : vector<8x8xf32>
    %177 = arith.mulf %166, %166 : vector<8x8xf32>
    %178 = arith.mulf %163, %166 : vector<8x8xf32>
    %179 = arith.subf %169, %176 : vector<8x8xf32>
    %180 = arith.subf %172, %177 : vector<8x8xf32>
    %181 = arith.subf %175, %178 : vector<8x8xf32>
    %cst_69 = arith.constant 2.000000e+00 : f32
    %182 = vector.broadcast %cst_69 : f32 to vector<8x8xf32>
    %183 = arith.mulf %182, %181 : vector<8x8xf32>
    %cst_70 = arith.constant 8.99999984E-4 : f32
    %184 = vector.broadcast %cst_70 : f32 to vector<8x8xf32>
    %185 = arith.addf %183, %184 : vector<8x8xf32>
    %186 = arith.addf %179, %180 : vector<8x8xf32>
    %cst_71 = arith.constant 8.99999984E-4 : f32
    %187 = vector.broadcast %cst_71 : f32 to vector<8x8xf32>
    %188 = arith.addf %186, %187 : vector<8x8xf32>
    %189 = arith.divf %185, %188 : vector<8x8xf32>
    %cst_72 = arith.constant dense<0.000000e+00> : vector<8xf32>
    %190 = vector.multi_reduction <add>, %189, %cst_72 [1] : vector<8x8xf32> to vector<8xf32>
    %191 = vector.shape_cast %190 : vector<8xf32> to vector<8x1xf32>
    %cst_73 = arith.constant dense<0.000000e+00> : vector<1xf32>
    %192 = vector.multi_reduction <add>, %191, %cst_73 [0] : vector<8x1xf32> to vector<1xf32>
    %193 = vector.shape_cast %192 : vector<1xf32> to vector<1x1xf32>
    %cst_74 = arith.constant 2.000000e+00 : f32
    %194 = vector.broadcast %cst_74 : f32 to vector<8x8xf32>
    %195 = arith.mulf %194, %178 : vector<8x8xf32>
    %cst_75 = arith.constant 9.99999974E-5 : f32
    %196 = vector.broadcast %cst_75 : f32 to vector<8x8xf32>
    %197 = arith.addf %195, %196 : vector<8x8xf32>
    %198 = arith.mulf %197, %185 : vector<8x8xf32>
    %199 = arith.addf %176, %177 : vector<8x8xf32>
    %cst_76 = arith.constant 9.99999974E-5 : f32
    %200 = vector.broadcast %cst_76 : f32 to vector<8x8xf32>
    %201 = arith.addf %199, %200 : vector<8x8xf32>
    %202 = arith.mulf %201, %188 : vector<8x8xf32>
    %203 = arith.divf %198, %202 : vector<8x8xf32>
    %cst_77 = arith.constant dense<0.000000e+00> : vector<8xf32>
    %204 = vector.multi_reduction <add>, %203, %cst_77 [1] : vector<8x8xf32> to vector<8xf32>
    %205 = vector.shape_cast %204 : vector<8xf32> to vector<8x1xf32>
    %cst_78 = arith.constant dense<0.000000e+00> : vector<1xf32>
    %206 = vector.multi_reduction <add>, %205, %cst_78 [0] : vector<8x1xf32> to vector<1xf32>
    %207 = vector.shape_cast %206 : vector<1xf32> to vector<1x1xf32>
    %c4_i32 = arith.constant 4 : i32
    %208 = vector.broadcast %c4_i32 : i32 to vector<8x128xi32>
    %209 = arith.cmpi eq, %4, %208 : vector<8x128xi32>
    %cst_79 = arith.constant 0.000000e+00 : f32
    %210 = vector.shape_cast %193 : vector<1x1xf32> to vector<1x1xf32>
    %211 = vector.broadcast %210 : vector<1x1xf32> to vector<8x128xf32>
    %212 = vector.broadcast %cst_79 : f32 to vector<8x128xf32>
    %213 = arith.select %209, %211, %212 : vector<8x128xi1>, vector<8x128xf32>
    %214 = arith.addf %147, %213 : vector<8x128xf32>
    %c5_i32 = arith.constant 5 : i32
    %215 = vector.broadcast %c5_i32 : i32 to vector<8x128xi32>
    %216 = arith.cmpi eq, %4, %215 : vector<8x128xi32>
    %cst_80 = arith.constant 0.000000e+00 : f32
    %217 = vector.shape_cast %207 : vector<1x1xf32> to vector<1x1xf32>
    %218 = vector.broadcast %217 : vector<1x1xf32> to vector<8x128xf32>
    %219 = vector.broadcast %cst_80 : f32 to vector<8x128xf32>
    %220 = arith.select %216, %218, %219 : vector<8x128xi1>, vector<8x128xf32>
    %221 = arith.addf %214, %220 : vector<8x128xf32>
    %c0_81 = arith.constant 0 : index
    %c0_82 = arith.constant 0 : index
    %222 = vector.load %arg10[%c0_81, %c0_82] : memref<4x8xf32, #tpu.memory_space<vmem>>, vector<4x8xf32>
    %c0_83 = arith.constant 0 : index
    %c0_84 = arith.constant 0 : index
    %223 = vector.load %arg14[%c0_83, %c0_84] : memref<8x4xf32, #tpu.memory_space<vmem>>, vector<8x4xf32>
    %cst_85 = arith.constant dense<0.000000e+00> : vector<4x8xf32>
    %224 = tpu.matmul %222, %151, %cst_85 {dimension_numbers = #tpu.dot_dimension_numbers<[1], [0], [0], [1], [0, 0, 1, 1], [], []>} : vector<4x8xf32>, vector<8x8xf32>, vector<4x8xf32> -> vector<4x8xf32>
    %cst_86 = arith.constant dense<0.000000e+00> : vector<4x4xf32>
    %225 = tpu.matmul %224, %223, %cst_86 {dimension_numbers = #tpu.dot_dimension_numbers<[1], [0], [0], [1], [0, 0, 1, 1], [], []>} : vector<4x8xf32>, vector<8x4xf32>, vector<4x4xf32> -> vector<4x4xf32>
    %cst_87 = arith.constant dense<0.000000e+00> : vector<4x8xf32>
    %226 = tpu.matmul %222, %153, %cst_87 {dimension_numbers = #tpu.dot_dimension_numbers<[1], [0], [0], [1], [0, 0, 1, 1], [], []>} : vector<4x8xf32>, vector<8x8xf32>, vector<4x8xf32> -> vector<4x8xf32>
    %cst_88 = arith.constant dense<0.000000e+00> : vector<4x4xf32>
    %227 = tpu.matmul %226, %223, %cst_88 {dimension_numbers = #tpu.dot_dimension_numbers<[1], [0], [0], [1], [0, 0, 1, 1], [], []>} : vector<4x8xf32>, vector<8x4xf32>, vector<4x4xf32> -> vector<4x4xf32>
    %c0_89 = arith.constant 0 : index
    %c0_90 = arith.constant 0 : index
    %228 = vector.load %arg6[%c0_89, %c0_90] : memref<4x4xbf16, #tpu.memory_space<vmem>>, vector<4x4xbf16>
    %229 = arith.mulf %225, %225 : vector<4x4xf32>
    %230 = arith.mulf %227, %227 : vector<4x4xf32>
    %231 = arith.mulf %225, %227 : vector<4x4xf32>
    %232 = tpu.concatenate %225, %227, %229, %230, %231 in 1 : vector<4x4xf32>, vector<4x4xf32>, vector<4x4xf32>, vector<4x4xf32>, vector<4x4xf32> -> vector<4x20xf32>
    %233 = arith.truncf %232 : vector<4x20xf32> to vector<4x20xbf16>
    %cst_91 = arith.constant dense<0.000000e+00> : vector<4x20xf32>
    %234 = tpu.matmul %228, %233, %cst_91 {dimension_numbers = #tpu.dot_dimension_numbers<[1], [0], [0], [1], [0, 0, 1, 1], [], []>} : vector<4x4xbf16>, vector<4x20xbf16>, vector<4x20xf32> -> vector<4x20xf32>
    %235 = vector.extract_strided_slice %234 {offsets = [0, 0], sizes = [4, 4], strides = [1, 1]} : vector<4x20xf32> to vector<4x4xf32>
    %236 = arith.truncf %235 : vector<4x4xf32> to vector<4x4xbf16>
    %cst_92 = arith.constant dense<0.000000e+00> : vector<4x4xf32>
    %237 = tpu.matmul %236, %228, %cst_92 {dimension_numbers = #tpu.dot_dimension_numbers<[1], [0], [0], [1], [0, 0, 1, 1], [], []>} : vector<4x4xbf16>, vector<4x4xbf16>, vector<4x4xf32> -> vector<4x4xf32>
    %238 = vector.extract_strided_slice %234 {offsets = [0, 4], sizes = [4, 4], strides = [1, 1]} : vector<4x20xf32> to vector<4x4xf32>
    %239 = arith.truncf %238 : vector<4x4xf32> to vector<4x4xbf16>
    %cst_93 = arith.constant dense<0.000000e+00> : vector<4x4xf32>
    %240 = tpu.matmul %239, %228, %cst_93 {dimension_numbers = #tpu.dot_dimension_numbers<[1], [0], [0], [1], [0, 0, 1, 1], [], []>} : vector<4x4xbf16>, vector<4x4xbf16>, vector<4x4xf32> -> vector<4x4xf32>
    %241 = vector.extract_strided_slice %234 {offsets = [0, 8], sizes = [4, 4], strides = [1, 1]} : vector<4x20xf32> to vector<4x4xf32>
    %242 = arith.truncf %241 : vector<4x4xf32> to vector<4x4xbf16>
    %cst_94 = arith.constant dense<0.000000e+00> : vector<4x4xf32>
    %243 = tpu.matmul %242, %228, %cst_94 {dimension_numbers = #tpu.dot_dimension_numbers<[1], [0], [0], [1], [0, 0, 1, 1], [], []>} : vector<4x4xbf16>, vector<4x4xbf16>, vector<4x4xf32> -> vector<4x4xf32>
    %244 = vector.extract_strided_slice %234 {offsets = [0, 12], sizes = [4, 4], strides = [1, 1]} : vector<4x20xf32> to vector<4x4xf32>
    %245 = arith.truncf %244 : vector<4x4xf32> to vector<4x4xbf16>
    %cst_95 = arith.constant dense<0.000000e+00> : vector<4x4xf32>
    %246 = tpu.matmul %245, %228, %cst_95 {dimension_numbers = #tpu.dot_dimension_numbers<[1], [0], [0], [1], [0, 0, 1, 1], [], []>} : vector<4x4xbf16>, vector<4x4xbf16>, vector<4x4xf32> -> vector<4x4xf32>
    %247 = vector.extract_strided_slice %234 {offsets = [0, 16], sizes = [4, 4], strides = [1, 1]} : vector<4x20xf32> to vector<4x4xf32>
    %248 = arith.truncf %247 : vector<4x4xf32> to vector<4x4xbf16>
    %cst_96 = arith.constant dense<0.000000e+00> : vector<4x4xf32>
    %249 = tpu.matmul %248, %228, %cst_96 {dimension_numbers = #tpu.dot_dimension_numbers<[1], [0], [0], [1], [0, 0, 1, 1], [], []>} : vector<4x4xbf16>, vector<4x4xbf16>, vector<4x4xf32> -> vector<4x4xf32>
    %250 = arith.mulf %237, %237 : vector<4x4xf32>
    %251 = arith.mulf %240, %240 : vector<4x4xf32>
    %252 = arith.mulf %237, %240 : vector<4x4xf32>
    %253 = arith.subf %243, %250 : vector<4x4xf32>
    %254 = arith.subf %246, %251 : vector<4x4xf32>
    %255 = arith.subf %249, %252 : vector<4x4xf32>
    %cst_97 = arith.constant 2.000000e+00 : f32
    %256 = vector.broadcast %cst_97 : f32 to vector<4x4xf32>
    %257 = arith.mulf %256, %255 : vector<4x4xf32>
    %cst_98 = arith.constant 8.99999984E-4 : f32
    %258 = vector.broadcast %cst_98 : f32 to vector<4x4xf32>
    %259 = arith.addf %257, %258 : vector<4x4xf32>
    %260 = arith.addf %253, %254 : vector<4x4xf32>
    %cst_99 = arith.constant 8.99999984E-4 : f32
    %261 = vector.broadcast %cst_99 : f32 to vector<4x4xf32>
    %262 = arith.addf %260, %261 : vector<4x4xf32>
    %263 = arith.divf %259, %262 : vector<4x4xf32>
    %cst_100 = arith.constant dense<0.000000e+00> : vector<4xf32>
    %264 = vector.multi_reduction <add>, %263, %cst_100 [1] : vector<4x4xf32> to vector<4xf32>
    %265 = vector.shape_cast %264 : vector<4xf32> to vector<4x1xf32>
    %cst_101 = arith.constant dense<0.000000e+00> : vector<1xf32>
    %266 = vector.multi_reduction <add>, %265, %cst_101 [0] : vector<4x1xf32> to vector<1xf32>
    %267 = vector.shape_cast %266 : vector<1xf32> to vector<1x1xf32>
    %cst_102 = arith.constant 2.000000e+00 : f32
    %268 = vector.broadcast %cst_102 : f32 to vector<4x4xf32>
    %269 = arith.mulf %268, %252 : vector<4x4xf32>
    %cst_103 = arith.constant 9.99999974E-5 : f32
    %270 = vector.broadcast %cst_103 : f32 to vector<4x4xf32>
    %271 = arith.addf %269, %270 : vector<4x4xf32>
    %272 = arith.mulf %271, %259 : vector<4x4xf32>
    %273 = arith.addf %250, %251 : vector<4x4xf32>
    %cst_104 = arith.constant 9.99999974E-5 : f32
    %274 = vector.broadcast %cst_104 : f32 to vector<4x4xf32>
    %275 = arith.addf %273, %274 : vector<4x4xf32>
    %276 = arith.mulf %275, %262 : vector<4x4xf32>
    %277 = arith.divf %272, %276 : vector<4x4xf32>
    %cst_105 = arith.constant dense<0.000000e+00> : vector<4xf32>
    %278 = vector.multi_reduction <add>, %277, %cst_105 [1] : vector<4x4xf32> to vector<4xf32>
    %279 = vector.shape_cast %278 : vector<4xf32> to vector<4x1xf32>
    %cst_106 = arith.constant dense<0.000000e+00> : vector<1xf32>
    %280 = vector.multi_reduction <add>, %279, %cst_106 [0] : vector<4x1xf32> to vector<1xf32>
    %281 = vector.shape_cast %280 : vector<1xf32> to vector<1x1xf32>
    %c6_i32 = arith.constant 6 : i32
    %282 = vector.broadcast %c6_i32 : i32 to vector<8x128xi32>
    %283 = arith.cmpi eq, %4, %282 : vector<8x128xi32>
    %cst_107 = arith.constant 0.000000e+00 : f32
    %284 = vector.shape_cast %267 : vector<1x1xf32> to vector<1x1xf32>
    %285 = vector.broadcast %284 : vector<1x1xf32> to vector<8x128xf32>
    %286 = vector.broadcast %cst_107 : f32 to vector<8x128xf32>
    %287 = arith.select %283, %285, %286 : vector<8x128xi1>, vector<8x128xf32>
    %288 = arith.addf %221, %287 : vector<8x128xf32>
    %c7_i32 = arith.constant 7 : i32
    %289 = vector.broadcast %c7_i32 : i32 to vector<8x128xi32>
    %290 = arith.cmpi eq, %4, %289 : vector<8x128xi32>
    %cst_108 = arith.constant 0.000000e+00 : f32
    %291 = vector.shape_cast %281 : vector<1x1xf32> to vector<1x1xf32>
    %292 = vector.broadcast %291 : vector<1x1xf32> to vector<8x128xf32>
    %293 = vector.broadcast %cst_108 : f32 to vector<8x128xf32>
    %294 = arith.select %290, %292, %293 : vector<8x128xi1>, vector<8x128xf32>
    %295 = arith.addf %288, %294 : vector<8x128xf32>
    %c0_109 = arith.constant 0 : index
    %c0_110 = arith.constant 0 : index
    %296 = vector.load %arg11[%c0_109, %c0_110] : memref<2x4xf32, #tpu.memory_space<vmem>>, vector<2x4xf32>
    %c0_111 = arith.constant 0 : index
    %c0_112 = arith.constant 0 : index
    %297 = vector.load %arg15[%c0_111, %c0_112] : memref<4x2xf32, #tpu.memory_space<vmem>>, vector<4x2xf32>
    %cst_113 = arith.constant dense<0.000000e+00> : vector<2x4xf32>
    %298 = tpu.matmul %296, %225, %cst_113 {dimension_numbers = #tpu.dot_dimension_numbers<[1], [0], [0], [1], [0, 0, 1, 1], [], []>} : vector<2x4xf32>, vector<4x4xf32>, vector<2x4xf32> -> vector<2x4xf32>
    %cst_114 = arith.constant dense<0.000000e+00> : vector<2x2xf32>
    %299 = tpu.matmul %298, %297, %cst_114 {dimension_numbers = #tpu.dot_dimension_numbers<[1], [0], [0], [1], [0, 0, 1, 1], [], []>} : vector<2x4xf32>, vector<4x2xf32>, vector<2x2xf32> -> vector<2x2xf32>
    %cst_115 = arith.constant dense<0.000000e+00> : vector<2x4xf32>
    %300 = tpu.matmul %296, %227, %cst_115 {dimension_numbers = #tpu.dot_dimension_numbers<[1], [0], [0], [1], [0, 0, 1, 1], [], []>} : vector<2x4xf32>, vector<4x4xf32>, vector<2x4xf32> -> vector<2x4xf32>
    %cst_116 = arith.constant dense<0.000000e+00> : vector<2x2xf32>
    %301 = tpu.matmul %300, %297, %cst_116 {dimension_numbers = #tpu.dot_dimension_numbers<[1], [0], [0], [1], [0, 0, 1, 1], [], []>} : vector<2x4xf32>, vector<4x2xf32>, vector<2x2xf32> -> vector<2x2xf32>
    %c0_117 = arith.constant 0 : index
    %c0_118 = arith.constant 0 : index
    %302 = vector.load %arg7[%c0_117, %c0_118] : memref<2x2xbf16, #tpu.memory_space<vmem>>, vector<2x2xbf16>
    %303 = arith.mulf %299, %299 : vector<2x2xf32>
    %304 = arith.mulf %301, %301 : vector<2x2xf32>
    %305 = arith.mulf %299, %301 : vector<2x2xf32>
    %306 = tpu.concatenate %299, %301, %303, %304, %305 in 1 : vector<2x2xf32>, vector<2x2xf32>, vector<2x2xf32>, vector<2x2xf32>, vector<2x2xf32> -> vector<2x10xf32>
    %307 = arith.truncf %306 : vector<2x10xf32> to vector<2x10xbf16>
    %cst_119 = arith.constant dense<0.000000e+00> : vector<2x10xf32>
    %308 = tpu.matmul %302, %307, %cst_119 {dimension_numbers = #tpu.dot_dimension_numbers<[1], [0], [0], [1], [0, 0, 1, 1], [], []>} : vector<2x2xbf16>, vector<2x10xbf16>, vector<2x10xf32> -> vector<2x10xf32>
    %309 = vector.extract_strided_slice %308 {offsets = [0, 0], sizes = [2, 2], strides = [1, 1]} : vector<2x10xf32> to vector<2x2xf32>
    %310 = arith.truncf %309 : vector<2x2xf32> to vector<2x2xbf16>
    %cst_120 = arith.constant dense<0.000000e+00> : vector<2x2xf32>
    %311 = tpu.matmul %310, %302, %cst_120 {dimension_numbers = #tpu.dot_dimension_numbers<[1], [0], [0], [1], [0, 0, 1, 1], [], []>} : vector<2x2xbf16>, vector<2x2xbf16>, vector<2x2xf32> -> vector<2x2xf32>
    %312 = vector.extract_strided_slice %308 {offsets = [0, 2], sizes = [2, 2], strides = [1, 1]} : vector<2x10xf32> to vector<2x2xf32>
    %313 = arith.truncf %312 : vector<2x2xf32> to vector<2x2xbf16>
    %cst_121 = arith.constant dense<0.000000e+00> : vector<2x2xf32>
    %314 = tpu.matmul %313, %302, %cst_121 {dimension_numbers = #tpu.dot_dimension_numbers<[1], [0], [0], [1], [0, 0, 1, 1], [], []>} : vector<2x2xbf16>, vector<2x2xbf16>, vector<2x2xf32> -> vector<2x2xf32>
    %315 = vector.extract_strided_slice %308 {offsets = [0, 4], sizes = [2, 2], strides = [1, 1]} : vector<2x10xf32> to vector<2x2xf32>
    %316 = arith.truncf %315 : vector<2x2xf32> to vector<2x2xbf16>
    %cst_122 = arith.constant dense<0.000000e+00> : vector<2x2xf32>
    %317 = tpu.matmul %316, %302, %cst_122 {dimension_numbers = #tpu.dot_dimension_numbers<[1], [0], [0], [1], [0, 0, 1, 1], [], []>} : vector<2x2xbf16>, vector<2x2xbf16>, vector<2x2xf32> -> vector<2x2xf32>
    %318 = vector.extract_strided_slice %308 {offsets = [0, 6], sizes = [2, 2], strides = [1, 1]} : vector<2x10xf32> to vector<2x2xf32>
    %319 = arith.truncf %318 : vector<2x2xf32> to vector<2x2xbf16>
    %cst_123 = arith.constant dense<0.000000e+00> : vector<2x2xf32>
    %320 = tpu.matmul %319, %302, %cst_123 {dimension_numbers = #tpu.dot_dimension_numbers<[1], [0], [0], [1], [0, 0, 1, 1], [], []>} : vector<2x2xbf16>, vector<2x2xbf16>, vector<2x2xf32> -> vector<2x2xf32>
    %321 = vector.extract_strided_slice %308 {offsets = [0, 8], sizes = [2, 2], strides = [1, 1]} : vector<2x10xf32> to vector<2x2xf32>
    %322 = arith.truncf %321 : vector<2x2xf32> to vector<2x2xbf16>
    %cst_124 = arith.constant dense<0.000000e+00> : vector<2x2xf32>
    %323 = tpu.matmul %322, %302, %cst_124 {dimension_numbers = #tpu.dot_dimension_numbers<[1], [0], [0], [1], [0, 0, 1, 1], [], []>} : vector<2x2xbf16>, vector<2x2xbf16>, vector<2x2xf32> -> vector<2x2xf32>
    %324 = arith.mulf %311, %311 : vector<2x2xf32>
    %325 = arith.mulf %314, %314 : vector<2x2xf32>
    %326 = arith.mulf %311, %314 : vector<2x2xf32>
    %327 = arith.subf %317, %324 : vector<2x2xf32>
    %328 = arith.subf %320, %325 : vector<2x2xf32>
    %329 = arith.subf %323, %326 : vector<2x2xf32>
    %cst_125 = arith.constant 2.000000e+00 : f32
    %330 = vector.broadcast %cst_125 : f32 to vector<2x2xf32>
    %331 = arith.mulf %330, %329 : vector<2x2xf32>
    %cst_126 = arith.constant 8.99999984E-4 : f32
    %332 = vector.broadcast %cst_126 : f32 to vector<2x2xf32>
    %333 = arith.addf %331, %332 : vector<2x2xf32>
    %334 = arith.addf %327, %328 : vector<2x2xf32>
    %cst_127 = arith.constant 8.99999984E-4 : f32
    %335 = vector.broadcast %cst_127 : f32 to vector<2x2xf32>
    %336 = arith.addf %334, %335 : vector<2x2xf32>
    %337 = arith.divf %333, %336 : vector<2x2xf32>
    %cst_128 = arith.constant dense<0.000000e+00> : vector<2xf32>
    %338 = vector.multi_reduction <add>, %337, %cst_128 [1] : vector<2x2xf32> to vector<2xf32>
    %339 = vector.shape_cast %338 : vector<2xf32> to vector<2x1xf32>
    %cst_129 = arith.constant dense<0.000000e+00> : vector<1xf32>
    %340 = vector.multi_reduction <add>, %339, %cst_129 [0] : vector<2x1xf32> to vector<1xf32>
    %341 = vector.shape_cast %340 : vector<1xf32> to vector<1x1xf32>
    %cst_130 = arith.constant 2.000000e+00 : f32
    %342 = vector.broadcast %cst_130 : f32 to vector<2x2xf32>
    %343 = arith.mulf %342, %326 : vector<2x2xf32>
    %cst_131 = arith.constant 9.99999974E-5 : f32
    %344 = vector.broadcast %cst_131 : f32 to vector<2x2xf32>
    %345 = arith.addf %343, %344 : vector<2x2xf32>
    %346 = arith.mulf %345, %333 : vector<2x2xf32>
    %347 = arith.addf %324, %325 : vector<2x2xf32>
    %cst_132 = arith.constant 9.99999974E-5 : f32
    %348 = vector.broadcast %cst_132 : f32 to vector<2x2xf32>
    %349 = arith.addf %347, %348 : vector<2x2xf32>
    %350 = arith.mulf %349, %336 : vector<2x2xf32>
    %351 = arith.divf %346, %350 : vector<2x2xf32>
    %cst_133 = arith.constant dense<0.000000e+00> : vector<2xf32>
    %352 = vector.multi_reduction <add>, %351, %cst_133 [1] : vector<2x2xf32> to vector<2xf32>
    %353 = vector.shape_cast %352 : vector<2xf32> to vector<2x1xf32>
    %cst_134 = arith.constant dense<0.000000e+00> : vector<1xf32>
    %354 = vector.multi_reduction <add>, %353, %cst_134 [0] : vector<2x1xf32> to vector<1xf32>
    %355 = vector.shape_cast %354 : vector<1xf32> to vector<1x1xf32>
    %c8_i32 = arith.constant 8 : i32
    %356 = vector.broadcast %c8_i32 : i32 to vector<8x128xi32>
    %357 = arith.cmpi eq, %4, %356 : vector<8x128xi32>
    %cst_135 = arith.constant 0.000000e+00 : f32
    %358 = vector.shape_cast %341 : vector<1x1xf32> to vector<1x1xf32>
    %359 = vector.broadcast %358 : vector<1x1xf32> to vector<8x128xf32>
    %360 = vector.broadcast %cst_135 : f32 to vector<8x128xf32>
    %361 = arith.select %357, %359, %360 : vector<8x128xi1>, vector<8x128xf32>
    %362 = arith.addf %295, %361 : vector<8x128xf32>
    %c9_i32 = arith.constant 9 : i32
    %363 = vector.broadcast %c9_i32 : i32 to vector<8x128xi32>
    %364 = arith.cmpi eq, %4, %363 : vector<8x128xi32>
    %cst_136 = arith.constant 0.000000e+00 : f32
    %365 = vector.shape_cast %355 : vector<1x1xf32> to vector<1x1xf32>
    %366 = vector.broadcast %365 : vector<1x1xf32> to vector<8x128xf32>
    %367 = vector.broadcast %cst_136 : f32 to vector<8x128xf32>
    %368 = arith.select %364, %366, %367 : vector<8x128xi1>, vector<8x128xf32>
    %369 = arith.addf %362, %368 : vector<8x128xf32>
    %c0_137 = arith.constant 0 : index
    %c0_138 = arith.constant 0 : index
    %c0_139 = arith.constant 0 : index
    %370 = vector.load %arg16[%c0_137, %c0_138, %c0_139] : memref<1x8x128xf32, #tpu.memory_space<vmem>>, vector<1x8x128xf32>
    %371 = vector.shape_cast %370 : vector<1x8x128xf32> to vector<8x128xf32>
    %372 = vector.shape_cast %369 : vector<8x128xf32> to vector<1x8x128xf32>
    tpu.vector_store %arg16[%c0_137, %c0_138, %c0_139], %372 {strides = array<i32>} : memref<1x8x128xf32, #tpu.memory_space<vmem>>, vector<1x8x128xf32>,
    return
  }
  func.func @transform_0(%arg0: i32) -> (i32, i32, i32) {
    %c0_i32 = arith.constant 0 : i32
    %c0_i32_0 = arith.constant 0 : i32
    %c0_i32_1 = arith.constant 0 : i32
    return %arg0, %c0_i32, %c0_i32_0 : i32, i32, i32
  }
  func.func @transform_1(%arg0: i32) -> (i32, i32, i32) {
    %c0_i32 = arith.constant 0 : i32
    %c0_i32_0 = arith.constant 0 : i32
    %c0_i32_1 = arith.constant 0 : i32
    return %arg0, %c0_i32, %c0_i32_0 : i32, i32, i32
  }
  func.func @transform_2(%arg0: i32) -> (i32, i32) {
    %c0_i32 = arith.constant 0 : i32
    %c0_i32_0 = arith.constant 0 : i32
    %c0_i32_1 = arith.constant 0 : i32
    return %c0_i32, %c0_i32_0 : i32, i32
  }
  func.func @transform_3(%arg0: i32) -> (i32, i32) {
    %c0_i32 = arith.constant 0 : i32
    %c0_i32_0 = arith.constant 0 : i32
    %c0_i32_1 = arith.constant 0 : i32
    return %c0_i32, %c0_i32_0 : i32, i32
  }
  func.func @transform_4(%arg0: i32) -> (i32, i32) {
    %c0_i32 = arith.constant 0 : i32
    %c0_i32_0 = arith.constant 0 : i32
    %c0_i32_1 = arith.constant 0 : i32
    return %c0_i32, %c0_i32_0 : i32, i32
  }
  func.func @transform_5(%arg0: i32) -> (i32, i32) {
    %c0_i32 = arith.constant 0 : i32
    %c0_i32_0 = arith.constant 0 : i32
    %c0_i32_1 = arith.constant 0 : i32
    return %c0_i32, %c0_i32_0 : i32, i32
  }
  func.func @transform_6(%arg0: i32) -> (i32, i32) {
    %c0_i32 = arith.constant 0 : i32
    %c0_i32_0 = arith.constant 0 : i32
    %c0_i32_1 = arith.constant 0 : i32
    return %c0_i32, %c0_i32_0 : i32, i32
  }
  func.func @transform_7(%arg0: i32) -> (i32, i32) {
    %c0_i32 = arith.constant 0 : i32
    %c0_i32_0 = arith.constant 0 : i32
    %c0_i32_1 = arith.constant 0 : i32
    return %c0_i32, %c0_i32_0 : i32, i32
  }
  func.func @transform_8(%arg0: i32) -> (i32, i32) {
    %c0_i32 = arith.constant 0 : i32
    %c0_i32_0 = arith.constant 0 : i32
    %c0_i32_1 = arith.constant 0 : i32
    return %c0_i32, %c0_i32_0 : i32, i32
  }
  func.func @transform_9(%arg0: i32) -> (i32, i32) {
    %c0_i32 = arith.constant 0 : i32
    %c0_i32_0 = arith.constant 0 : i32
    %c0_i32_1 = arith.constant 0 : i32
    return %c0_i32, %c0_i32_0 : i32, i32
  }
  func.func @transform_10(%arg0: i32) -> (i32, i32) {
    %c0_i32 = arith.constant 0 : i32
    %c0_i32_0 = arith.constant 0 : i32
    %c0_i32_1 = arith.constant 0 : i32
    return %c0_i32, %c0_i32_0 : i32, i32
  }
  func.func @transform_11(%arg0: i32) -> (i32, i32) {
    %c0_i32 = arith.constant 0 : i32
    %c0_i32_0 = arith.constant 0 : i32
    %c0_i32_1 = arith.constant 0 : i32
    return %c0_i32, %c0_i32_0 : i32, i32
  }
  func.func @transform_12(%arg0: i32) -> (i32, i32) {
    %c0_i32 = arith.constant 0 : i32
    %c0_i32_0 = arith.constant 0 : i32
    %c0_i32_1 = arith.constant 0 : i32
    return %c0_i32, %c0_i32_0 : i32, i32
  }
  func.func @transform_13(%arg0: i32) -> (i32, i32) {
    %c0_i32 = arith.constant 0 : i32
    %c0_i32_0 = arith.constant 0 : i32
    %c0_i32_1 = arith.constant 0 : i32
    return %c0_i32, %c0_i32_0 : i32, i32
  }
  func.func @transform_14(%arg0: i32) -> (i32, i32) {
    %c0_i32 = arith.constant 0 : i32
    %c0_i32_0 = arith.constant 0 : i32
    %c0_i32_1 = arith.constant 0 : i32
    return %c0_i32, %c0_i32_0 : i32, i32
  }
  func.func @transform_15(%arg0: i32) -> (i32, i32, i32) {
    %c0_i32 = arith.constant 0 : i32
    %c0_i32_0 = arith.constant 0 : i32
    %c0_i32_1 = arith.constant 0 : i32
    return %arg0, %c0_i32, %c0_i32_0 : i32, i32, i32
  }
}

</mosaic_0001>

<llo_original>
// kernel: tpu_custom_call.1
$region0: #{tpu_custom_call.1}
  #allocation0 [shape = 'u32[]', space=smem, size = 0x4, offset = 0x4, fixed_abs, tag = 'smem constant byte address 0x4 - core index']
  #allocation1 [shape = 'u32[72,128]{1,0:T(1,128)}', space=vmem, size = 0x9000, scoped, tag = 'internal scratch']
  %s0 = inlined_call_operand.hbm [shape: f32[6,32,32], index: 0, kind: input, shape index: {}]
  %s1 = inlined_call_operand.hbm [shape: f32[6,32,32], index: 1, kind: input, shape index: {}]
  %s2 = inlined_call_operand.vmem [shape: bf16[32,32], index: 2, kind: input, shape index: {}]
  %s3 = inlined_call_operand.vmem [shape: bf16[16,16], index: 3, kind: input, shape index: {}]
  %s4 = inlined_call_operand.vmem [shape: bf16[8,8], index: 4, kind: input, shape index: {}]
  %s5 = inlined_call_operand.vmem [shape: bf16[4,4], index: 5, kind: input, shape index: {}]
  %s6 = inlined_call_operand.vmem [shape: bf16[2,2], index: 6, kind: input, shape index: {}]
  %s7 = inlined_call_operand.vmem [shape: f32[16,32], index: 7, kind: input, shape index: {}]
  %s8 = inlined_call_operand.vmem [shape: f32[8,16], index: 8, kind: input, shape index: {}]
  %s9 = inlined_call_operand.vmem [shape: f32[4,8], index: 9, kind: input, shape index: {}]
  %s10 = inlined_call_operand.vmem [shape: f32[2,4], index: 10, kind: input, shape index: {}]
  %s11 = inlined_call_operand.vmem [shape: f32[32,16], index: 11, kind: input, shape index: {}]
  %s12 = inlined_call_operand.vmem [shape: f32[16,8], index: 12, kind: input, shape index: {}]
  %s13 = inlined_call_operand.vmem [shape: f32[8,4], index: 13, kind: input, shape index: {}]
  %s14 = inlined_call_operand.vmem [shape: f32[4,2], index: 14, kind: input, shape index: {}]
  %s15 = inlined_call_operand.hbm [shape: f32[6,8,128], index: 15, kind: output, shape index: {}]
  %s16 = sld [smem:[#allocation0]]
  $region101: #{tpu_custom_call.1} parent=0
    _
  %s18 = ssub.s32 1, %s16
  %s19 = scalar_select 0, %s18, %s16
  $region1: #{tpu_custom_call.1} parent=0
    #allocation2 [shape = 'u8[32768]{0}', space=vmem, size = 0x8000, scoped, tag = 'input window, operand 0']
    #allocation3 [shape = 's32[2]{0}', space=sflag, size = 0x8, scoped, tag = 'scoped memory for tpu_custom_call.1']
    #allocation4 [shape = 's32[2]{0}', space=sflag, size = 0x8, scoped, tag = 'scoped memory for tpu_custom_call.1']
    #allocation5 [shape = 'u8[32768]{0}', space=vmem, size = 0x8000, scoped, tag = 'input window, operand 1']
    #allocation6 [shape = 's32[2]{0}', space=sflag, size = 0x8, scoped, tag = 'scoped memory for tpu_custom_call.1']
    #allocation7 [shape = 'u8[8192]{0}', space=vmem, size = 0x2000, scoped, tag = 'output window, operand 0']
    %20 = vsyncpa [#allocation3], 0
    %s21 = scalar_lea.sflag [#allocation3], 1
    %22 = vsyncpa %s21, 0
    %23 = vsyncpa [#allocation6], 0
    %s24 = scalar_lea.sflag [#allocation6], 1
    %25 = vsyncpa %s24, 0
    %26 = vsyncpa [#allocation4], 0
    %s27 = scalar_lea.sflag [#allocation4], 1
    %28 = vsyncpa %s27, 0
    loop: start=0, step=1, limit=8
    $region2: #{tpu_custom_call.1} parent=1 // loop_pre_header
      _
    $region3: #{tpu_custom_call.1} parent=1 // loop_header
      %s30 = sphi 0, %s34
      %p31 = scmp.ge.s32.totalorder %s30, 8
      %s40 = sphi 0, %s42
      %s43 = sphi 0, %s40
      %s44 = sphi 0, %s43
      %s60 = sphi 0, %s44
      %s66 = sphi 0, %s68
      %s69 = sphi 0, %s66
      %s70 = sphi 0, %s69
      %s86 = sphi 0, %s70
      %s90 = sphi 0, %s90
      %s92 = sphi 0, %s90
      %s93 = sphi 0, %s92
      %s107 = sphi 0, %s93
      %s111 = sphi 0, %s111
      %s113 = sphi 0, %s111
      %s114 = sphi 0, %s113
      %s128 = sphi 0, %s114
      %s132 = sphi 0, %s132
      %s134 = sphi 0, %s132
      %s135 = sphi 0, %s134
      %s149 = sphi 0, %s135
      %s153 = sphi 0, %s153
      %s155 = sphi 0, %s153
      %s156 = sphi 0, %s155
      %s170 = sphi 0, %s156
      %s174 = sphi 0, %s174
      %s176 = sphi 0, %s174
      %s177 = sphi 0, %s176
      %s191 = sphi 0, %s177
      %s195 = sphi 0, %s195
      %s197 = sphi 0, %s195
      %s198 = sphi 0, %s197
      %s212 = sphi 0, %s198
      %s216 = sphi 0, %s216
      %s218 = sphi 0, %s216
      %s219 = sphi 0, %s218
      %s233 = sphi 0, %s219
      %s237 = sphi 0, %s237
      %s239 = sphi 0, %s237
      %s240 = sphi 0, %s239
      %s254 = sphi 0, %s240
      %s258 = sphi 0, %s258
      %s260 = sphi 0, %s258
      %s261 = sphi 0, %s260
      %s275 = sphi 0, %s261
      %s279 = sphi 0, %s279
      %s281 = sphi 0, %s279
      %s282 = sphi 0, %s281
      %s296 = sphi 0, %s282
      %s300 = sphi 0, %s300
      %s302 = sphi 0, %s300
      %s303 = sphi 0, %s302
      %s317 = sphi 0, %s303
      %s321 = sphi 0, %s321
      %s323 = sphi 0, %s321
      %s324 = sphi 0, %s323
      %s338 = sphi 0, %s324
      %s342 = sphi 0, %s342
      %s344 = sphi 0, %s342
      %s345 = sphi 0, %s344
      %s359 = sphi 0, %s345
      %s365 = sphi 0, %s367
      %s368 = sphi 0, %s365
      %s369 = sphi 0, %s368
      %s385 = sphi 0, %s369
    $region4: #{tpu_custom_call.1} parent=1 // loop_header_branch
      %33 = sbr.rel (%p31) target = $region8
    $region5: #{tpu_custom_call.1} parent=1 // loop_body
      %s35 = ssub.s32 %s30, 1
      %s36 = ssub.s32 %s30, 2
      %s37 = sadd.s32 %s30, 1
      %s38 = ssub.s32 %s30, %s37
      %p39 = scmp.eq.s32.totalorder %s38, 0
      %s41 = sadd.s32 %s40, 1
      %s42 = scalar_select %p39, %s40, %s41
      %p45 = pneg %p39
      %p46 = scmp.eq.s32.totalorder %s30, 5
      %p47 = por %p45, %p46
      %p48 = scmp.ne.s32.totalorder %s40, %s43
      %p49 = scmp.eq.s32.totalorder %s30, 0
      %p50 = por %p48, %p49
      %p51 = scmp.ne.s32.totalorder %s40, %s43
      %p52 = scmp.eq.s32.totalorder %s35, 5
      %p53 = por %p51, %p52
      %p54 = scmp.ne.s32.totalorder %s43, %s44
      %p55 = scmp.eq.s32.totalorder %s35, 0
      %p56 = por %p54, %p55
      %p57 = scmp.ne.s32.totalorder %s43, %s44
      %p58 = scmp.eq.s32.totalorder %s36, 5
      %p59 = por %p57, %p58
      %p61 = scmp.ne.s32.totalorder %s44, %s60
      %p62 = scmp.eq.s32.totalorder %s36, 0
      %p63 = por %p61, %p62
      %s64 = ssub.s32 %s30, %s37
      %p65 = scmp.eq.s32.totalorder %s64, 0
      %s67 = sadd.s32 %s66, 1
      %s68 = scalar_select %p65, %s66, %s67
      %p71 = pneg %p65
      %p72 = scmp.eq.s32.totalorder %s30, 5
      %p73 = por %p71, %p72
      %p74 = scmp.ne.s32.totalorder %s66, %s69
      %p75 = scmp.eq.s32.totalorder %s30, 0
      %p76 = por %p74, %p75
      %p77 = scmp.ne.s32.totalorder %s66, %s69
      %p78 = scmp.eq.s32.totalorder %s35, 5
      %p79 = por %p77, %p78
      %p80 = scmp.ne.s32.totalorder %s69, %s70
      %p81 = scmp.eq.s32.totalorder %s35, 0
      %p82 = por %p80, %p81
      %p83 = scmp.ne.s32.totalorder %s69, %s70
      %p84 = scmp.eq.s32.totalorder %s36, 5
      %p85 = por %p83, %p84
      %p87 = scmp.ne.s32.totalorder %s70, %s86
      %p88 = scmp.eq.s32.totalorder %s36, 0
      %p89 = por %p87, %p88
      %s91 = sadd.s32 %s90, 1
      %p94 = scmp.eq.s32.totalorder %s30, 5
      %p95 = scmp.ne.s32.totalorder %s90, %s92
      %p96 = scmp.eq.s32.totalorder %s30, 0
      %p97 = por %p95, %p96
      %p98 = scmp.ne.s32.totalorder %s90, %s92
      %p99 = scmp.eq.s32.totalorder %s35, 5
      %p100 = por %p98, %p99
      %p101 = scmp.ne.s32.totalorder %s92, %s93
      %p102 = scmp.eq.s32.totalorder %s35, 0
      %p103 = por %p101, %p102
      %p104 = scmp.ne.s32.totalorder %s92, %s93
      %p105 = scmp.eq.s32.totalorder %s36, 5
      %p106 = por %p104, %p105
      %p108 = scmp.ne.s32.totalorder %s93, %s107
      %p109 = scmp.eq.s32.totalorder %s36, 0
      %p110 = por %p108, %p109
      %s112 = sadd.s32 %s111, 1
      %p115 = scmp.eq.s32.totalorder %s30, 5
      %p116 = scmp.ne.s32.totalorder %s111, %s113
      %p117 = scmp.eq.s32.totalorder %s30, 0
      %p118 = por %p116, %p117
      %p119 = scmp.ne.s32.totalorder %s111, %s113
      %p120 = scmp.eq.s32.totalorder %s35, 5
      %p121 = por %p119, %p120
      %p122 = scmp.ne.s32.totalorder %s113, %s114
      %p123 = scmp.eq.s32.totalorder %s35, 0
      %p124 = por %p122, %p123
      %p125 = scmp.ne.s32.totalorder %s113, %s114
      %p126 = scmp.eq.s32.totalorder %s36, 5
      %p127 = por %p125, %p126
      %p129 = scmp.ne.s32.totalorder %s114, %s128
      %p130 = scmp.eq.s32.totalorder %s36, 0
      %p131 = por %p129, %p130
      %s133 = sadd.s32 %s132, 1
      %p136 = scmp.eq.s32.totalorder %s30, 5
      %p137 = scmp.ne.s32.totalorder %s132, %s134
      %p138 = scmp.eq.s32.totalorder %s30, 0
      %p139 = por %p137, %p138
      %p140 = scmp.ne.s32.totalorder %s132, %s134
      %p141 = scmp.eq.s32.totalorder %s35, 5
      %p142 = por %p140, %p141
      %p143 = scmp.ne.s32.totalorder %s134, %s135
      %p144 = scmp.eq.s32.totalorder %s35, 0
      %p145 = por %p143, %p144
      %p146 = scmp.ne.s32.totalorder %s134, %s135
      %p147 = scmp.eq.s32.totalorder %s36, 5
      %p148 = por %p146, %p147
      %p150 = scmp.ne.s32.totalorder %s135, %s149
      %p151 = scmp.eq.s32.totalorder %s36, 0
      %p152 = por %p150, %p151
      %s154 = sadd.s32 %s153, 1
      %p157 = scmp.eq.s32.totalorder %s30, 5
      %p158 = scmp.ne.s32.totalorder %s153, %s155
      %p159 = scmp.eq.s32.totalorder %s30, 0
      %p160 = por %p158, %p159
      %p161 = scmp.ne.s32.totalorder %s153, %s155
      %p162 = scmp.eq.s32.totalorder %s35, 5
      %p163 = por %p161, %p162
      %p164 = scmp.ne.s32.totalorder %s155, %s156
      %p165 = scmp.eq.s32.totalorder %s35, 0
      %p166 = por %p164, %p165
      %p167 = scmp.ne.s32.totalorder %s155, %s156
      %p168 = scmp.eq.s32.totalorder %s36, 5
      %p169 = por %p167, %p168
      %p171 = scmp.ne.s32.totalorder %s156, %s170
      %p172 = scmp.eq.s32.totalorder %s36, 0
      %p173 = por %p171, %p172
      %s175 = sadd.s32 %s174, 1
      %p178 = scmp.eq.s32.totalorder %s30, 5
      %p179 = scmp.ne.s32.totalorder %s174, %s176
      %p180 = scmp.eq.s32.totalorder %s30, 0
      %p181 = por %p179, %p180
      %p182 = scmp.ne.s32.totalorder %s174, %s176
      %p183 = scmp.eq.s32.totalorder %s35, 5
      %p184 = por %p182, %p183
      %p185 = scmp.ne.s32.totalorder %s176, %s177
      %p186 = scmp.eq.s32.totalorder %s35, 0
      %p187 = por %p185, %p186
      %p188 = scmp.ne.s32.totalorder %s176, %s177
      %p189 = scmp.eq.s32.totalorder %s36, 5
      %p190 = por %p188, %p189
      %p192 = scmp.ne.s32.totalorder %s177, %s191
      %p193 = scmp.eq.s32.totalorder %s36, 0
      %p194 = por %p192, %p193
      %s196 = sadd.s32 %s195, 1
      %p199 = scmp.eq.s32.totalorder %s30, 5
      %p200 = scmp.ne.s32.totalorder %s195, %s197
      %p201 = scmp.eq.s32.totalorder %s30, 0
      %p202 = por %p200, %p201
      %p203 = scmp.ne.s32.totalorder %s195, %s197
      %p204 = scmp.eq.s32.totalorder %s35, 5
      %p205 = por %p203, %p204
      %p206 = scmp.ne.s32.totalorder %s197, %s198
      %p207 = scmp.eq.s32.totalorder %s35, 0
      %p208 = por %p206, %p207
      %p209 = scmp.ne.s32.totalorder %s197, %s198
      %p210 = scmp.eq.s32.totalorder %s36, 5
      %p211 = por %p209, %p210
      %p213 = scmp.ne.s32.totalorder %s198, %s212
      %p214 = scmp.eq.s32.totalorder %s36, 0
      %p215 = por %p213, %p214
      %s217 = sadd.s32 %s216, 1
      %p220 = scmp.eq.s32.totalorder %s30, 5
      %p221 = scmp.ne.s32.totalorder %s216, %s218
      %p222 = scmp.eq.s32.totalorder %s30, 0
      %p223 = por %p221, %p222
      %p224 = scmp.ne.s32.totalorder %s216, %s218
      %p225 = scmp.eq.s32.totalorder %s35, 5
      %p226 = por %p224, %p225
      %p227 = scmp.ne.s32.totalorder %s218, %s219
      %p228 = scmp.eq.s32.totalorder %s35, 0
      %p229 = por %p227, %p228
      %p230 = scmp.ne.s32.totalorder %s218, %s219
      %p231 = scmp.eq.s32.totalorder %s36, 5
      %p232 = por %p230, %p231
      %p234 = scmp.ne.s32.totalorder %s219, %s233
      %p235 = scmp.eq.s32.totalorder %s36, 0
      %p236 = por %p234, %p235
      %s238 = sadd.s32 %s237, 1
      %p241 = scmp.eq.s32.totalorder %s30, 5
      %p242 = scmp.ne.s32.totalorder %s237, %s239
      %p243 = scmp.eq.s32.totalorder %s30, 0
      %p244 = por %p242, %p243
      %p245 = scmp.ne.s32.totalorder %s237, %s239
      %p246 = scmp.eq.s32.totalorder %s35, 5
      %p247 = por %p245, %p246
      %p248 = scmp.ne.s32.totalorder %s239, %s240
      %p249 = scmp.eq.s32.totalorder %s35, 0
      %p250 = por %p248, %p249
      %p251 = scmp.ne.s32.totalorder %s239, %s240
      %p252 = scmp.eq.s32.totalorder %s36, 5
      %p253 = por %p251, %p252
      %p255 = scmp.ne.s32.totalorder %s240, %s254
      %p256 = scmp.eq.s32.totalorder %s36, 0
      %p257 = por %p255, %p256
      %s259 = sadd.s32 %s258, 1
      %p262 = scmp.eq.s32.totalorder %s30, 5
      %p263 = scmp.ne.s32.totalorder %s258, %s260
      %p264 = scmp.eq.s32.totalorder %s30, 0
      %p265 = por %p263, %p264
      %p266 = scmp.ne.s32.totalorder %s258, %s260
      %p267 = scmp.eq.s32.totalorder %s35, 5
      %p268 = por %p266, %p267
      %p269 = scmp.ne.s32.totalorder %s260, %s261
      %p270 = scmp.eq.s32.totalorder %s35, 0
      %p271 = por %p269, %p270
      %p272 = scmp.ne.s32.totalorder %s260, %s261
      %p273 = scmp.eq.s32.totalorder %s36, 5
      %p274 = por %p272, %p273
      %p276 = scmp.ne.s32.totalorder %s261, %s275
      %p277 = scmp.eq.s32.totalorder %s36, 0
      %p278 = por %p276, %p277
      %s280 = sadd.s32 %s279, 1
      %p283 = scmp.eq.s32.totalorder %s30, 5
      %p284 = scmp.ne.s32.totalorder %s279, %s281
      %p285 = scmp.eq.s32.totalorder %s30, 0
      %p286 = por %p284, %p285
      %p287 = scmp.ne.s32.totalorder %s279, %s281
      %p288 = scmp.eq.s32.totalorder %s35, 5
      %p289 = por %p287, %p288
      %p290 = scmp.ne.s32.totalorder %s281, %s282
      %p291 = scmp.eq.s32.totalorder %s35, 0
      %p292 = por %p290, %p291
      %p293 = scmp.ne.s32.totalorder %s281, %s282
      %p294 = scmp.eq.s32.totalorder %s36, 5
      %p295 = por %p293, %p294
      %p297 = scmp.ne.s32.totalorder %s282, %s296
      %p298 = scmp.eq.s32.totalorder %s36, 0
      %p299 = por %p297, %p298
      %s301 = sadd.s32 %s300, 1
      %p304 = scmp.eq.s32.totalorder %s30, 5
      %p305 = scmp.ne.s32.totalorder %s300, %s302
      %p306 = scmp.eq.s32.totalorder %s30, 0
      %p307 = por %p305, %p306
      %p308 = scmp.ne.s32.totalorder %s300, %s302
      %p309 = scmp.eq.s32.totalorder %s35, 5
      %p310 = por %p308, %p309
      %p311 = scmp.ne.s32.totalorder %s302, %s303
      %p312 = scmp.eq.s32.totalorder %s35, 0
      %p313 = por %p311, %p312
      %p314 = scmp.ne.s32.totalorder %s302, %s303
      %p315 = scmp.eq.s32.totalorder %s36, 5
      %p316 = por %p314, %p315
      %p318 = scmp.ne.s32.totalorder %s303, %s317
      %p319 = scmp.eq.s32.totalorder %s36, 0
      %p320 = por %p318, %p319
      %s322 = sadd.s32 %s321, 1
      %p325 = scmp.eq.s32.totalorder %s30, 5
      %p326 = scmp.ne.s32.totalorder %s321, %s323
      %p327 = scmp.eq.s32.totalorder %s30, 0
      %p328 = por %p326, %p327
      %p329 = scmp.ne.s32.totalorder %s321, %s323
      %p330 = scmp.eq.s32.totalorder %s35, 5
      %p331 = por %p329, %p330
      %p332 = scmp.ne.s32.totalorder %s323, %s324
      %p333 = scmp.eq.s32.totalorder %s35, 0
      %p334 = por %p332, %p333
      %p335 = scmp.ne.s32.totalorder %s323, %s324
      %p336 = scmp.eq.s32.totalorder %s36, 5
      %p337 = por %p335, %p336
      %p339 = scmp.ne.s32.totalorder %s324, %s338
      %p340 = scmp.eq.s32.totalorder %s36, 0
      %p341 = por %p339, %p340
      %s343 = sadd.s32 %s342, 1
      %p346 = scmp.eq.s32.totalorder %s30, 5
      %p347 = scmp.ne.s32.totalorder %s342, %s344
      %p348 = scmp.eq.s32.totalorder %s30, 0
      %p349 = por %p347, %p348
      %p350 = scmp.ne.s32.totalorder %s342, %s344
      %p351 = scmp.eq.s32.totalorder %s35, 5
      %p352 = por %p350, %p351
      %p353 = scmp.ne.s32.totalorder %s344, %s345
      %p354 = scmp.eq.s32.totalorder %s35, 0
      %p355 = por %p353, %p354
      %p356 = scmp.ne.s32.totalorder %s344, %s345
      %p357 = scmp.eq.s32.totalorder %s36, 5
      %p358 = por %p356, %p357
      %p360 = scmp.ne.s32.totalorder %s345, %s359
      %p361 = scmp.eq.s32.totalorder %s36, 0
      %p362 = por %p360, %p361
      %s363 = ssub.s32 %s30, %s37
      %p364 = scmp.eq.s32.totalorder %s363, 0
      %s366 = sadd.s32 %s365, 1
      %s367 = scalar_select %p364, %s365, %s366
      %p370 = pneg %p364
      %p371 = scmp.eq.s32.totalorder %s30, 5
      %p372 = por %p370, %p371
      %p373 = scmp.ne.s32.totalorder %s365, %s368
      %p374 = scmp.eq.s32.totalorder %s30, 0
      %p375 = por %p373, %p374
      %p376 = scmp.ne.s32.totalorder %s365, %s368
      %p377 = scmp.eq.s32.totalorder %s35, 5
      %p378 = por %p376, %p377
      %p379 = scmp.ne.s32.totalorder %s368, %s369
      %p380 = scmp.eq.s32.totalorder %s35, 0
      %p381 = por %p379, %p380
      %p382 = scmp.ne.s32.totalorder %s368, %s369
      %p383 = scmp.eq.s32.totalorder %s36, 5
      %p384 = por %p382, %p383
      %p386 = scmp.ne.s32.totalorder %s369, %s385
      %p387 = scmp.eq.s32.totalorder %s36, 0
      %p388 = por %p386, %p387
      %p389 = scmp.le.s32.totalorder 1, %s30
      %p390 = scmp.lt.s32.totalorder %s30, 7
      %p391 = pnand %p389, %p390
      %p392 = pneg %p391
      // Predicated region
      $region9: #{tpu_custom_call.1} parent=5 // pred_check
        _
      $region10: #{tpu_custom_call.1} parent=5 // pred_check_branch
        %394 = sbr.rel (%p391) target = $region12
      $region11: #{tpu_custom_call.1} parent=5 // pred_region
        %s395 = ssub.s32 %s30, 1
        // Predicated region
        $region13: #{tpu_custom_call.1} parent=11 // pred_check
          %p396 = pneg %p103
        $region14: #{tpu_custom_call.1} parent=11 // pred_check_branch
          %398 = sbr.rel (%p396) target = $region16
        $region15: #{tpu_custom_call.1} parent=11 // pred_region
          _
        $region16: #{tpu_custom_call.1} parent=11 // pred_fallthru
          _
        // Predicated region
        $region17: #{tpu_custom_call.1} parent=11 // pred_check
          %p399 = pneg %p124
        $region18: #{tpu_custom_call.1} parent=11 // pred_check_branch
          %401 = sbr.rel (%p399) target = $region20
        $region19: #{tpu_custom_call.1} parent=11 // pred_region
          _
        $region20: #{tpu_custom_call.1} parent=11 // pred_fallthru
          _
        // Predicated region
        $region21: #{tpu_custom_call.1} parent=11 // pred_check
          %p402 = pneg %p145
        $region22: #{tpu_custom_call.1} parent=11 // pred_check_branch
          %404 = sbr.rel (%p402) target = $region24
        $region23: #{tpu_custom_call.1} parent=11 // pred_region
          _
        $region24: #{tpu_custom_call.1} parent=11 // pred_fallthru
          _
        // Predicated region
        $region25: #{tpu_custom_call.1} parent=11 // pred_check
          %p405 = pneg %p166
        $region26: #{tpu_custom_call.1} parent=11 // pred_check_branch
          %407 = sbr.rel (%p405) target = $region28
        $region27: #{tpu_custom_call.1} parent=11 // pred_region
          _
        $region28: #{tpu_custom_call.1} parent=11 // pred_fallthru
          _
        // Predicated region
        $region29: #{tpu_custom_call.1} parent=11 // pred_check
          %p408 = pneg %p187
        $region30: #{tpu_custom_call.1} parent=11 // pred_check_branch
          %410 = sbr.rel (%p408) target = $region32
        $region31: #{tpu_custom_call.1} parent=11 // pred_region
          _
        $region32: #{tpu_custom_call.1} parent=11 // pred_fallthru
          _
        // Predicated region
        $region33: #{tpu_custom_call.1} parent=11 // pred_check
          %p411 = pneg %p208
        $region34: #{tpu_custom_call.1} parent=11 // pred_check_branch
          %413 = sbr.rel (%p411) target = $region36
        $region35: #{tpu_custom_call.1} parent=11 // pred_region
          _
        $region36: #{tpu_custom_call.1} parent=11 // pred_fallthru
          _
        // Predicated region
        $region37: #{tpu_custom_call.1} parent=11 // pred_check
          %p414 = pneg %p229
        $region38: #{tpu_custom_call.1} parent=11 // pred_check_branch
          %416 = sbr.rel (%p414) target = $region40
        $region39: #{tpu_custom_call.1} parent=11 // pred_region
          _
        $region40: #{tpu_custom_call.1} parent=11 // pred_fallthru
          _
        // Predicated region
        $region41: #{tpu_custom_call.1} parent=11 // pred_check
          %p417 = pneg %p250
        $region42: #{tpu_custom_call.1} parent=11 // pred_check_branch
          %419 = sbr.rel (%p417) target = $region44
        $region43: #{tpu_custom_call.1} parent=11 // pred_region
          _
        $region44: #{tpu_custom_call.1} parent=11 // pred_fallthru
          _
        // Predicated region
        $region45: #{tpu_custom_call.1} parent=11 // pred_check
          %p420 = pneg %p271
        $region46: #{tpu_custom_call.1} parent=11 // pred_check_branch
          %422 = sbr.rel (%p420) target = $region48
        $region47: #{tpu_custom_call.1} parent=11 // pred_region
          _
        $region48: #{tpu_custom_call.1} parent=11 // pred_fallthru
          _
        // Predicated region
        $region49: #{tpu_custom_call.1} parent=11 // pred_check
          %p423 = pneg %p292
        $region50: #{tpu_custom_call.1} parent=11 // pred_check_branch
          %425 = sbr.rel (%p423) target = $region52
        $region51: #{tpu_custom_call.1} parent=11 // pred_region
          _
        $region52: #{tpu_custom_call.1} parent=11 // pred_fallthru
          _
        // Predicated region
        $region53: #{tpu_custom_call.1} parent=11 // pred_check
          %p426 = pneg %p313
        $region54: #{tpu_custom_call.1} parent=11 // pred_check_branch
          %428 = sbr.rel (%p426) target = $region56
        $region55: #{tpu_custom_call.1} parent=11 // pred_region
          _
        $region56: #{tpu_custom_call.1} parent=11 // pred_fallthru
          _
        // Predicated region
        $region57: #{tpu_custom_call.1} parent=11 // pred_check
          %p429 = pneg %p334
        $region58: #{tpu_custom_call.1} parent=11 // pred_check_branch
          %431 = sbr.rel (%p429) target = $region60
        $region59: #{tpu_custom_call.1} parent=11 // pred_region
          _
        $region60: #{tpu_custom_call.1} parent=11 // pred_fallthru
          _
        // Predicated region
        $region61: #{tpu_custom_call.1} parent=11 // pred_check
          %p432 = pneg %p355
        $region62: #{tpu_custom_call.1} parent=11 // pred_check_branch
          %434 = sbr.rel (%p432) target = $region64
        $region63: #{tpu_custom_call.1} parent=11 // pred_region
          _
        $region64: #{tpu_custom_call.1} parent=11 // pred_fallthru
          _
      $region12: #{tpu_custom_call.1} parent=5 // pred_fallthru
        _
      %p435 = scmp.lt.s32.totalorder %s30, 6
      // Predicated region
      $region65: #{tpu_custom_call.1} parent=5 // pred_check
        %p436 = pneg %p435
      $region66: #{tpu_custom_call.1} parent=5 // pred_check_branch
        %438 = sbr.rel (%p436) target = $region68
      $region67: #{tpu_custom_call.1} parent=5 // pred_region
        // Predicated region
        $region69: #{tpu_custom_call.1} parent=67 // pred_check
          %p439 = pneg %p50
        $region70: #{tpu_custom_call.1} parent=67 // pred_check_branch
          %441 = sbr.rel (%p439) target = $region72
        $region71: #{tpu_custom_call.1} parent=67 // pred_region
          %s442 = sand.u32 %s40, 1
          %s443 = scalar_lea.sflag [#allocation3], %s442
          %s444 = sand.u32 %s40, 1
          %s445 = smul.addr %s444, 32
          %s446 = scalar_lea.vmem [#allocation2], %s445
          %448 = vsyncadd %s443, 0
          %s449 = smul.addr %s30, 4
          %s450 = smul.addr %s449, 8
          %s451 = scalar_lea.hbm %s0, %s450
          %s452 = sshll.u32 %s451, 4
          %s453 = int_to_ptr.hbm [resolvable:$true] %s452
          %s454 = sshll.u32 %s446, 4
          %s455 = int_to_ptr.vmem [resolvable:$true] %s454
          %460 = dma.hbm_to_vmem [thread:$0]  %s453, 512, %s455, %s443, 128, 128, 8
        $region72: #{tpu_custom_call.1} parent=67 // pred_fallthru
          _
        // Predicated region
        $region73: #{tpu_custom_call.1} parent=67 // pred_check
          %p461 = pneg %p76
        $region74: #{tpu_custom_call.1} parent=67 // pred_check_branch
          %463 = sbr.rel (%p461) target = $region76
        $region75: #{tpu_custom_call.1} parent=67 // pred_region
          %s464 = sand.u32 %s66, 1
          %s465 = scalar_lea.sflag [#allocation6], %s464
          %s466 = sand.u32 %s66, 1
          %s467 = smul.addr %s466, 32
          %s468 = scalar_lea.vmem [#allocation5], %s467
          %470 = vsyncadd %s465, 0
          %s471 = smul.addr %s30, 4
          %s472 = smul.addr %s471, 8
          %s473 = scalar_lea.hbm %s1, %s472
          %s474 = sshll.u32 %s473, 4
          %s475 = int_to_ptr.hbm [resolvable:$true] %s474
          %s476 = sshll.u32 %s468, 4
          %s477 = int_to_ptr.vmem [resolvable:$true] %s476
          %482 = dma.hbm_to_vmem [thread:$0]  %s475, 512, %s477, %s465, 128, 128, 8
        $region76: #{tpu_custom_call.1} parent=67 // pred_fallthru
          _
      $region68: #{tpu_custom_call.1} parent=5 // pred_fallthru
        _
      %p483 = scmp.le.s32.totalorder 1, %s30
      %p484 = scmp.lt.s32.totalorder %s30, 7
      %p485 = pnand %p483, %p484
      %p486 = pneg %p485
      // Predicated region
      $region77: #{tpu_custom_call.1} parent=5 // pred_check
        _
      $region78: #{tpu_custom_call.1} parent=5 // pred_check_branch
        %488 = sbr.rel (%p485) target = $region80
      $region79: #{tpu_custom_call.1} parent=5 // pred_region
        %s489 = ssub.s32 %s30, 1
        %s490 = sand.u32 %s43, 1
        %s491 = scalar_lea.sflag [#allocation3], %s490
        %s492 = sand.u32 %s43, 1
        %s493 = smul.addr %s492, 32
        %s494 = scalar_lea.vmem [#allocation2], %s493
        // Predicated region
        $region81: #{tpu_custom_call.1} parent=79 // pred_check
          %p495 = pneg %p56
        $region82: #{tpu_custom_call.1} parent=79 // pred_check_branch
          %497 = sbr.rel (%p495) target = $region84
        $region83: #{tpu_custom_call.1} parent=79 // pred_region
          %499 = dma.done %s491, 512
        $region84: #{tpu_custom_call.1} parent=79 // pred_fallthru
          _
        %s500 = sand.u32 %s69, 1
        %s501 = scalar_lea.sflag [#allocation6], %s500
        %s502 = sand.u32 %s69, 1
        %s503 = smul.addr %s502, 32
        %s504 = scalar_lea.vmem [#allocation5], %s503
        // Predicated region
        $region85: #{tpu_custom_call.1} parent=79 // pred_check
          %p505 = pneg %p82
        $region86: #{tpu_custom_call.1} parent=79 // pred_check_branch
          %507 = sbr.rel (%p505) target = $region88
        $region87: #{tpu_custom_call.1} parent=79 // pred_region
          %509 = dma.done %s501, 512
        $region88: #{tpu_custom_call.1} parent=79 // pred_fallthru
          _
        %s510 = sand.u32 %s43, 1
        %s511 = scalar_lea.sflag [#allocation3], %s510
        %s512 = sand.u32 %s43, 1
        %s513 = smul.addr %s512, 32
        %s514 = scalar_lea.vmem [#allocation2], %s513
        %p515 = pneg %p56
        %p516 = pneg %p53
        %s517 = sand.u32 %s69, 1
        %s518 = scalar_lea.sflag [#allocation6], %s517
        %s519 = sand.u32 %s69, 1
        %s520 = smul.addr %s519, 32
        %s521 = scalar_lea.vmem [#allocation5], %s520
        %p522 = pneg %p82
        %p523 = pneg %p79
        %p524 = pneg %p103
        %p525 = pneg %p100
        %p526 = pneg %p124
        %p527 = pneg %p121
        %p528 = pneg %p145
        %p529 = pneg %p142
        %p530 = pneg %p166
        %p531 = pneg %p163
        %p532 = pneg %p187
        %p533 = pneg %p184
        %p534 = pneg %p208
        %p535 = pneg %p205
        %p536 = pneg %p229
        %p537 = pneg %p226
        %p538 = pneg %p250
        %p539 = pneg %p247
        %p540 = pneg %p271
        %p541 = pneg %p268
        %p542 = pneg %p292
        %p543 = pneg %p289
        %p544 = pneg %p313
        %p545 = pneg %p310
        %p546 = pneg %p334
        %p547 = pneg %p331
        %p548 = pneg %p355
        %p549 = pneg %p352
        %p550 = pneg %p381
        %p551 = pneg %p378
        %s552 = sand.u32 %s368, 1
        %s553 = scalar_lea.sflag [#allocation4], %s552
        %s554 = sand.u32 %s368, 1
        %s555 = smul.addr %s554, 8
        %s556 = scalar_lea.vmem [#allocation7], %s555
        %v558 = vld [vmem:[%s494] sm:$0xff]
        %v559 = vld [vmem:[%s494 + $0x8] sm:$0xff]
        %v560 = vld [vmem:[%s494 + $0x10] sm:$0xff]
        %v561 = vld [vmem:[%s494 + $0x18] sm:$0xff]
        %v562 = vld [vmem:[%s504] sm:$0xff]
        %v563 = vld [vmem:[%s504 + $0x8] sm:$0xff]
        %v564 = vld [vmem:[%s504 + $0x10] sm:$0xff]
        %v565 = vld [vmem:[%s504 + $0x18] sm:$0xff]
        %v566 = vlaneseq
        %v567 = vand.u32 %v566, 127
        %v568 = vld [vmem:[%s2] sm:$0xf]
        %v569 = vld [vmem:[%s2 + $0x4] sm:$0xf]
        %v570 = vld [vmem:[%s2 + $0x8] sm:$0xf]
        %v571 = vld [vmem:[%s2 + $0xc] sm:$0xf]
        %v572 = vmul.f32 %v558, %v558
        %v573 = vmul.f32 %v559, %v559
        %v574 = vmul.f32 %v560, %v560
        %v575 = vmul.f32 %v561, %v561
        %v576 = vmul.f32 %v562, %v562
        %v577 = vmul.f32 %v563, %v563
        %v578 = vmul.f32 %v564, %v564
        %v579 = vmul.f32 %v565, %v565
        %v580 = vmul.f32 %v558, %v562
        %v581 = vmul.f32 %v559, %v563
        %v582 = vmul.f32 %v560, %v564
        %v583 = vmul.f32 %v561, %v565
        %588 = vrot.lane.b32.xlu0 %v562, 32
        %v589 = vpop.permute.xlu0 %588
        %590 = vrot.lane.b32.xlu0 %v563, 32
        %v591 = vpop.permute.xlu0 %590
        %592 = vrot.lane.b32.xlu0 %v564, 32
        %v593 = vpop.permute.xlu0 %592
        %594 = vrot.lane.b32.xlu0 %v565, 32
        %v595 = vpop.permute.xlu0 %594
        %604 = vrot.lane.b32.xlu0 %v572, 64
        %v605 = vpop.permute.xlu0 %604
        %606 = vrot.lane.b32.xlu0 %v573, 64
        %v607 = vpop.permute.xlu0 %606
        %608 = vrot.lane.b32.xlu0 %v574, 64
        %v609 = vpop.permute.xlu0 %608
        %610 = vrot.lane.b32.xlu0 %v575, 64
        %v611 = vpop.permute.xlu0 %610
        %620 = vrot.lane.b32.xlu0 %v576, 96
        %v621 = vpop.permute.xlu0 %620
        %622 = vrot.lane.b32.xlu0 %v577, 96
        %v623 = vpop.permute.xlu0 %622
        %624 = vrot.lane.b32.xlu0 %v578, 96
        %v625 = vpop.permute.xlu0 %624
        %626 = vrot.lane.b32.xlu0 %v579, 96
        %v627 = vpop.permute.xlu0 %626
        %vm632 = vcmask 261120
        %v633 = vsel %vm632, %v558, %v589
        %v634 = vsel %vm632, %v559, %v591
        %v635 = vsel %vm632, %v560, %v593
        %v636 = vsel %vm632, %v561, %v595
        %vm637 = vcmask 523264
        %v638 = vsel %vm637, %v633, %v605
        %v639 = vsel %vm637, %v634, %v607
        %v640 = vsel %vm637, %v635, %v609
        %v641 = vsel %vm637, %v636, %v611
        %vm642 = vcmask 785408
        %v643 = vsel %vm642, %v638, %v621
        %v644 = vsel %vm642, %v639, %v623
        %v645 = vsel %vm642, %v640, %v625
        %v646 = vsel %vm642, %v641, %v627
        %v647 = vpack.c.bf16 %v644, %v643
        %v648 = vpack.c.bf16 %v581, %v580
        %v649 = vpack.c.bf16 %v646, %v645
        %v650 = vpack.c.bf16 %v583, %v582
        %v655 = vunpack.c.l.b16 %v568
        %v656 = vunpack.c.l.b16 %v569
        %v657 = vunpack.c.l.b16 %v570
        %v658 = vunpack.c.l.b16 %v571
        %v659 = vpack.c.b16 %v656, %v655
        %v660 = vpack.c.b16 %v658, %v657
        %v662 = vsel %vm632, %v659, 0
        %v665 = vsel %vm632, %v660, 0
        %667 = vmatpush.bf16.msra.mxu0 0
        %668 = vmatpush.bf16.msra.mxu0 0
        %669 = vmatpush.bf16.msra.mxu0 0
        %670 = vmatpush.bf16.msra.mxu0 0
        %671 = vmatpush.bf16.msra.mxu0 0
        %672 = vmatpush.bf16.msra.mxu0 0
        %673 = vmatpush.bf16.msra.mxu0 %v649
        %674 = vmatpush.bf16.msra.mxu0 %v647
        %675 = vmatmul.bf16.gmra.mxu0 %v662
        %v676 = vpop.f32.mrf.mxu0
        %v677 = vadd.f32 0.0, %v676
        %v678 = vpop.f32.mrf.mxu0
        %v679 = vadd.f32 0.0, %v678
        %680 = vmatmul.bf16.gmra.mxu0 %v665
        %v681 = vpop.f32.mrf.mxu0
        %v682 = vadd.f32 0.0, %v681
        %v683 = vpop.f32.mrf.mxu0
        %v684 = vadd.f32 0.0, %v683
        %685 = vdwg.mxu0
        %686 = vmatpush.bf16.msra.mxu0 0
        %687 = vmatpush.bf16.msra.mxu0 0
        %688 = vmatpush.bf16.msra.mxu0 0
        %689 = vmatpush.bf16.msra.mxu0 0
        %690 = vmatpush.bf16.msra.mxu0 0
        %691 = vmatpush.bf16.msra.mxu0 0
        %692 = vmatpush.bf16.msra.mxu0 %v650
        %693 = vmatpush.bf16.msra.mxu0 %v648
        %694 = vmatmul.bf16.gmra.mxu0 %v662
        %v695 = vpop.f32.mrf.mxu0
        %v696 = vadd.f32 0.0, %v695
        %v697 = vpop.f32.mrf.mxu0
        %v698 = vadd.f32 0.0, %v697
        %699 = vmatmul.bf16.gmra.mxu0 %v665
        %v700 = vpop.f32.mrf.mxu0
        %v701 = vadd.f32 0.0, %v700
        %v702 = vpop.f32.mrf.mxu0
        %v703 = vadd.f32 0.0, %v702
        %704 = vdwg.mxu0
        %v705 = vpack.c.bf16 %v679, %v677
        %v706 = vpack.c.bf16 %v684, %v682
        %v710 = vsel %vm632, %v705, 0
        %v713 = vsel %vm632, %v706, 0
        %715 = vmatpush.bf16.msra.mxu0 0
        %716 = vmatpush.bf16.msra.mxu0 0
        %717 = vmatpush.bf16.msra.mxu0 0
        %718 = vmatpush.bf16.msra.mxu0 0
        %719 = vmatpush.bf16.msra.mxu0 0
        %720 = vmatpush.bf16.msra.mxu0 0
        %721 = vmatpush.bf16.msra.mxu0 %v660
        %722 = vmatpush.bf16.msra.mxu0 %v659
        %723 = vmatmul.bf16.gmra.mxu0 %v710
        %v724 = vpop.f32.mrf.mxu0
        %v725 = vadd.f32 0.0, %v724
        %v726 = vpop.f32.mrf.mxu0
        %v727 = vadd.f32 0.0, %v726
        %728 = vmatmul.bf16.gmra.mxu0 %v713
        %v729 = vpop.f32.mrf.mxu0
        %v730 = vadd.f32 0.0, %v729
        %v731 = vpop.f32.mrf.mxu0
        %v732 = vadd.f32 0.0, %v731
        %733 = vdwg.mxu0
        %736 = vrot.lane.b32.xlu0 %v705, 96
        %v737 = vpop.permute.xlu0 %736
        %738 = vrot.lane.b32.xlu0 %v706, 96
        %v739 = vpop.permute.xlu0 %738
        %v741 = vsel %vm632, %v737, 0
        %v744 = vsel %vm632, %v739, 0
        %746 = vmatpush.bf16.msra.mxu0 0
        %747 = vmatpush.bf16.msra.mxu0 0
        %748 = vmatpush.bf16.msra.mxu0 0
        %749 = vmatpush.bf16.msra.mxu0 0
        %750 = vmatpush.bf16.msra.mxu0 0
        %751 = vmatpush.bf16.msra.mxu0 0
        %752 = vmatpush.bf16.msra.mxu0 %v660
        %753 = vmatpush.bf16.msra.mxu0 %v659
        %754 = vmatmul.bf16.gmra.mxu0 %v741
        %v755 = vpop.f32.mrf.mxu0
        %v756 = vadd.f32 0.0, %v755
        %v757 = vpop.f32.mrf.mxu0
        %v758 = vadd.f32 0.0, %v757
        %759 = vmatmul.bf16.gmra.mxu0 %v744
        %v760 = vpop.f32.mrf.mxu0
        %v761 = vadd.f32 0.0, %v760
        %v762 = vpop.f32.mrf.mxu0
        %v763 = vadd.f32 0.0, %v762
        %764 = vdwg.mxu0
        %765 = vrot.lane.b32.xlu0 %v705, 64
        %v766 = vpop.permute.xlu0 %765
        %767 = vrot.lane.b32.xlu0 %v706, 64
        %v768 = vpop.permute.xlu0 %767
        %v770 = vsel %vm632, %v766, 0
        %v773 = vsel %vm632, %v768, 0
        %775 = vmatpush.bf16.msra.mxu0 0
        %776 = vmatpush.bf16.msra.mxu0 0
        %777 = vmatpush.bf16.msra.mxu0 0
        %778 = vmatpush.bf16.msra.mxu0 0
        %779 = vmatpush.bf16.msra.mxu0 0
        %780 = vmatpush.bf16.msra.mxu0 0
        %781 = vmatpush.bf16.msra.mxu0 %v660
        %782 = vmatpush.bf16.msra.mxu0 %v659
        %783 = vmatmul.bf16.gmra.mxu0 %v770
        %v784 = vpop.f32.mrf.mxu0
        %v785 = vadd.f32 0.0, %v784
        %v786 = vpop.f32.mrf.mxu0
        %v787 = vadd.f32 0.0, %v786
        %788 = vmatmul.bf16.gmra.mxu0 %v773
        %v789 = vpop.f32.mrf.mxu0
        %v790 = vadd.f32 0.0, %v789
        %v791 = vpop.f32.mrf.mxu0
        %v792 = vadd.f32 0.0, %v791
        %793 = vdwg.mxu0
        %794 = vrot.lane.b32.xlu0 %v705, 32
        %v795 = vpop.permute.xlu0 %794
        %796 = vrot.lane.b32.xlu0 %v706, 32
        %v797 = vpop.permute.xlu0 %796
        %v799 = vsel %vm632, %v795, 0
        %v802 = vsel %vm632, %v797, 0
        %804 = vmatpush.bf16.msra.mxu0 0
        %805 = vmatpush.bf16.msra.mxu0 0
        %806 = vmatpush.bf16.msra.mxu0 0
        %807 = vmatpush.bf16.msra.mxu0 0
        %808 = vmatpush.bf16.msra.mxu0 0
        %809 = vmatpush.bf16.msra.mxu0 0
        %810 = vmatpush.bf16.msra.mxu0 %v660
        %811 = vmatpush.bf16.msra.mxu0 %v659
        %812 = vmatmul.bf16.gmra.mxu0 %v799
        %v813 = vpop.f32.mrf.mxu0
        %v814 = vadd.f32 0.0, %v813
        %v815 = vpop.f32.mrf.mxu0
        %v816 = vadd.f32 0.0, %v815
        %817 = vmatmul.bf16.gmra.mxu0 %v802
        %v818 = vpop.f32.mrf.mxu0
        %v819 = vadd.f32 0.0, %v818
        %v820 = vpop.f32.mrf.mxu0
        %v821 = vadd.f32 0.0, %v820
        %822 = vdwg.mxu0
        %v823 = vpack.c.bf16 %v698, %v696
        %v824 = vpack.c.bf16 %v703, %v701
        %v826 = vsel %vm632, %v823, 0
        %v829 = vsel %vm632, %v824, 0
        %831 = vmatpush.bf16.msra.mxu0 0
        %832 = vmatpush.bf16.msra.mxu0 0
        %833 = vmatpush.bf16.msra.mxu0 0
        %834 = vmatpush.bf16.msra.mxu0 0
        %835 = vmatpush.bf16.msra.mxu0 0
        %836 = vmatpush.bf16.msra.mxu0 0
        %837 = vmatpush.bf16.msra.mxu0 %v660
        %838 = vmatpush.bf16.msra.mxu0 %v659
        %839 = vmatmul.bf16.gmra.mxu0 %v826
        %v840 = vpop.f32.mrf.mxu0
        %v841 = vadd.f32 0.0, %v840
        %v842 = vpop.f32.mrf.mxu0
        %v843 = vadd.f32 0.0, %v842
        %844 = vmatmul.bf16.gmra.mxu0 %v829
        %v845 = vpop.f32.mrf.mxu0
        %v846 = vadd.f32 0.0, %v845
        %v847 = vpop.f32.mrf.mxu0
        %v848 = vadd.f32 0.0, %v847
        %849 = vdwg.mxu0
        %v850 = vmul.f32 %v725, %v725
        %v851 = vmul.f32 %v727, %v727
        %v852 = vmul.f32 %v730, %v730
        %v853 = vmul.f32 %v732, %v732
        %v854 = vmul.f32 %v756, %v756
        %v855 = vmul.f32 %v758, %v758
        %v856 = vmul.f32 %v761, %v761
        %v857 = vmul.f32 %v763, %v763
        %v858 = vmul.f32 %v725, %v756
        %v859 = vmul.f32 %v727, %v758
        %v860 = vmul.f32 %v730, %v761
        %v861 = vmul.f32 %v732, %v763
        %v862 = vsub.f32 %v785, %v850
        %v863 = vsub.f32 %v787, %v851
        %v864 = vsub.f32 %v790, %v852
        %v865 = vsub.f32 %v792, %v853
        %v866 = vsub.f32 %v814, %v854
        %v867 = vsub.f32 %v816, %v855
        %v868 = vsub.f32 %v819, %v856
        %v869 = vsub.f32 %v821, %v857
        %v870 = vsub.f32 %v841, %v858
        %v871 = vsub.f32 %v843, %v859
        %v872 = vsub.f32 %v846, %v860
        %v873 = vsub.f32 %v848, %v861
        %v874 = vmul.f32 %v870, 2.0
        %v875 = vmul.f32 %v871, 2.0
        %v876 = vmul.f32 %v872, 2.0
        %v877 = vmul.f32 %v873, 2.0
        %v878 = vadd.f32 %v874, 0.0009
        %v879 = vadd.f32 %v875, 0.0009
        %v880 = vadd.f32 %v876, 0.0009
        %v881 = vadd.f32 %v877, 0.0009
        %v882 = vadd.f32 %v862, %v866
        %v883 = vadd.f32 %v863, %v867
        %v884 = vadd.f32 %v864, %v868
        %v885 = vadd.f32 %v865, %v869
        %v886 = vadd.f32 %v882, 0.0009
        %v887 = vadd.f32 %v883, 0.0009
        %v888 = vadd.f32 %v884, 0.0009
        %v889 = vadd.f32 %v885, 0.0009
        %v890 = vrcp.pop %v886
        %v891 = vmul.f32 %v886, %v890
        %v892 = vsub.f32 1.0, %v891
        %v893 = vmul.f32 %v890, %v892
        %v894 = vadd.f32 %v890, %v893
        %vm895 = vweird.f32 %v886
        %vm896 = vweird.f32 %v890
        %vm897 = vmor %vm895, %vm896
        %v898 = vsel %vm897, %v890, %v894
        %v899 = vand.u32 2147483647, %v886
        %vm900 = vcmp.eq.f32.partialorder %v899, 8.507059e+37
        %v901 = vand.u32 %v886, 2147483648
        %v902 = vor.u32 1.1754944e-38, %v901
        %v903 = vsel %vm900, %v902, %v898
        %v904 = vmul.f32 %v878, %v903
        %v905 = vrcp.pop %v887
        %v906 = vmul.f32 %v887, %v905
        %v907 = vsub.f32 1.0, %v906
        %v908 = vmul.f32 %v905, %v907
        %v909 = vadd.f32 %v905, %v908
        %vm910 = vweird.f32 %v887
        %vm911 = vweird.f32 %v905
        %vm912 = vmor %vm910, %vm911
        %v913 = vsel %vm912, %v905, %v909
        %v914 = vand.u32 2147483647, %v887
        %vm915 = vcmp.eq.f32.partialorder %v914, 8.507059e+37
        %v916 = vand.u32 %v887, 2147483648
        %v917 = vor.u32 1.1754944e-38, %v916
        %v918 = vsel %vm915, %v917, %v913
        %v919 = vmul.f32 %v879, %v918
        %v920 = vrcp.pop %v888
        %v921 = vmul.f32 %v888, %v920
        %v922 = vsub.f32 1.0, %v921
        %v923 = vmul.f32 %v920, %v922
        %v924 = vadd.f32 %v920, %v923
        %vm925 = vweird.f32 %v888
        %vm926 = vweird.f32 %v920
        %vm927 = vmor %vm925, %vm926
        %v928 = vsel %vm927, %v920, %v924
        %v929 = vand.u32 2147483647, %v888
        %vm930 = vcmp.eq.f32.partialorder %v929, 8.507059e+37
        %v931 = vand.u32 %v888, 2147483648
        %v932 = vor.u32 1.1754944e-38, %v931
        %v933 = vsel %vm930, %v932, %v928
        %v934 = vmul.f32 %v880, %v933
        %v935 = vrcp.pop %v889
        %v936 = vmul.f32 %v889, %v935
        %v937 = vsub.f32 1.0, %v936
        %v938 = vmul.f32 %v935, %v937
        %v939 = vadd.f32 %v935, %v938
        %vm940 = vweird.f32 %v889
        %vm941 = vweird.f32 %v935
        %vm942 = vmor %vm940, %vm941
        %v943 = vsel %vm942, %v935, %v939
        %v944 = vand.u32 2147483647, %v889
        %vm945 = vcmp.eq.f32.partialorder %v944, 8.507059e+37
        %v946 = vand.u32 %v889, 2147483648
        %v947 = vor.u32 1.1754944e-38, %v946
        %v948 = vsel %vm945, %v947, %v943
        %v949 = vmul.f32 %v881, %v948
        %v950 = vsel %vm632, %v904, 0.0
        %951 = vadd.xlane.f32.xlu0 %v950
        %v952 = vpop.xlane.xlu0 %951
        %v953 = vsel %vm632, %v919, 0.0
        %954 = vadd.xlane.f32.xlu0 %v953
        %v955 = vpop.xlane.xlu0 %954
        %v956 = vsel %vm632, %v934, 0.0
        %957 = vadd.xlane.f32.xlu0 %v956
        %v958 = vpop.xlane.xlu0 %957
        %v959 = vsel %vm632, %v949, 0.0
        %960 = vadd.xlane.f32.xlu0 %v959
        %v961 = vpop.xlane.xlu0 %960
        %v962 = vadd.f32 %v952, %v955
        %v963 = vadd.f32 %v962, %v958
        %v964 = vadd.f32 %v963, %v961
        %v965 = vrot.slane %v964, 4
        %v966 = vadd.f32 %v964, %v965
        %v967 = vrot.slane %v966, 2
        %v968 = vadd.f32 %v966, %v967
        %v969 = vrot.slane %v968, 1
        %v970 = vadd.f32 %v968, %v969
        %v971 = vmul.f32 %v858, 2.0
        %v972 = vmul.f32 %v859, 2.0
        %v973 = vmul.f32 %v860, 2.0
        %v974 = vmul.f32 %v861, 2.0
        %v975 = vadd.f32 %v971, 0.0001
        %v976 = vadd.f32 %v972, 0.0001
        %v977 = vadd.f32 %v973, 0.0001
        %v978 = vadd.f32 %v974, 0.0001
        %v979 = vmul.f32 %v975, %v878
        %v980 = vmul.f32 %v976, %v879
        %v981 = vmul.f32 %v977, %v880
        %v982 = vmul.f32 %v978, %v881
        %v983 = vadd.f32 %v850, %v854
        %v984 = vadd.f32 %v851, %v855
        %v985 = vadd.f32 %v852, %v856
        %v986 = vadd.f32 %v853, %v857
        %v987 = vadd.f32 %v983, 0.0001
        %v988 = vadd.f32 %v984, 0.0001
        %v989 = vadd.f32 %v985, 0.0001
        %v990 = vadd.f32 %v986, 0.0001
        %v991 = vmul.f32 %v987, %v886
        %v992 = vmul.f32 %v988, %v887
        %v993 = vmul.f32 %v989, %v888
        %v994 = vmul.f32 %v990, %v889
        %v995 = vrcp.pop %v991
        %v996 = vmul.f32 %v991, %v995
        %v997 = vsub.f32 1.0, %v996
        %v998 = vmul.f32 %v995, %v997
        %v999 = vadd.f32 %v995, %v998
        %vm1000 = vweird.f32 %v991
        %vm1001 = vweird.f32 %v995
        %vm1002 = vmor %vm1000, %vm1001
        %v1003 = vsel %vm1002, %v995, %v999
        %v1004 = vand.u32 2147483647, %v991
        %vm1005 = vcmp.eq.f32.partialorder %v1004, 8.507059e+37
        %v1006 = vand.u32 %v991, 2147483648
        %v1007 = vor.u32 1.1754944e-38, %v1006
        %v1008 = vsel %vm1005, %v1007, %v1003
        %v1009 = vmul.f32 %v979, %v1008
        %v1010 = vrcp.pop %v992
        %v1011 = vmul.f32 %v992, %v1010
        %v1012 = vsub.f32 1.0, %v1011
        %v1013 = vmul.f32 %v1010, %v1012
        %v1014 = vadd.f32 %v1010, %v1013
        %vm1015 = vweird.f32 %v992
        %vm1016 = vweird.f32 %v1010
        %vm1017 = vmor %vm1015, %vm1016
        %v1018 = vsel %vm1017, %v1010, %v1014
        %v1019 = vand.u32 2147483647, %v992
        %vm1020 = vcmp.eq.f32.partialorder %v1019, 8.507059e+37
        %v1021 = vand.u32 %v992, 2147483648
        %v1022 = vor.u32 1.1754944e-38, %v1021
        %v1023 = vsel %vm1020, %v1022, %v1018
        %v1024 = vmul.f32 %v980, %v1023
        %v1025 = vrcp.pop %v993
        %v1026 = vmul.f32 %v993, %v1025
        %v1027 = vsub.f32 1.0, %v1026
        %v1028 = vmul.f32 %v1025, %v1027
        %v1029 = vadd.f32 %v1025, %v1028
        %vm1030 = vweird.f32 %v993
        %vm1031 = vweird.f32 %v1025
        %vm1032 = vmor %vm1030, %vm1031
        %v1033 = vsel %vm1032, %v1025, %v1029
        %v1034 = vand.u32 2147483647, %v993
        %vm1035 = vcmp.eq.f32.partialorder %v1034, 8.507059e+37
        %v1036 = vand.u32 %v993, 2147483648
        %v1037 = vor.u32 1.1754944e-38, %v1036
        %v1038 = vsel %vm1035, %v1037, %v1033
        %v1039 = vmul.f32 %v981, %v1038
        %v1040 = vrcp.pop %v994
        %v1041 = vmul.f32 %v994, %v1040
        %v1042 = vsub.f32 1.0, %v1041
        %v1043 = vmul.f32 %v1040, %v1042
        %v1044 = vadd.f32 %v1040, %v1043
        %vm1045 = vweird.f32 %v994
        %vm1046 = vweird.f32 %v1040
        %vm1047 = vmor %vm1045, %vm1046
        %v1048 = vsel %vm1047, %v1040, %v1044
        %v1049 = vand.u32 2147483647, %v994
        %vm1050 = vcmp.eq.f32.partialorder %v1049, 8.507059e+37
        %v1051 = vand.u32 %v994, 2147483648
        %v1052 = vor.u32 1.1754944e-38, %v1051
        %v1053 = vsel %vm1050, %v1052, %v1048
        %v1054 = vmul.f32 %v982, %v1053
        %v1055 = vsel %vm632, %v1009, 0.0
        %1056 = vadd.xlane.f32.xlu0 %v1055
        %v1057 = vpop.xlane.xlu0 %1056
        %v1058 = vsel %vm632, %v1024, 0.0
        %1059 = vadd.xlane.f32.xlu0 %v1058
        %v1060 = vpop.xlane.xlu0 %1059
        %v1061 = vsel %vm632, %v1039, 0.0
        %1062 = vadd.xlane.f32.xlu0 %v1061
        %v1063 = vpop.xlane.xlu0 %1062
        %v1064 = vsel %vm632, %v1054, 0.0
        %1065 = vadd.xlane.f32.xlu0 %v1064
        %v1066 = vpop.xlane.xlu0 %1065
        %v1067 = vadd.f32 %v1057, %v1060
        %v1068 = vadd.f32 %v1067, %v1063
        %v1069 = vadd.f32 %v1068, %v1066
        %v1070 = vrot.slane %v1069, 4
        %v1071 = vadd.f32 %v1069, %v1070
        %v1072 = vrot.slane %v1071, 2
        %v1073 = vadd.f32 %v1071, %v1072
        %v1074 = vrot.slane %v1073, 1
        %v1075 = vadd.f32 %v1073, %v1074
        %vm1076 = vcmp.eq.s32.totalorder %v567, 0
        %v1077 = vsel %vm1076, %v970, 0.0
        %v1078 = vadd.f32 %v1077, 0.0
        %vm1079 = vcmp.eq.s32.totalorder %v567, 1
        %v1080 = vsel %vm1079, %v1075, 0.0
        %v1081 = vadd.f32 %v1078, %v1080
        %v1082 = vld [vmem:[%s7] sm:$0xff]
        %v1083 = vld [vmem:[%s7 + $0x8] sm:$0xff]
        %v1084 = vld [vmem:[%s11] sm:$0xff]
        %v1085 = vld [vmem:[%s11 + $0x8] sm:$0xff]
        %v1086 = vld [vmem:[%s11 + $0x10] sm:$0xff]
        %v1087 = vld [vmem:[%s11 + $0x18] sm:$0xff]
        %v1089 = vsel %vm632, %v1082, 0
        %v1092 = vsel %vm632, %v1083, 0
        %1094 = vmatpush.msra.mxu0 0.0
        %1095 = vmatpush.msra.mxu0 0.0
        %1096 = vmatpush.msra.mxu0 0.0
        %1097 = vmatpush.msra.mxu0 0.0
        %1098 = vmatpush.msra.mxu0 0.0
        %1099 = vmatpush.msra.mxu0 0.0
        %1100 = vmatpush.msra.mxu0 0.0
        %1101 = vmatpush.msra.mxu0 0.0
        %1102 = vmatpush.msra.mxu0 0.0
        %1103 = vmatpush.msra.mxu0 0.0
        %1104 = vmatpush.msra.mxu0 0.0
        %1105 = vmatpush.msra.mxu0 0.0
        %1106 = vmatpush.msra.mxu0 %v561
        %1107 = vmatpush.msra.mxu0 %v560
        %1108 = vmatpush.msra.mxu0 %v559
        %1109 = vmatpush.msra.mxu0 %v558
        %1110 = vmatmul.f32.gmra.mxu0 %v1089
        %v1111 = vpop.f32.mrf.mxu0
        %v1112 = vadd.f32 0.0, %v1111
        %1113 = vmatmul.f32.gmra.mxu0 %v1092
        %v1114 = vpop.f32.mrf.mxu0
        %v1115 = vadd.f32 0.0, %v1114
        %1116 = vdwg.mxu0
        %v1118 = vsel %vm632, %v1112, 0
        %v1121 = vsel %vm632, %v1115, 0
        %1123 = vmatpush.msra.mxu0 0.0
        %1124 = vmatpush.msra.mxu0 0.0
        %1125 = vmatpush.msra.mxu0 0.0
        %1126 = vmatpush.msra.mxu0 0.0
        %1127 = vmatpush.msra.mxu0 0.0
        %1128 = vmatpush.msra.mxu0 0.0
        %1129 = vmatpush.msra.mxu0 0.0
        %1130 = vmatpush.msra.mxu0 0.0
        %1131 = vmatpush.msra.mxu0 0.0
        %1132 = vmatpush.msra.mxu0 0.0
        %1133 = vmatpush.msra.mxu0 0.0
        %1134 = vmatpush.msra.mxu0 0.0
        %1135 = vmatpush.msra.mxu0 %v1087
        %1136 = vmatpush.msra.mxu0 %v1086
        %1137 = vmatpush.msra.mxu0 %v1085
        %1138 = vmatpush.msra.mxu0 %v1084
        %1139 = vmatmul.f32.gmra.mxu0 %v1118
        %v1140 = vpop.f32.mrf.mxu0
        %v1141 = vadd.f32 0.0, %v1140
        %1142 = vmatmul.f32.gmra.mxu0 %v1121
        %v1143 = vpop.f32.mrf.mxu0
        %v1144 = vadd.f32 0.0, %v1143
        %1145 = vdwg.mxu0
        %1146 = vmatpush.msra.mxu0 0.0
        %1147 = vmatpush.msra.mxu0 0.0
        %1148 = vmatpush.msra.mxu0 0.0
        %1149 = vmatpush.msra.mxu0 0.0
        %1150 = vmatpush.msra.mxu0 0.0
        %1151 = vmatpush.msra.mxu0 0.0
        %1152 = vmatpush.msra.mxu0 0.0
        %1153 = vmatpush.msra.mxu0 0.0
        %1154 = vmatpush.msra.mxu0 0.0
        %1155 = vmatpush.msra.mxu0 0.0
        %1156 = vmatpush.msra.mxu0 0.0
        %1157 = vmatpush.msra.mxu0 0.0
        %1158 = vmatpush.msra.mxu0 %v565
        %1159 = vmatpush.msra.mxu0 %v564
        %1160 = vmatpush.msra.mxu0 %v563
        %1161 = vmatpush.msra.mxu0 %v562
        %1162 = vmatmul.f32.gmra.mxu0 %v1089
        %v1163 = vpop.f32.mrf.mxu0
        %v1164 = vadd.f32 0.0, %v1163
        %1165 = vmatmul.f32.gmra.mxu0 %v1092
        %v1166 = vpop.f32.mrf.mxu0
        %v1167 = vadd.f32 0.0, %v1166
        %1168 = vdwg.mxu0
        %v1170 = vsel %vm632, %v1164, 0
        %v1173 = vsel %vm632, %v1167, 0
        %1175 = vmatpush.msra.mxu0 0.0
        %1176 = vmatpush.msra.mxu0 0.0
        %1177 = vmatpush.msra.mxu0 0.0
        %1178 = vmatpush.msra.mxu0 0.0
        %1179 = vmatpush.msra.mxu0 0.0
        %1180 = vmatpush.msra.mxu0 0.0
        %1181 = vmatpush.msra.mxu0 0.0
        %1182 = vmatpush.msra.mxu0 0.0
        %1183 = vmatpush.msra.mxu0 0.0
        %1184 = vmatpush.msra.mxu0 0.0
        %1185 = vmatpush.msra.mxu0 0.0
        %1186 = vmatpush.msra.mxu0 0.0
        %1187 = vmatpush.msra.mxu0 %v1087
        %1188 = vmatpush.msra.mxu0 %v1086
        %1189 = vmatpush.msra.mxu0 %v1085
        %1190 = vmatpush.msra.mxu0 %v1084
        %1191 = vmatmul.f32.gmra.mxu0 %v1170
        %v1192 = vpop.f32.mrf.mxu0
        %v1193 = vadd.f32 0.0, %v1192
        %1194 = vmatmul.f32.gmra.mxu0 %v1173
        %v1195 = vpop.f32.mrf.mxu0
        %v1196 = vadd.f32 0.0, %v1195
        %1197 = vdwg.mxu0
        %v1198 = vld [vmem:[%s3] sm:$0xf]
        %v1199 = vld [vmem:[%s3 + $0x4] sm:$0xf]
        %v1200 = vmul.f32 %v1141, %v1141
        %v1201 = vmul.f32 %v1144, %v1144
        %v1202 = vmul.f32 %v1193, %v1193
        %v1203 = vmul.f32 %v1196, %v1196
        %v1204 = vmul.f32 %v1141, %v1193
        %v1205 = vmul.f32 %v1144, %v1196
        %1208 = vrot.lane.b32.xlu0 %v1193, 16
        %v1209 = vpop.permute.xlu0 %1208
        %1210 = vrot.lane.b32.xlu0 %v1196, 16
        %v1211 = vpop.permute.xlu0 %1210
        %1216 = vrot.lane.b32.xlu0 %v1200, 32
        %v1217 = vpop.permute.xlu0 %1216
        %1218 = vrot.lane.b32.xlu0 %v1201, 32
        %v1219 = vpop.permute.xlu0 %1218
        %1224 = vrot.lane.b32.xlu0 %v1202, 48
        %v1225 = vpop.permute.xlu0 %1224
        %1226 = vrot.lane.b32.xlu0 %v1203, 48
        %v1227 = vpop.permute.xlu0 %1226
        %1232 = vrot.lane.b32.xlu0 %v1204, 64
        %v1233 = vpop.permute.xlu0 %1232
        %1234 = vrot.lane.b32.xlu0 %v1205, 64
        %v1235 = vpop.permute.xlu0 %1234
        %vm1238 = vcmask 130048
        %v1239 = vsel %vm1238, %v1141, %v1209
        %v1240 = vsel %vm1238, %v1144, %v1211
        %v1241 = vsel %vm632, %v1239, %v1217
        %v1242 = vsel %vm632, %v1240, %v1219
        %vm1243 = vcmask 392192
        %v1244 = vsel %vm1243, %v1241, %v1225
        %v1245 = vsel %vm1243, %v1242, %v1227
        %v1246 = vsel %vm637, %v1244, %v1233
        %v1247 = vsel %vm637, %v1245, %v1235
        %v1248 = vpack.c.bf16 %v1247, %v1246
        %v1251 = vunpack.c.l.b16 %v1198
        %v1252 = vunpack.c.l.b16 %v1199
        %v1253 = vpack.c.b16 %v1252, %v1251
        %v1255 = vsel %vm1238, %v1253, 0
        %1257 = vmatpush.bf16.msra.mxu0 0
        %1258 = vmatpush.bf16.msra.mxu0 0
        %1259 = vmatpush.bf16.msra.mxu0 0
        %1260 = vmatpush.bf16.msra.mxu0 0
        %1261 = vmatpush.bf16.msra.mxu0 0
        %1262 = vmatpush.bf16.msra.mxu0 0
        %1263 = vmatpush.bf16.msra.mxu0 0
        %1264 = vmatpush.bf16.msra.mxu0 %v1248
        %1265 = vmatmul.bf16.gmra.mxu0 %v1255
        %v1266 = vpop.f32.mrf.mxu0
        %v1267 = vadd.f32 0.0, %v1266
        %v1268 = vpop.f32.mrf.mxu0
        %v1269 = vadd.f32 0.0, %v1268
        %1270 = vdwg.mxu0
        %v1271 = vpack.c.bf16 %v1269, %v1267
        %v1274 = vsel %vm1238, %v1271, 0
        %1276 = vmatpush.bf16.msra.mxu0 0
        %1277 = vmatpush.bf16.msra.mxu0 0
        %1278 = vmatpush.bf16.msra.mxu0 0
        %1279 = vmatpush.bf16.msra.mxu0 0
        %1280 = vmatpush.bf16.msra.mxu0 0
        %1281 = vmatpush.bf16.msra.mxu0 0
        %1282 = vmatpush.bf16.msra.mxu0 0
        %1283 = vmatpush.bf16.msra.mxu0 %v1253
        %1284 = vmatmul.bf16.gmra.mxu0 %v1274
        %v1285 = vpop.f32.mrf.mxu0
        %v1286 = vadd.f32 0.0, %v1285
        %v1287 = vpop.f32.mrf.mxu0
        %v1288 = vadd.f32 0.0, %v1287
        %1289 = vdwg.mxu0
        %1291 = vrot.lane.b32.xlu0 %v1271, 112
        %v1292 = vpop.permute.xlu0 %1291
        %v1294 = vsel %vm1238, %v1292, 0
        %1296 = vmatpush.bf16.msra.mxu0 0
        %1297 = vmatpush.bf16.msra.mxu0 0
        %1298 = vmatpush.bf16.msra.mxu0 0
        %1299 = vmatpush.bf16.msra.mxu0 0
        %1300 = vmatpush.bf16.msra.mxu0 0
        %1301 = vmatpush.bf16.msra.mxu0 0
        %1302 = vmatpush.bf16.msra.mxu0 0
        %1303 = vmatpush.bf16.msra.mxu0 %v1253
        %1304 = vmatmul.bf16.gmra.mxu0 %v1294
        %v1305 = vpop.f32.mrf.mxu0
        %v1306 = vadd.f32 0.0, %v1305
        %v1307 = vpop.f32.mrf.mxu0
        %v1308 = vadd.f32 0.0, %v1307
        %1309 = vdwg.mxu0
        %1310 = vrot.lane.b32.xlu0 %v1271, 96
        %v1311 = vpop.permute.xlu0 %1310
        %v1313 = vsel %vm1238, %v1311, 0
        %1315 = vmatpush.bf16.msra.mxu0 0
        %1316 = vmatpush.bf16.msra.mxu0 0
        %1317 = vmatpush.bf16.msra.mxu0 0
        %1318 = vmatpush.bf16.msra.mxu0 0
        %1319 = vmatpush.bf16.msra.mxu0 0
        %1320 = vmatpush.bf16.msra.mxu0 0
        %1321 = vmatpush.bf16.msra.mxu0 0
        %1322 = vmatpush.bf16.msra.mxu0 %v1253
        %1323 = vmatmul.bf16.gmra.mxu0 %v1313
        %v1324 = vpop.f32.mrf.mxu0
        %v1325 = vadd.f32 0.0, %v1324
        %v1326 = vpop.f32.mrf.mxu0
        %v1327 = vadd.f32 0.0, %v1326
        %1328 = vdwg.mxu0
        %1329 = vrot.lane.b32.xlu0 %v1271, 80
        %v1330 = vpop.permute.xlu0 %1329
        %v1332 = vsel %vm1238, %v1330, 0
        %1334 = vmatpush.bf16.msra.mxu0 0
        %1335 = vmatpush.bf16.msra.mxu0 0
        %1336 = vmatpush.bf16.msra.mxu0 0
        %1337 = vmatpush.bf16.msra.mxu0 0
        %1338 = vmatpush.bf16.msra.mxu0 0
        %1339 = vmatpush.bf16.msra.mxu0 0
        %1340 = vmatpush.bf16.msra.mxu0 0
        %1341 = vmatpush.bf16.msra.mxu0 %v1253
        %1342 = vmatmul.bf16.gmra.mxu0 %v1332
        %v1343 = vpop.f32.mrf.mxu0
        %v1344 = vadd.f32 0.0, %v1343
        %v1345 = vpop.f32.mrf.mxu0
        %v1346 = vadd.f32 0.0, %v1345
        %1347 = vdwg.mxu0
        %1348 = vrot.lane.b32.xlu0 %v1271, 64
        %v1349 = vpop.permute.xlu0 %1348
        %v1351 = vsel %vm1238, %v1349, 0
        %1353 = vmatpush.bf16.msra.mxu0 0
        %1354 = vmatpush.bf16.msra.mxu0 0
        %1355 = vmatpush.bf16.msra.mxu0 0
        %1356 = vmatpush.bf16.msra.mxu0 0
        %1357 = vmatpush.bf16.msra.mxu0 0
        %1358 = vmatpush.bf16.msra.mxu0 0
        %1359 = vmatpush.bf16.msra.mxu0 0
        %1360 = vmatpush.bf16.msra.mxu0 %v1253
        %1361 = vmatmul.bf16.gmra.mxu0 %v1351
        %v1362 = vpop.f32.mrf.mxu0
        %v1363 = vadd.f32 0.0, %v1362
        %v1364 = vpop.f32.mrf.mxu0
        %v1365 = vadd.f32 0.0, %v1364
        %1366 = vdwg.mxu0
        %v1367 = vmul.f32 %v1286, %v1286
        %v1368 = vmul.f32 %v1288, %v1288
        %v1369 = vmul.f32 %v1306, %v1306
        %v1370 = vmul.f32 %v1308, %v1308
        %v1371 = vmul.f32 %v1286, %v1306
        %v1372 = vmul.f32 %v1288, %v1308
        %v1373 = vsub.f32 %v1325, %v1367
        %v1374 = vsub.f32 %v1327, %v1368
        %v1375 = vsub.f32 %v1344, %v1369
        %v1376 = vsub.f32 %v1346, %v1370
        %v1377 = vsub.f32 %v1363, %v1371
        %v1378 = vsub.f32 %v1365, %v1372
        %v1379 = vmul.f32 %v1377, 2.0
        %v1380 = vmul.f32 %v1378, 2.0
        %v1381 = vadd.f32 %v1379, 0.0009
        %v1382 = vadd.f32 %v1380, 0.0009
        %v1383 = vadd.f32 %v1373, %v1375
        %v1384 = vadd.f32 %v1374, %v1376
        %v1385 = vadd.f32 %v1383, 0.0009
        %v1386 = vadd.f32 %v1384, 0.0009
        %v1387 = vrcp.pop %v1385
        %v1388 = vmul.f32 %v1385, %v1387
        %v1389 = vsub.f32 1.0, %v1388
        %v1390 = vmul.f32 %v1387, %v1389
        %v1391 = vadd.f32 %v1387, %v1390
        %vm1392 = vweird.f32 %v1385
        %vm1393 = vweird.f32 %v1387
        %vm1394 = vmor %vm1392, %vm1393
        %v1395 = vsel %vm1394, %v1387, %v1391
        %v1396 = vand.u32 2147483647, %v1385
        %vm1397 = vcmp.eq.f32.partialorder %v1396, 8.507059e+37
        %v1398 = vand.u32 %v1385, 2147483648
        %v1399 = vor.u32 1.1754944e-38, %v1398
        %v1400 = vsel %vm1397, %v1399, %v1395
        %v1401 = vmul.f32 %v1381, %v1400
        %v1402 = vrcp.pop %v1386
        %v1403 = vmul.f32 %v1386, %v1402
        %v1404 = vsub.f32 1.0, %v1403
        %v1405 = vmul.f32 %v1402, %v1404
        %v1406 = vadd.f32 %v1402, %v1405
        %vm1407 = vweird.f32 %v1386
        %vm1408 = vweird.f32 %v1402
        %vm1409 = vmor %vm1407, %vm1408
        %v1410 = vsel %vm1409, %v1402, %v1406
        %v1411 = vand.u32 2147483647, %v1386
        %vm1412 = vcmp.eq.f32.partialorder %v1411, 8.507059e+37
        %v1413 = vand.u32 %v1386, 2147483648
        %v1414 = vor.u32 1.1754944e-38, %v1413
        %v1415 = vsel %vm1412, %v1414, %v1410
        %v1416 = vmul.f32 %v1382, %v1415
        %v1417 = vsel %vm1238, %v1401, 0.0
        %1418 = vadd.xlane.f32.xlu0 %v1417
        %v1419 = vpop.xlane.xlu0 %1418
        %v1420 = vsel %vm1238, %v1416, 0.0
        %1421 = vadd.xlane.f32.xlu0 %v1420
        %v1422 = vpop.xlane.xlu0 %1421
        %v1423 = vadd.f32 %v1419, %v1422
        %v1424 = vrot.slane %v1423, 4
        %v1425 = vadd.f32 %v1423, %v1424
        %v1426 = vrot.slane %v1425, 2
        %v1427 = vadd.f32 %v1425, %v1426
        %v1428 = vrot.slane %v1427, 1
        %v1429 = vadd.f32 %v1427, %v1428
        %v1430 = vmul.f32 %v1371, 2.0
        %v1431 = vmul.f32 %v1372, 2.0
        %v1432 = vadd.f32 %v1430, 0.0001
        %v1433 = vadd.f32 %v1431, 0.0001
        %v1434 = vmul.f32 %v1432, %v1381
        %v1435 = vmul.f32 %v1433, %v1382
        %v1436 = vadd.f32 %v1367, %v1369
        %v1437 = vadd.f32 %v1368, %v1370
        %v1438 = vadd.f32 %v1436, 0.0001
        %v1439 = vadd.f32 %v1437, 0.0001
        %v1440 = vmul.f32 %v1438, %v1385
        %v1441 = vmul.f32 %v1439, %v1386
        %v1442 = vrcp.pop %v1440
        %v1443 = vmul.f32 %v1440, %v1442
        %v1444 = vsub.f32 1.0, %v1443
        %v1445 = vmul.f32 %v1442, %v1444
        %v1446 = vadd.f32 %v1442, %v1445
        %vm1447 = vweird.f32 %v1440
        %vm1448 = vweird.f32 %v1442
        %vm1449 = vmor %vm1447, %vm1448
        %v1450 = vsel %vm1449, %v1442, %v1446
        %v1451 = vand.u32 2147483647, %v1440
        %vm1452 = vcmp.eq.f32.partialorder %v1451, 8.507059e+37
        %v1453 = vand.u32 %v1440, 2147483648
        %v1454 = vor.u32 1.1754944e-38, %v1453
        %v1455 = vsel %vm1452, %v1454, %v1450
        %v1456 = vmul.f32 %v1434, %v1455
        %v1457 = vrcp.pop %v1441
        %v1458 = vmul.f32 %v1441, %v1457
        %v1459 = vsub.f32 1.0, %v1458
        %v1460 = vmul.f32 %v1457, %v1459
        %v1461 = vadd.f32 %v1457, %v1460
        %vm1462 = vweird.f32 %v1441
        %vm1463 = vweird.f32 %v1457
        %vm1464 = vmor %vm1462, %vm1463
        %v1465 = vsel %vm1464, %v1457, %v1461
        %v1466 = vand.u32 2147483647, %v1441
        %vm1467 = vcmp.eq.f32.partialorder %v1466, 8.507059e+37
        %v1468 = vand.u32 %v1441, 2147483648
        %v1469 = vor.u32 1.1754944e-38, %v1468
        %v1470 = vsel %vm1467, %v1469, %v1465
        %v1471 = vmul.f32 %v1435, %v1470
        %v1472 = vsel %vm1238, %v1456, 0.0
        %1473 = vadd.xlane.f32.xlu0 %v1472
        %v1474 = vpop.xlane.xlu0 %1473
        %v1475 = vsel %vm1238, %v1471, 0.0
        %1476 = vadd.xlane.f32.xlu0 %v1475
        %v1477 = vpop.xlane.xlu0 %1476
        %v1478 = vadd.f32 %v1474, %v1477
        %v1479 = vrot.slane %v1478, 4
        %v1480 = vadd.f32 %v1478, %v1479
        %v1481 = vrot.slane %v1480, 2
        %v1482 = vadd.f32 %v1480, %v1481
        %v1483 = vrot.slane %v1482, 1
        %v1484 = vadd.f32 %v1482, %v1483
        %vm1485 = vcmp.eq.s32.totalorder %v567, 2
        %v1486 = vsel %vm1485, %v1429, 0.0
        %v1487 = vadd.f32 %v1081, %v1486
        %vm1488 = vcmp.eq.s32.totalorder %v567, 3
        %v1489 = vsel %vm1488, %v1484, 0.0
        %v1490 = vadd.f32 %v1487, %v1489
        %v1491 = vld [vmem:[%s8] sm:$0xff]
        %v1492 = vld [vmem:[%s12] sm:$0xff]
        %v1493 = vld [vmem:[%s12 + $0x8] sm:$0xff]
        %v1495 = vsel %vm1238, %v1491, 0
        %1497 = vmatpush.msra.mxu0 0.0
        %1498 = vmatpush.msra.mxu0 0.0
        %1499 = vmatpush.msra.mxu0 0.0
        %1500 = vmatpush.msra.mxu0 0.0
        %1501 = vmatpush.msra.mxu0 0.0
        %1502 = vmatpush.msra.mxu0 0.0
        %1503 = vmatpush.msra.mxu0 0.0
        %1504 = vmatpush.msra.mxu0 0.0
        %1505 = vmatpush.msra.mxu0 0.0
        %1506 = vmatpush.msra.mxu0 0.0
        %1507 = vmatpush.msra.mxu0 0.0
        %1508 = vmatpush.msra.mxu0 0.0
        %1509 = vmatpush.msra.mxu0 0.0
        %1510 = vmatpush.msra.mxu0 0.0
        %1511 = vmatpush.msra.mxu0 %v1144
        %1512 = vmatpush.msra.mxu0 %v1141
        %1513 = vmatmul.f32.gmra.mxu0 %v1495
        %v1514 = vpop.f32.mrf.mxu0
        %v1515 = vadd.f32 0.0, %v1514
        %1516 = vdwg.mxu0
        %v1518 = vsel %vm1238, %v1515, 0
        %1520 = vmatpush.msra.mxu0 0.0
        %1521 = vmatpush.msra.mxu0 0.0
        %1522 = vmatpush.msra.mxu0 0.0
        %1523 = vmatpush.msra.mxu0 0.0
        %1524 = vmatpush.msra.mxu0 0.0
        %1525 = vmatpush.msra.mxu0 0.0
        %1526 = vmatpush.msra.mxu0 0.0
        %1527 = vmatpush.msra.mxu0 0.0
        %1528 = vmatpush.msra.mxu0 0.0
        %1529 = vmatpush.msra.mxu0 0.0
        %1530 = vmatpush.msra.mxu0 0.0
        %1531 = vmatpush.msra.mxu0 0.0
        %1532 = vmatpush.msra.mxu0 0.0
        %1533 = vmatpush.msra.mxu0 0.0
        %1534 = vmatpush.msra.mxu0 %v1493
        %1535 = vmatpush.msra.mxu0 %v1492
        %1536 = vmatmul.f32.gmra.mxu0 %v1518
        %v1537 = vpop.f32.mrf.mxu0
        %v1538 = vadd.f32 0.0, %v1537
        %1539 = vdwg.mxu0
        %1540 = vmatpush.msra.mxu0 0.0
        %1541 = vmatpush.msra.mxu0 0.0
        %1542 = vmatpush.msra.mxu0 0.0
        %1543 = vmatpush.msra.mxu0 0.0
        %1544 = vmatpush.msra.mxu0 0.0
        %1545 = vmatpush.msra.mxu0 0.0
        %1546 = vmatpush.msra.mxu0 0.0
        %1547 = vmatpush.msra.mxu0 0.0
        %1548 = vmatpush.msra.mxu0 0.0
        %1549 = vmatpush.msra.mxu0 0.0
        %1550 = vmatpush.msra.mxu0 0.0
        %1551 = vmatpush.msra.mxu0 0.0
        %1552 = vmatpush.msra.mxu0 0.0
        %1553 = vmatpush.msra.mxu0 0.0
        %1554 = vmatpush.msra.mxu0 %v1196
        %1555 = vmatpush.msra.mxu0 %v1193
        %1556 = vmatmul.f32.gmra.mxu0 %v1495
        %v1557 = vpop.f32.mrf.mxu0
        %v1558 = vadd.f32 0.0, %v1557
        %1559 = vdwg.mxu0
        %v1561 = vsel %vm1238, %v1558, 0
        %1563 = vmatpush.msra.mxu0 0.0
        %1564 = vmatpush.msra.mxu0 0.0
        %1565 = vmatpush.msra.mxu0 0.0
        %1566 = vmatpush.msra.mxu0 0.0
        %1567 = vmatpush.msra.mxu0 0.0
        %1568 = vmatpush.msra.mxu0 0.0
        %1569 = vmatpush.msra.mxu0 0.0
        %1570 = vmatpush.msra.mxu0 0.0
        %1571 = vmatpush.msra.mxu0 0.0
        %1572 = vmatpush.msra.mxu0 0.0
        %1573 = vmatpush.msra.mxu0 0.0
        %1574 = vmatpush.msra.mxu0 0.0
        %1575 = vmatpush.msra.mxu0 0.0
        %1576 = vmatpush.msra.mxu0 0.0
        %1577 = vmatpush.msra.mxu0 %v1493
        %1578 = vmatpush.msra.mxu0 %v1492
        %1579 = vmatmul.f32.gmra.mxu0 %v1561
        %v1580 = vpop.f32.mrf.mxu0
        %v1581 = vadd.f32 0.0, %v1580
        %1582 = vdwg.mxu0
        %v1583 = vld [vmem:[%s4] sm:$0xf]
        %v1584 = vmul.f32 %v1538, %v1538
        %v1585 = vmul.f32 %v1581, %v1581
        %v1586 = vmul.f32 %v1538, %v1581
        %1588 = vrot.lane.b32.xlu0 %v1581, 8
        %v1589 = vpop.permute.xlu0 %1588
        %1592 = vrot.lane.b32.xlu0 %v1584, 16
        %v1593 = vpop.permute.xlu0 %1592
        %1596 = vrot.lane.b32.xlu0 %v1585, 24
        %v1597 = vpop.permute.xlu0 %1596
        %1600 = vrot.lane.b32.xlu0 %v1586, 32
        %v1601 = vpop.permute.xlu0 %1600
        %vm1603 = vcmask 64512
        %v1604 = vsel %vm1603, %v1538, %v1589
        %v1605 = vsel %vm1238, %v1604, %v1593
        %vm1606 = vcmask 195584
        %v1607 = vsel %vm1606, %v1605, %v1597
        %v1608 = vsel %vm632, %v1607, %v1601
        %v1609 = vpack.c.bf16 %v1608, %v1608
        %v1611 = vsel %vm1603, %v1583, 0
        %vm1613 = vcmask 1043456
        %v1615 = vsel %vm1613, %v1609, 0
        %1617 = vmatpush.bf16.msra.mxu0 0
        %1618 = vmatpush.bf16.msra.mxu0 0
        %1619 = vmatpush.bf16.msra.mxu0 0
        %1620 = vmatpush.bf16.msra.mxu0 0
        %1621 = vmatpush.bf16.msra.mxu0 0
        %1622 = vmatpush.bf16.msra.mxu0 0
        %1623 = vmatpush.bf16.msra.mxu0 0
        %1624 = vmatpush.bf16.msra.mxu0 %v1615
        %1625 = vmatmul.bf16.gmra.mxu0 %v1611
        %v1626 = vpop.f32.mrf.mxu0
        %v1627 = vadd.f32 0.0, %v1626
        %v1628 = vpop.f32.mrf.mxu0
        %1629 = vdwg.mxu0
        %v1630 = vpack.c.bf16 %v1627, %v1627
        %v1632 = vsel %vm1603, %v1630, 0
        %v1634 = vsel %vm1613, %v1583, 0
        %1636 = vmatpush.bf16.msra.mxu0 0
        %1637 = vmatpush.bf16.msra.mxu0 0
        %1638 = vmatpush.bf16.msra.mxu0 0
        %1639 = vmatpush.bf16.msra.mxu0 0
        %1640 = vmatpush.bf16.msra.mxu0 0
        %1641 = vmatpush.bf16.msra.mxu0 0
        %1642 = vmatpush.bf16.msra.mxu0 0
        %1643 = vmatpush.bf16.msra.mxu0 %v1634
        %1644 = vmatmul.bf16.gmra.mxu0 %v1632
        %v1645 = vpop.f32.mrf.mxu0
        %v1646 = vadd.f32 0.0, %v1645
        %v1647 = vpop.f32.mrf.mxu0
        %1648 = vdwg.mxu0
        %1650 = vrot.lane.b32.xlu0 %v1630, 120
        %v1651 = vpop.permute.xlu0 %1650
        %v1653 = vsel %vm1603, %v1651, 0
        %1655 = vmatpush.bf16.msra.mxu0 0
        %1656 = vmatpush.bf16.msra.mxu0 0
        %1657 = vmatpush.bf16.msra.mxu0 0
        %1658 = vmatpush.bf16.msra.mxu0 0
        %1659 = vmatpush.bf16.msra.mxu0 0
        %1660 = vmatpush.bf16.msra.mxu0 0
        %1661 = vmatpush.bf16.msra.mxu0 0
        %1662 = vmatpush.bf16.msra.mxu0 %v1634
        %1663 = vmatmul.bf16.gmra.mxu0 %v1653
        %v1664 = vpop.f32.mrf.mxu0
        %v1665 = vadd.f32 0.0, %v1664
        %v1666 = vpop.f32.mrf.mxu0
        %1667 = vdwg.mxu0
        %1668 = vrot.lane.b32.xlu0 %v1630, 112
        %v1669 = vpop.permute.xlu0 %1668
        %v1671 = vsel %vm1603, %v1669, 0
        %1673 = vmatpush.bf16.msra.mxu0 0
        %1674 = vmatpush.bf16.msra.mxu0 0
        %1675 = vmatpush.bf16.msra.mxu0 0
        %1676 = vmatpush.bf16.msra.mxu0 0
        %1677 = vmatpush.bf16.msra.mxu0 0
        %1678 = vmatpush.bf16.msra.mxu0 0
        %1679 = vmatpush.bf16.msra.mxu0 0
        %1680 = vmatpush.bf16.msra.mxu0 %v1634
        %1681 = vmatmul.bf16.gmra.mxu0 %v1671
        %v1682 = vpop.f32.mrf.mxu0
        %v1683 = vadd.f32 0.0, %v1682
        %v1684 = vpop.f32.mrf.mxu0
        %1685 = vdwg.mxu0
        %1686 = vrot.lane.b32.xlu0 %v1630, 104
        %v1687 = vpop.permute.xlu0 %1686
        %v1689 = vsel %vm1603, %v1687, 0
        %1691 = vmatpush.bf16.msra.mxu0 0
        %1692 = vmatpush.bf16.msra.mxu0 0
        %1693 = vmatpush.bf16.msra.mxu0 0
        %1694 = vmatpush.bf16.msra.mxu0 0
        %1695 = vmatpush.bf16.msra.mxu0 0
        %1696 = vmatpush.bf16.msra.mxu0 0
        %1697 = vmatpush.bf16.msra.mxu0 0
        %1698 = vmatpush.bf16.msra.mxu0 %v1634
        %1699 = vmatmul.bf16.gmra.mxu0 %v1689
        %v1700 = vpop.f32.mrf.mxu0
        %v1701 = vadd.f32 0.0, %v1700
        %v1702 = vpop.f32.mrf.mxu0
        %1703 = vdwg.mxu0
        %1704 = vrot.lane.b32.xlu0 %v1630, 96
        %v1705 = vpop.permute.xlu0 %1704
        %v1707 = vsel %vm1603, %v1705, 0
        %1709 = vmatpush.bf16.msra.mxu0 0
        %1710 = vmatpush.bf16.msra.mxu0 0
        %1711 = vmatpush.bf16.msra.mxu0 0
        %1712 = vmatpush.bf16.msra.mxu0 0
        %1713 = vmatpush.bf16.msra.mxu0 0
        %1714 = vmatpush.bf16.msra.mxu0 0
        %1715 = vmatpush.bf16.msra.mxu0 0
        %1716 = vmatpush.bf16.msra.mxu0 %v1634
        %1717 = vmatmul.bf16.gmra.mxu0 %v1707
        %v1718 = vpop.f32.mrf.mxu0
        %v1719 = vadd.f32 0.0, %v1718
        %v1720 = vpop.f32.mrf.mxu0
        %1721 = vdwg.mxu0
        %v1722 = vmul.f32 %v1646, %v1646
        %v1723 = vmul.f32 %v1665, %v1665
        %v1724 = vmul.f32 %v1646, %v1665
        %v1725 = vsub.f32 %v1683, %v1722
        %v1726 = vsub.f32 %v1701, %v1723
        %v1727 = vsub.f32 %v1719, %v1724
        %v1728 = vmul.f32 %v1727, 2.0
        %v1729 = vadd.f32 %v1728, 0.0009
        %v1730 = vadd.f32 %v1725, %v1726
        %v1731 = vadd.f32 %v1730, 0.0009
        %v1732 = vrcp.pop %v1731
        %v1733 = vmul.f32 %v1731, %v1732
        %v1734 = vsub.f32 1.0, %v1733
        %v1735 = vmul.f32 %v1732, %v1734
        %v1736 = vadd.f32 %v1732, %v1735
        %vm1737 = vweird.f32 %v1731
        %vm1738 = vweird.f32 %v1732
        %vm1739 = vmor %vm1737, %vm1738
        %v1740 = vsel %vm1739, %v1732, %v1736
        %v1741 = vand.u32 2147483647, %v1731
        %vm1742 = vcmp.eq.f32.partialorder %v1741, 8.507059e+37
        %v1743 = vand.u32 %v1731, 2147483648
        %v1744 = vor.u32 1.1754944e-38, %v1743
        %v1745 = vsel %vm1742, %v1744, %v1740
        %v1746 = vmul.f32 %v1729, %v1745
        %v1747 = vsel %vm1603, %v1746, 0.0
        %1748 = vadd.xlane.f32.xlu0 %v1747
        %v1749 = vpop.xlane.xlu0 %1748
        %v1750 = vrot.slane %v1749, 4
        %v1751 = vadd.f32 %v1749, %v1750
        %v1752 = vrot.slane %v1751, 2
        %v1753 = vadd.f32 %v1751, %v1752
        %v1754 = vrot.slane %v1753, 1
        %v1755 = vadd.f32 %v1753, %v1754
        %v1756 = vmul.f32 %v1724, 2.0
        %v1757 = vadd.f32 %v1756, 0.0001
        %v1758 = vmul.f32 %v1757, %v1729
        %v1759 = vadd.f32 %v1722, %v1723
        %v1760 = vadd.f32 %v1759, 0.0001
        %v1761 = vmul.f32 %v1760, %v1731
        %v1762 = vrcp.pop %v1761
        %v1763 = vmul.f32 %v1761, %v1762
        %v1764 = vsub.f32 1.0, %v1763
        %v1765 = vmul.f32 %v1762, %v1764
        %v1766 = vadd.f32 %v1762, %v1765
        %vm1767 = vweird.f32 %v1761
        %vm1768 = vweird.f32 %v1762
        %vm1769 = vmor %vm1767, %vm1768
        %v1770 = vsel %vm1769, %v1762, %v1766
        %v1771 = vand.u32 2147483647, %v1761
        %vm1772 = vcmp.eq.f32.partialorder %v1771, 8.507059e+37
        %v1773 = vand.u32 %v1761, 2147483648
        %v1774 = vor.u32 1.1754944e-38, %v1773
        %v1775 = vsel %vm1772, %v1774, %v1770
        %v1776 = vmul.f32 %v1758, %v1775
        %v1777 = vsel %vm1603, %v1776, 0.0
        %1778 = vadd.xlane.f32.xlu0 %v1777
        %v1779 = vpop.xlane.xlu0 %1778
        %v1780 = vrot.slane %v1779, 4
        %v1781 = vadd.f32 %v1779, %v1780
        %v1782 = vrot.slane %v1781, 2
        %v1783 = vadd.f32 %v1781, %v1782
        %v1784 = vrot.slane %v1783, 1
        %v1785 = vadd.f32 %v1783, %v1784
        %vm1786 = vcmp.eq.s32.totalorder %v567, 4
        %v1787 = vsel %vm1786, %v1755, 0.0
        %v1788 = vadd.f32 %v1490, %v1787
        %vm1789 = vcmp.eq.s32.totalorder %v567, 5
        %v1790 = vsel %vm1789, %v1785, 0.0
        %v1791 = vadd.f32 %v1788, %v1790
        %v1792 = vld [vmem:[%s9] sm:$0xf]
        %v1793 = vld [vmem:[%s13] sm:$0xff]
        %v1795 = vsel %vm1603, %v1792, 0
        %1797 = vmatpush.msra.mxu0 0.0
        %1798 = vmatpush.msra.mxu0 0.0
        %1799 = vmatpush.msra.mxu0 0.0
        %1800 = vmatpush.msra.mxu0 0.0
        %1801 = vmatpush.msra.mxu0 0.0
        %1802 = vmatpush.msra.mxu0 0.0
        %1803 = vmatpush.msra.mxu0 0.0
        %1804 = vmatpush.msra.mxu0 0.0
        %1805 = vmatpush.msra.mxu0 0.0
        %1806 = vmatpush.msra.mxu0 0.0
        %1807 = vmatpush.msra.mxu0 0.0
        %1808 = vmatpush.msra.mxu0 0.0
        %1809 = vmatpush.msra.mxu0 0.0
        %1810 = vmatpush.msra.mxu0 0.0
        %1811 = vmatpush.msra.mxu0 0.0
        %1812 = vmatpush.msra.mxu0 %v1538
        %1813 = vmatmul.f32.gmra.mxu0 %v1795
        %v1814 = vpop.f32.mrf.mxu0
        %v1815 = vadd.f32 0.0, %v1814
        %1816 = vdwg.mxu0
        %v1818 = vsel %vm1603, %v1815, 0
        %1820 = vmatpush.msra.mxu0 0.0
        %1821 = vmatpush.msra.mxu0 0.0
        %1822 = vmatpush.msra.mxu0 0.0
        %1823 = vmatpush.msra.mxu0 0.0
        %1824 = vmatpush.msra.mxu0 0.0
        %1825 = vmatpush.msra.mxu0 0.0
        %1826 = vmatpush.msra.mxu0 0.0
        %1827 = vmatpush.msra.mxu0 0.0
        %1828 = vmatpush.msra.mxu0 0.0
        %1829 = vmatpush.msra.mxu0 0.0
        %1830 = vmatpush.msra.mxu0 0.0
        %1831 = vmatpush.msra.mxu0 0.0
        %1832 = vmatpush.msra.mxu0 0.0
        %1833 = vmatpush.msra.mxu0 0.0
        %1834 = vmatpush.msra.mxu0 0.0
        %1835 = vmatpush.msra.mxu0 %v1793
        %1836 = vmatmul.f32.gmra.mxu0 %v1818
        %v1837 = vpop.f32.mrf.mxu0
        %v1838 = vadd.f32 0.0, %v1837
        %1839 = vdwg.mxu0
        %1840 = vmatpush.msra.mxu0 0.0
        %1841 = vmatpush.msra.mxu0 0.0
        %1842 = vmatpush.msra.mxu0 0.0
        %1843 = vmatpush.msra.mxu0 0.0
        %1844 = vmatpush.msra.mxu0 0.0
        %1845 = vmatpush.msra.mxu0 0.0
        %1846 = vmatpush.msra.mxu0 0.0
        %1847 = vmatpush.msra.mxu0 0.0
        %1848 = vmatpush.msra.mxu0 0.0
        %1849 = vmatpush.msra.mxu0 0.0
        %1850 = vmatpush.msra.mxu0 0.0
        %1851 = vmatpush.msra.mxu0 0.0
        %1852 = vmatpush.msra.mxu0 0.0
        %1853 = vmatpush.msra.mxu0 0.0
        %1854 = vmatpush.msra.mxu0 0.0
        %1855 = vmatpush.msra.mxu0 %v1581
        %1856 = vmatmul.f32.gmra.mxu0 %v1795
        %v1857 = vpop.f32.mrf.mxu0
        %v1858 = vadd.f32 0.0, %v1857
        %1859 = vdwg.mxu0
        %v1861 = vsel %vm1603, %v1858, 0
        %1863 = vmatpush.msra.mxu0 0.0
        %1864 = vmatpush.msra.mxu0 0.0
        %1865 = vmatpush.msra.mxu0 0.0
        %1866 = vmatpush.msra.mxu0 0.0
        %1867 = vmatpush.msra.mxu0 0.0
        %1868 = vmatpush.msra.mxu0 0.0
        %1869 = vmatpush.msra.mxu0 0.0
        %1870 = vmatpush.msra.mxu0 0.0
        %1871 = vmatpush.msra.mxu0 0.0
        %1872 = vmatpush.msra.mxu0 0.0
        %1873 = vmatpush.msra.mxu0 0.0
        %1874 = vmatpush.msra.mxu0 0.0
        %1875 = vmatpush.msra.mxu0 0.0
        %1876 = vmatpush.msra.mxu0 0.0
        %1877 = vmatpush.msra.mxu0 0.0
        %1878 = vmatpush.msra.mxu0 %v1793
        %1879 = vmatmul.f32.gmra.mxu0 %v1861
        %v1880 = vpop.f32.mrf.mxu0
        %v1881 = vadd.f32 0.0, %v1880
        %1882 = vdwg.mxu0
        %v1883 = vld [vmem:[%s5] sm:$0x3]
        %v1884 = vmul.f32 %v1838, %v1838
        %v1885 = vmul.f32 %v1881, %v1881
        %v1886 = vmul.f32 %v1838, %v1881
        %1888 = vrot.lane.b32.xlu0 %v1881, 4
        %v1889 = vpop.permute.xlu0 %1888
        %1892 = vrot.lane.b32.xlu0 %v1884, 8
        %v1893 = vpop.permute.xlu0 %1892
        %1896 = vrot.lane.b32.xlu0 %v1885, 12
        %v1897 = vpop.permute.xlu0 %1896
        %1900 = vrot.lane.b32.xlu0 %v1886, 16
        %v1901 = vpop.permute.xlu0 %1900
        %vm1903 = vcmask 31744
        %v1904 = vsel %vm1903, %v1838, %v1889
        %v1905 = vsel %vm1603, %v1904, %v1893
        %vm1906 = vcmask 97280
        %v1907 = vsel %vm1906, %v1905, %v1897
        %v1908 = vsel %vm1238, %v1907, %v1901
        %v1909 = vpack.c.bf16 %v1908, %v1908
        %v1911 = vsel %vm1903, %v1883, 0
        %vm1913 = vcmask 1041408
        %v1915 = vsel %vm1913, %v1909, 0
        %1917 = vmatpush.bf16.msra.mxu0 0
        %1918 = vmatpush.bf16.msra.mxu0 0
        %1919 = vmatpush.bf16.msra.mxu0 0
        %1920 = vmatpush.bf16.msra.mxu0 0
        %1921 = vmatpush.bf16.msra.mxu0 0
        %1922 = vmatpush.bf16.msra.mxu0 0
        %1923 = vmatpush.bf16.msra.mxu0 0
        %1924 = vmatpush.bf16.msra.mxu0 %v1915
        %1925 = vmatmul.bf16.gmra.mxu0 %v1911
        %v1926 = vpop.f32.mrf.mxu0
        %v1927 = vadd.f32 0.0, %v1926
        %v1928 = vpop.f32.mrf.mxu0
        %1929 = vdwg.mxu0
        %v1930 = vpack.c.bf16 %v1927, %v1927
        %v1932 = vsel %vm1903, %v1930, 0
        %v1934 = vsel %vm1913, %v1883, 0
        %1936 = vmatpush.bf16.msra.mxu0 0
        %1937 = vmatpush.bf16.msra.mxu0 0
        %1938 = vmatpush.bf16.msra.mxu0 0
        %1939 = vmatpush.bf16.msra.mxu0 0
        %1940 = vmatpush.bf16.msra.mxu0 0
        %1941 = vmatpush.bf16.msra.mxu0 0
        %1942 = vmatpush.bf16.msra.mxu0 0
        %1943 = vmatpush.bf16.msra.mxu0 %v1934
        %1944 = vmatmul.bf16.gmra.mxu0 %v1932
        %v1945 = vpop.f32.mrf.mxu0
        %v1946 = vadd.f32 0.0, %v1945
        %v1947 = vpop.f32.mrf.mxu0
        %1948 = vdwg.mxu0
        %1950 = vrot.lane.b32.xlu0 %v1930, 124
        %v1951 = vpop.permute.xlu0 %1950
        %v1953 = vsel %vm1903, %v1951, 0
        %1955 = vmatpush.bf16.msra.mxu0 0
        %1956 = vmatpush.bf16.msra.mxu0 0
        %1957 = vmatpush.bf16.msra.mxu0 0
        %1958 = vmatpush.bf16.msra.mxu0 0
        %1959 = vmatpush.bf16.msra.mxu0 0
        %1960 = vmatpush.bf16.msra.mxu0 0
        %1961 = vmatpush.bf16.msra.mxu0 0
        %1962 = vmatpush.bf16.msra.mxu0 %v1934
        %1963 = vmatmul.bf16.gmra.mxu0 %v1953
        %v1964 = vpop.f32.mrf.mxu0
        %v1965 = vadd.f32 0.0, %v1964
        %v1966 = vpop.f32.mrf.mxu0
        %1967 = vdwg.mxu0
        %1968 = vrot.lane.b32.xlu0 %v1930, 120
        %v1969 = vpop.permute.xlu0 %1968
        %v1971 = vsel %vm1903, %v1969, 0
        %1973 = vmatpush.bf16.msra.mxu0 0
        %1974 = vmatpush.bf16.msra.mxu0 0
        %1975 = vmatpush.bf16.msra.mxu0 0
        %1976 = vmatpush.bf16.msra.mxu0 0
        %1977 = vmatpush.bf16.msra.mxu0 0
        %1978 = vmatpush.bf16.msra.mxu0 0
        %1979 = vmatpush.bf16.msra.mxu0 0
        %1980 = vmatpush.bf16.msra.mxu0 %v1934
        %1981 = vmatmul.bf16.gmra.mxu0 %v1971
        %v1982 = vpop.f32.mrf.mxu0
        %v1983 = vadd.f32 0.0, %v1982
        %v1984 = vpop.f32.mrf.mxu0
        %1985 = vdwg.mxu0
        %1986 = vrot.lane.b32.xlu0 %v1930, 116
        %v1987 = vpop.permute.xlu0 %1986
        %v1989 = vsel %vm1903, %v1987, 0
        %1991 = vmatpush.bf16.msra.mxu0 0
        %1992 = vmatpush.bf16.msra.mxu0 0
        %1993 = vmatpush.bf16.msra.mxu0 0
        %1994 = vmatpush.bf16.msra.mxu0 0
        %1995 = vmatpush.bf16.msra.mxu0 0
        %1996 = vmatpush.bf16.msra.mxu0 0
        %1997 = vmatpush.bf16.msra.mxu0 0
        %1998 = vmatpush.bf16.msra.mxu0 %v1934
        %1999 = vmatmul.bf16.gmra.mxu0 %v1989
        %v2000 = vpop.f32.mrf.mxu0
        %v2001 = vadd.f32 0.0, %v2000
        %v2002 = vpop.f32.mrf.mxu0
        %2003 = vdwg.mxu0
        %2004 = vrot.lane.b32.xlu0 %v1930, 112
        %v2005 = vpop.permute.xlu0 %2004
        %v2007 = vsel %vm1903, %v2005, 0
        %2009 = vmatpush.bf16.msra.mxu0 0
        %2010 = vmatpush.bf16.msra.mxu0 0
        %2011 = vmatpush.bf16.msra.mxu0 0
        %2012 = vmatpush.bf16.msra.mxu0 0
        %2013 = vmatpush.bf16.msra.mxu0 0
        %2014 = vmatpush.bf16.msra.mxu0 0
        %2015 = vmatpush.bf16.msra.mxu0 0
        %2016 = vmatpush.bf16.msra.mxu0 %v1934
        %2017 = vmatmul.bf16.gmra.mxu0 %v2007
        %v2018 = vpop.f32.mrf.mxu0
        %v2019 = vadd.f32 0.0, %v2018
        %v2020 = vpop.f32.mrf.mxu0
        %2021 = vdwg.mxu0
        %v2022 = vmul.f32 %v1946, %v1946
        %v2023 = vmul.f32 %v1965, %v1965
        %v2024 = vmul.f32 %v1946, %v1965
        %v2025 = vsub.f32 %v1983, %v2022
        %v2026 = vsub.f32 %v2001, %v2023
        %v2027 = vsub.f32 %v2019, %v2024
        %v2028 = vmul.f32 %v2027, 2.0
        %v2029 = vadd.f32 %v2028, 0.0009
        %v2030 = vadd.f32 %v2025, %v2026
        %v2031 = vadd.f32 %v2030, 0.0009
        %v2032 = vrcp.pop %v2031
        %v2033 = vmul.f32 %v2031, %v2032
        %v2034 = vsub.f32 1.0, %v2033
        %v2035 = vmul.f32 %v2032, %v2034
        %v2036 = vadd.f32 %v2032, %v2035
        %vm2037 = vweird.f32 %v2031
        %vm2038 = vweird.f32 %v2032
        %vm2039 = vmor %vm2037, %vm2038
        %v2040 = vsel %vm2039, %v2032, %v2036
        %v2041 = vand.u32 2147483647, %v2031
        %vm2042 = vcmp.eq.f32.partialorder %v2041, 8.507059e+37
        %v2043 = vand.u32 %v2031, 2147483648
        %v2044 = vor.u32 1.1754944e-38, %v2043
        %v2045 = vsel %vm2042, %v2044, %v2040
        %v2046 = vmul.f32 %v2029, %v2045
        %vm2047 = vcmask 27648
        %v2048 = vsel %vm2047, %v2046, 0.0
        %2049 = vadd.xlane.f32.xlu0 %v2048
        %v2050 = vpop.xlane.xlu0 %2049
        %v2051 = vsel %vm1613, %v2050, 0.0
        %v2052 = vrot.slane %v2051, 4
        %v2053 = vadd.f32 %v2051, %v2052
        %v2054 = vrot.slane %v2053, 2
        %v2055 = vadd.f32 %v2053, %v2054
        %v2056 = vrot.slane %v2055, 1
        %v2057 = vadd.f32 %v2055, %v2056
        %v2058 = vmul.f32 %v2024, 2.0
        %v2059 = vadd.f32 %v2058, 0.0001
        %v2060 = vmul.f32 %v2059, %v2029
        %v2061 = vadd.f32 %v2022, %v2023
        %v2062 = vadd.f32 %v2061, 0.0001
        %v2063 = vmul.f32 %v2062, %v2031
        %v2064 = vrcp.pop %v2063
        %v2065 = vmul.f32 %v2063, %v2064
        %v2066 = vsub.f32 1.0, %v2065
        %v2067 = vmul.f32 %v2064, %v2066
        %v2068 = vadd.f32 %v2064, %v2067
        %vm2069 = vweird.f32 %v2063
        %vm2070 = vweird.f32 %v2064
        %vm2071 = vmor %vm2069, %vm2070
        %v2072 = vsel %vm2071, %v2064, %v2068
        %v2073 = vand.u32 2147483647, %v2063
        %vm2074 = vcmp.eq.f32.partialorder %v2073, 8.507059e+37
        %v2075 = vand.u32 %v2063, 2147483648
        %v2076 = vor.u32 1.1754944e-38, %v2075
        %v2077 = vsel %vm2074, %v2076, %v2072
        %v2078 = vmul.f32 %v2060, %v2077
        %v2079 = vsel %vm2047, %v2078, 0.0
        %2080 = vadd.xlane.f32.xlu0 %v2079
        %v2081 = vpop.xlane.xlu0 %2080
        %v2082 = vsel %vm1613, %v2081, 0.0
        %v2083 = vrot.slane %v2082, 4
        %v2084 = vadd.f32 %v2082, %v2083
        %v2085 = vrot.slane %v2084, 2
        %v2086 = vadd.f32 %v2084, %v2085
        %v2087 = vrot.slane %v2086, 1
        %v2088 = vadd.f32 %v2086, %v2087
        %vm2089 = vcmp.eq.s32.totalorder %v567, 6
        %v2090 = vsel %vm2089, %v2057, 0.0
        %v2091 = vadd.f32 %v1791, %v2090
        %vm2092 = vcmp.eq.s32.totalorder %v567, 7
        %v2093 = vsel %vm2092, %v2088, 0.0
        %v2094 = vadd.f32 %v2091, %v2093
        %v2095 = vld [vmem:[%s10] sm:$0x3]
        %v2096 = vld [vmem:[%s14] sm:$0xf]
        %v2098 = vsel %vm1903, %v2095, 0
        %v2101 = vsel %vm1613, %v1838, 0
        %2103 = vmatpush.msra.mxu0 0.0
        %2104 = vmatpush.msra.mxu0 0.0
        %2105 = vmatpush.msra.mxu0 0.0
        %2106 = vmatpush.msra.mxu0 0.0
        %2107 = vmatpush.msra.mxu0 0.0
        %2108 = vmatpush.msra.mxu0 0.0
        %2109 = vmatpush.msra.mxu0 0.0
        %2110 = vmatpush.msra.mxu0 0.0
        %2111 = vmatpush.msra.mxu0 0.0
        %2112 = vmatpush.msra.mxu0 0.0
        %2113 = vmatpush.msra.mxu0 0.0
        %2114 = vmatpush.msra.mxu0 0.0
        %2115 = vmatpush.msra.mxu0 0.0
        %2116 = vmatpush.msra.mxu0 0.0
        %2117 = vmatpush.msra.mxu0 0.0
        %2118 = vmatpush.msra.mxu0 %v2101
        %2119 = vmatmul.f32.gmra.mxu0 %v2098
        %v2120 = vpop.f32.mrf.mxu0
        %v2121 = vadd.f32 0.0, %v2120
        %2122 = vdwg.mxu0
        %v2124 = vsel %vm1903, %v2121, 0
        %v2127 = vsel %vm1613, %v2096, 0
        %2129 = vmatpush.msra.mxu0 0.0
        %2130 = vmatpush.msra.mxu0 0.0
        %2131 = vmatpush.msra.mxu0 0.0
        %2132 = vmatpush.msra.mxu0 0.0
        %2133 = vmatpush.msra.mxu0 0.0
        %2134 = vmatpush.msra.mxu0 0.0
        %2135 = vmatpush.msra.mxu0 0.0
        %2136 = vmatpush.msra.mxu0 0.0
        %2137 = vmatpush.msra.mxu0 0.0
        %2138 = vmatpush.msra.mxu0 0.0
        %2139 = vmatpush.msra.mxu0 0.0
        %2140 = vmatpush.msra.mxu0 0.0
        %2141 = vmatpush.msra.mxu0 0.0
        %2142 = vmatpush.msra.mxu0 0.0
        %2143 = vmatpush.msra.mxu0 0.0
        %2144 = vmatpush.msra.mxu0 %v2127
        %2145 = vmatmul.f32.gmra.mxu0 %v2124
        %v2146 = vpop.f32.mrf.mxu0
        %v2147 = vadd.f32 0.0, %v2146
        %2148 = vdwg.mxu0
        %v2149 = vsel %vm1613, %v1881, 0
        %2151 = vmatpush.msra.mxu0 0.0
        %2152 = vmatpush.msra.mxu0 0.0
        %2153 = vmatpush.msra.mxu0 0.0
        %2154 = vmatpush.msra.mxu0 0.0
        %2155 = vmatpush.msra.mxu0 0.0
        %2156 = vmatpush.msra.mxu0 0.0
        %2157 = vmatpush.msra.mxu0 0.0
        %2158 = vmatpush.msra.mxu0 0.0
        %2159 = vmatpush.msra.mxu0 0.0
        %2160 = vmatpush.msra.mxu0 0.0
        %2161 = vmatpush.msra.mxu0 0.0
        %2162 = vmatpush.msra.mxu0 0.0
        %2163 = vmatpush.msra.mxu0 0.0
        %2164 = vmatpush.msra.mxu0 0.0
        %2165 = vmatpush.msra.mxu0 0.0
        %2166 = vmatpush.msra.mxu0 %v2149
        %2167 = vmatmul.f32.gmra.mxu0 %v2098
        %v2168 = vpop.f32.mrf.mxu0
        %v2169 = vadd.f32 0.0, %v2168
        %2170 = vdwg.mxu0
        %v2172 = vsel %vm1903, %v2169, 0
        %2174 = vmatpush.msra.mxu0 0.0
        %2175 = vmatpush.msra.mxu0 0.0
        %2176 = vmatpush.msra.mxu0 0.0
        %2177 = vmatpush.msra.mxu0 0.0
        %2178 = vmatpush.msra.mxu0 0.0
        %2179 = vmatpush.msra.mxu0 0.0
        %2180 = vmatpush.msra.mxu0 0.0
        %2181 = vmatpush.msra.mxu0 0.0
        %2182 = vmatpush.msra.mxu0 0.0
        %2183 = vmatpush.msra.mxu0 0.0
        %2184 = vmatpush.msra.mxu0 0.0
        %2185 = vmatpush.msra.mxu0 0.0
        %2186 = vmatpush.msra.mxu0 0.0
        %2187 = vmatpush.msra.mxu0 0.0
        %2188 = vmatpush.msra.mxu0 0.0
        %2189 = vmatpush.msra.mxu0 %v2127
        %2190 = vmatmul.f32.gmra.mxu0 %v2172
        %v2191 = vpop.f32.mrf.mxu0
        %v2192 = vadd.f32 0.0, %v2191
        %2193 = vdwg.mxu0
        %v2194 = vld [vmem:[%s6] sm:$0x1]
        %v2195 = vmul.f32 %v2147, %v2147
        %v2196 = vmul.f32 %v2192, %v2192
        %v2197 = vmul.f32 %v2147, %v2192
        %2199 = vrot.lane.b32.xlu0 %v2192, 2
        %v2200 = vpop.permute.xlu0 %2199
        %2203 = vrot.lane.b32.xlu0 %v2195, 4
        %v2204 = vpop.permute.xlu0 %2203
        %2207 = vrot.lane.b32.xlu0 %v2196, 6
        %v2208 = vpop.permute.xlu0 %2207
        %2211 = vrot.lane.b32.xlu0 %v2197, 8
        %v2212 = vpop.permute.xlu0 %2211
        %vm2214 = vcmask 15360
        %v2215 = vsel %vm2214, %v2147, %v2200
        %v2216 = vsel %vm1903, %v2215, %v2204
        %vm2217 = vcmask 48128
        %v2218 = vsel %vm2217, %v2216, %v2208
        %v2219 = vsel %vm1603, %v2218, %v2212
        %v2220 = vpack.c.bf16 %v2219, %v2219
        %v2222 = vsel %vm2214, %v2194, 0
        %vm2224 = vcmask 1040384
        %v2226 = vsel %vm2224, %v2220, 0
        %2228 = vmatpush.bf16.msra.mxu0 0
        %2229 = vmatpush.bf16.msra.mxu0 0
        %2230 = vmatpush.bf16.msra.mxu0 0
        %2231 = vmatpush.bf16.msra.mxu0 0
        %2232 = vmatpush.bf16.msra.mxu0 0
        %2233 = vmatpush.bf16.msra.mxu0 0
        %2234 = vmatpush.bf16.msra.mxu0 0
        %2235 = vmatpush.bf16.msra.mxu0 %v2226
        %2236 = vmatmul.bf16.gmra.mxu0 %v2222
        %v2237 = vpop.f32.mrf.mxu0
        %v2238 = vadd.f32 0.0, %v2237
        %v2239 = vpop.f32.mrf.mxu0
        %2240 = vdwg.mxu0
        %v2241 = vpack.c.bf16 %v2238, %v2238
        %v2243 = vsel %vm2214, %v2241, 0
        %v2245 = vsel %vm2224, %v2194, 0
        %2247 = vmatpush.bf16.msra.mxu0 0
        %2248 = vmatpush.bf16.msra.mxu0 0
        %2249 = vmatpush.bf16.msra.mxu0 0
        %2250 = vmatpush.bf16.msra.mxu0 0
        %2251 = vmatpush.bf16.msra.mxu0 0
        %2252 = vmatpush.bf16.msra.mxu0 0
        %2253 = vmatpush.bf16.msra.mxu0 0
        %2254 = vmatpush.bf16.msra.mxu0 %v2245
        %2255 = vmatmul.bf16.gmra.mxu0 %v2243
        %v2256 = vpop.f32.mrf.mxu0
        %v2257 = vadd.f32 0.0, %v2256
        %v2258 = vpop.f32.mrf.mxu0
        %2259 = vdwg.mxu0
        %2261 = vrot.lane.b32.xlu0 %v2241, 126
        %v2262 = vpop.permute.xlu0 %2261
        %v2264 = vsel %vm2214, %v2262, 0
        %2266 = vmatpush.bf16.msra.mxu0 0
        %2267 = vmatpush.bf16.msra.mxu0 0
        %2268 = vmatpush.bf16.msra.mxu0 0
        %2269 = vmatpush.bf16.msra.mxu0 0
        %2270 = vmatpush.bf16.msra.mxu0 0
        %2271 = vmatpush.bf16.msra.mxu0 0
        %2272 = vmatpush.bf16.msra.mxu0 0
        %2273 = vmatpush.bf16.msra.mxu0 %v2245
        %2274 = vmatmul.bf16.gmra.mxu0 %v2264
        %v2275 = vpop.f32.mrf.mxu0
        %v2276 = vadd.f32 0.0, %v2275
        %v2277 = vpop.f32.mrf.mxu0
        %2278 = vdwg.mxu0
        %2279 = vrot.lane.b32.xlu0 %v2241, 124
        %v2280 = vpop.permute.xlu0 %2279
        %v2282 = vsel %vm2214, %v2280, 0
        %2284 = vmatpush.bf16.msra.mxu0 0
        %2285 = vmatpush.bf16.msra.mxu0 0
        %2286 = vmatpush.bf16.msra.mxu0 0
        %2287 = vmatpush.bf16.msra.mxu0 0
        %2288 = vmatpush.bf16.msra.mxu0 0
        %2289 = vmatpush.bf16.msra.mxu0 0
        %2290 = vmatpush.bf16.msra.mxu0 0
        %2291 = vmatpush.bf16.msra.mxu0 %v2245
        %2292 = vmatmul.bf16.gmra.mxu0 %v2282
        %v2293 = vpop.f32.mrf.mxu0
        %v2294 = vadd.f32 0.0, %v2293
        %v2295 = vpop.f32.mrf.mxu0
        %2296 = vdwg.mxu0
        %2297 = vrot.lane.b32.xlu0 %v2241, 122
        %v2298 = vpop.permute.xlu0 %2297
        %v2300 = vsel %vm2214, %v2298, 0
        %2302 = vmatpush.bf16.msra.mxu0 0
        %2303 = vmatpush.bf16.msra.mxu0 0
        %2304 = vmatpush.bf16.msra.mxu0 0
        %2305 = vmatpush.bf16.msra.mxu0 0
        %2306 = vmatpush.bf16.msra.mxu0 0
        %2307 = vmatpush.bf16.msra.mxu0 0
        %2308 = vmatpush.bf16.msra.mxu0 0
        %2309 = vmatpush.bf16.msra.mxu0 %v2245
        %2310 = vmatmul.bf16.gmra.mxu0 %v2300
        %v2311 = vpop.f32.mrf.mxu0
        %v2312 = vadd.f32 0.0, %v2311
        %v2313 = vpop.f32.mrf.mxu0
        %2314 = vdwg.mxu0
        %2315 = vrot.lane.b32.xlu0 %v2241, 120
        %v2316 = vpop.permute.xlu0 %2315
        %v2318 = vsel %vm2214, %v2316, 0
        %2320 = vmatpush.bf16.msra.mxu0 0
        %2321 = vmatpush.bf16.msra.mxu0 0
        %2322 = vmatpush.bf16.msra.mxu0 0
        %2323 = vmatpush.bf16.msra.mxu0 0
        %2324 = vmatpush.bf16.msra.mxu0 0
        %2325 = vmatpush.bf16.msra.mxu0 0
        %2326 = vmatpush.bf16.msra.mxu0 0
        %2327 = vmatpush.bf16.msra.mxu0 %v2245
        %2328 = vmatmul.bf16.gmra.mxu0 %v2318
        %v2329 = vpop.f32.mrf.mxu0
        %v2330 = vadd.f32 0.0, %v2329
        %v2331 = vpop.f32.mrf.mxu0
        %2332 = vdwg.mxu0
        %v2333 = vmul.f32 %v2257, %v2257
        %v2334 = vmul.f32 %v2276, %v2276
        %v2335 = vmul.f32 %v2257, %v2276
        %v2336 = vsub.f32 %v2294, %v2333
        %v2337 = vsub.f32 %v2312, %v2334
        %v2338 = vsub.f32 %v2330, %v2335
        %v2339 = vmul.f32 %v2338, 2.0
        %v2340 = vadd.f32 %v2339, 0.0009
        %v2341 = vadd.f32 %v2336, %v2337
        %v2342 = vadd.f32 %v2341, 0.0009
        %v2343 = vrcp.pop %v2342
        %v2344 = vmul.f32 %v2342, %v2343
        %v2345 = vsub.f32 1.0, %v2344
        %v2346 = vmul.f32 %v2343, %v2345
        %v2347 = vadd.f32 %v2343, %v2346
        %vm2348 = vweird.f32 %v2342
        %vm2349 = vweird.f32 %v2343
        %vm2350 = vmor %vm2348, %vm2349
        %v2351 = vsel %vm2350, %v2343, %v2347
        %v2352 = vand.u32 2147483647, %v2342
        %vm2353 = vcmp.eq.f32.partialorder %v2352, 8.507059e+37
        %v2354 = vand.u32 %v2342, 2147483648
        %v2355 = vor.u32 1.1754944e-38, %v2354
        %v2356 = vsel %vm2353, %v2355, %v2351
        %v2357 = vmul.f32 %v2340, %v2356
        %vm2358 = vcmask 9216
        %v2359 = vsel %vm2358, %v2357, 0.0
        %2360 = vadd.xlane.f32.xlu0 %v2359
        %v2361 = vpop.xlane.xlu0 %2360
        %v2362 = vsel %vm1913, %v2361, 0.0
        %v2363 = vrot.slane %v2362, 4
        %v2364 = vadd.f32 %v2362, %v2363
        %v2365 = vrot.slane %v2364, 2
        %v2366 = vadd.f32 %v2364, %v2365
        %v2367 = vrot.slane %v2366, 1
        %v2368 = vadd.f32 %v2366, %v2367
        %v2369 = vmul.f32 %v2335, 2.0
        %v2370 = vadd.f32 %v2369, 0.0001
        %v2371 = vmul.f32 %v2370, %v2340
        %v2372 = vadd.f32 %v2333, %v2334
        %v2373 = vadd.f32 %v2372, 0.0001
        %v2374 = vmul.f32 %v2373, %v2342
        %v2375 = vrcp.pop %v2374
        %v2376 = vmul.f32 %v2374, %v2375
        %v2377 = vsub.f32 1.0, %v2376
        %v2378 = vmul.f32 %v2375, %v2377
        %v2379 = vadd.f32 %v2375, %v2378
        %vm2380 = vweird.f32 %v2374
        %vm2381 = vweird.f32 %v2375
        %vm2382 = vmor %vm2380, %vm2381
        %v2383 = vsel %vm2382, %v2375, %v2379
        %v2384 = vand.u32 2147483647, %v2374
        %vm2385 = vcmp.eq.f32.partialorder %v2384, 8.507059e+37
        %v2386 = vand.u32 %v2374, 2147483648
        %v2387 = vor.u32 1.1754944e-38, %v2386
        %v2388 = vsel %vm2385, %v2387, %v2383
        %v2389 = vmul.f32 %v2371, %v2388
        %v2390 = vsel %vm2358, %v2389, 0.0
        %2391 = vadd.xlane.f32.xlu0 %v2390
        %v2392 = vpop.xlane.xlu0 %2391
        %v2393 = vsel %vm1913, %v2392, 0.0
        %v2394 = vrot.slane %v2393, 4
        %v2395 = vadd.f32 %v2393, %v2394
        %v2396 = vrot.slane %v2395, 2
        %v2397 = vadd.f32 %v2395, %v2396
        %v2398 = vrot.slane %v2397, 1
        %v2399 = vadd.f32 %v2397, %v2398
        %vm2400 = vcmp.eq.s32.totalorder %v567, 8
        %v2401 = vsel %vm2400, %v2368, 0.0
        %v2402 = vadd.f32 %v2094, %v2401
        %vm2403 = vcmp.eq.s32.totalorder %v567, 9
        %v2404 = vsel %vm2403, %v2399, 0.0
        %v2405 = vadd.f32 %v2402, %v2404
        %2406 = vst [vmem:[%s556] sm:$0xff] %v2405
        %s2407 = sand.u32 %s368, 1
        %s2408 = scalar_lea.sflag [#allocation4], %s2407
        %s2409 = sand.u32 %s368, 1
        %s2410 = smul.addr %s2409, 8
        %s2411 = scalar_lea.vmem [#allocation7], %s2410
        // Predicated region
        $region89: #{tpu_custom_call.1} parent=79 // pred_check
          %p2412 = pneg %p378
        $region90: #{tpu_custom_call.1} parent=79 // pred_check_branch
          %2414 = sbr.rel (%p2412) target = $region92
        $region91: #{tpu_custom_call.1} parent=79 // pred_region
          %2416 = vsyncadd %s2408, 0
          %s2417 = smul.addr %s35, 8
          %s2418 = scalar_lea.hbm %s15, %s2417
          %s2420 = sshll.u32 %s2411, 4
          %s2421 = int_to_ptr.vmem [resolvable:$true] %s2420
          %s2422 = sshll.u32 %s2418, 4
          %s2423 = int_to_ptr.hbm [resolvable:$true] %s2422
          %2425 = dma.vmem_to_hbm [thread:$0]  %s2421, 128, %s2423, %s2408
        $region92: #{tpu_custom_call.1} parent=79 // pred_fallthru
          _
      $region80: #{tpu_custom_call.1} parent=5 // pred_fallthru
        _
      %p2426 = scmp.le.s32.totalorder 2, %s30
      // Predicated region
      $region93: #{tpu_custom_call.1} parent=5 // pred_check
        %p2427 = pneg %p2426
      $region94: #{tpu_custom_call.1} parent=5 // pred_check_branch
        %2429 = sbr.rel (%p2427) target = $region96
      $region95: #{tpu_custom_call.1} parent=5 // pred_region
        %s2430 = ssub.s32 %s30, 2
        // Predicated region
        $region97: #{tpu_custom_call.1} parent=95 // pred_check
          %p2431 = pneg %p384
        $region98: #{tpu_custom_call.1} parent=95 // pred_check_branch
          %2433 = sbr.rel (%p2431) target = $region100
        $region99: #{tpu_custom_call.1} parent=95 // pred_region
          %s2434 = sand.u32 %s369, 1
          %s2435 = scalar_lea.sflag [#allocation4], %s2434
          %s2436 = sand.u32 %s369, 1
          %s2437 = smul.addr %s2436, 8
          %s2438 = scalar_lea.vmem [#allocation7], %s2437
          %2440 = dma.done %s2435, 128
        $region100: #{tpu_custom_call.1} parent=95 // pred_fallthru
          _
      $region96: #{tpu_custom_call.1} parent=5 // pred_fallthru
        _
    $region6: #{tpu_custom_call.1} parent=1 // loop_footer
      %s34 = sadd.s32 1, %s30
    $region7: #{tpu_custom_call.1} parent=1 // loop_footer_branch
      %29 = sbr.rel target = $region3
    $region8: #{tpu_custom_call.1} parent=1 // loop_exit
      _
    %2441 = vsyncpa [#allocation3], 1
    %s2442 = scalar_lea.sflag [#allocation3], 1
    %2443 = vsyncpa %s2442, 1
    %2444 = vsyncpa [#allocation6], 1
    %s2445 = scalar_lea.sflag [#allocation6], 1
    %2446 = vsyncpa %s2445, 1
    %2447 = vsyncpa [#allocation4], 1
    %s2448 = scalar_lea.sflag [#allocation4], 1
    %2449 = vsyncpa %s2448, 1

</llo_original>
